<compile_context>
chip_gen: v5e
topology: v5e:2x2
jax: 0.10.0
libtpu: 0.0.40
codegen_flags: <defaults>
</compile_context>

<pallas_src>
import functools

import jax
import jax.numpy as jnp
from jax.experimental import pallas as pl
from jax.experimental.pallas import tpu as pltpu

SOS = 1
UNK = 0
_SUB = 16        # batch sublane rounding (16 keeps bf16 packing tile-aligned)
_LANE = 128      # lane tile
_MAX_BBLK = 128  # max batch rows per grid block (MXU M dimension)


def _rup(x, m):
    return (x + m - 1) // m * m


# ----------------------------------------------------------------------------
# Fused encoder + greedy-decoder kernel.
# in refs : lens(B,1)i32, x(S,B,E)bf16, emb(V,E)bf16,
#           enc W_ih/W_hh bf16, enc b_ih/b_hh f32,
#           dec W_ih/W_hh bf16, dec b_ih/b_hh f32,
#           w_attn bf16, w_out_h bf16, w_out_c bf16, b_out f32
# out refs: enc_out(S,B,H)f32, enc_state(B,H)f32, tokens(B,Tp)i32,
#           attn(T,B,Sp)f32
# scratch : gx(S,B,3H)bf16 (hoisted encoder input projection),
#           enc_bm(B,Sp,H)bf16 (batch-major encoder outputs for attention)
# ----------------------------------------------------------------------------
def _seq2seq_kernel(lens_ref, x_ref, emb_ref,
                    ew_ih_ref, ew_hh_ref, eb_ih_ref, eb_hh_ref,
                    dw_ih_ref, dw_hh_ref, db_ih_ref, db_hh_ref,
                    w_attn_ref, w_out_h_ref, w_out_c_ref, b_out_ref,
                    enc_out_ref, enc_state_ref, tokens_ref, attn_ref,
                    gx_ref, enc_bm_ref):
    f32, bf16 = jnp.float32, jnp.bfloat16
    S, B, E = x_ref.shape
    H = ew_hh_ref.shape[0]
    V = emb_ref.shape[0]
    S_pad = enc_bm_ref.shape[1]
    T = attn_ref.shape[0]
    T_pad = tokens_ref.shape[1]
    lens = lens_ref[...]                                            # (B,1) i32

    # ---------------- encoder: input projection hoisted out of the loop ----
    x2d = x_ref[...].reshape(S * B, E)                              # bf16
    gx_all = jnp.dot(x2d, ew_ih_ref[...],
                     preferred_element_type=f32) + eb_ih_ref[...]
    gx_ref[...] = gx_all.reshape(S, B, 3 * H).astype(bf16)

    def enc_step(t, h):
        gx = gx_ref[t].astype(f32)                                  # (B, 3H)
        gh = jnp.dot(h.astype(bf16), ew_hh_ref[...],
                     preferred_element_type=f32) + eb_hh_ref[...]
        r = jax.nn.sigmoid(gx[:, 0:H] + gh[:, 0:H])
        z = jax.nn.sigmoid(gx[:, H:2 * H] + gh[:, H:2 * H])
        n = jnp.tanh(gx[:, 2 * H:3 * H] + r * gh[:, 2 * H:3 * H])
        h_cand = (1.0 - z) * n + z * h
        valid = t < lens                                            # (B, 1)
        # packed-sequence behavior: zero outputs past each row's length and
        # freeze the carried hidden state at the last valid timestep.
        enc_out_ref[t] = jnp.where(valid, h_cand, 0.0)              # time-major
        return jnp.where(valid, h_cand, h)

    h_enc = jax.lax.fori_loop(0, S, enc_step, jnp.zeros((B, H), f32))
    enc_state_ref[...] = h_enc

    # ---- batch-major bf16 copy of encoder outputs (attention operand) ----
    # TODO(synk): fold this into enc_step with a dynamic-sublane store once
    #             that path is validated; tail-only zeroing already avoids the
    #             full-buffer memset.
    for t in range(S):                     # static copy pass (S known at trace)
        enc_bm_ref[:, t:t + 1, :] = enc_out_ref[t][:, None, :].astype(bf16)
    if S < S_pad:
        enc_bm_ref[:, S:, :] = jnp.zeros((B, S_pad - S, H), bf16)

    # ---------------- greedy decode loop -----------------------------------
    col_ids = jax.lax.broadcasted_iota(jnp.int32, (B, V), 1)
    tok_lane = jax.lax.broadcasted_iota(jnp.int32, (B, T_pad), 1)
    pos3 = jax.lax.broadcasted_iota(jnp.int32, (B, 1, S_pad), 2)
    mask3 = pos3 < lens[:, :, None]                   # loop-invariant (B,1,Sp)
    neg_big = jnp.float32(-1e9)

    def dec_step(t, carry):
        h, top, toks = carry
        # TODO(synk): for realistic vocab sizes keep `emb` in HBM (pl.ANY) and
        # DMA-gather the B predicted rows instead of this one-hot matmul.
        onehot = (col_ids == top).astype(bf16)                      # (B, V)
        x = jnp.dot(onehot, emb_ref[...], preferred_element_type=f32)
        gx = jnp.dot(x.astype(bf16), dw_ih_ref[...],
                     preferred_element_type=f32) + db_ih_ref[...]
        gh = jnp.dot(h.astype(bf16), dw_hh_ref[...],
                     preferred_element_type=f32) + db_hh_ref[...]
        r = jax.nn.sigmoid(gx[:, 0:H] + gh[:, 0:H])
        z = jax.nn.sigmoid(gx[:, H:2 * H] + gh[:, H:2 * H])
        n = jnp.tanh(gx[:, 2 * H:3 * H] + r * gh[:, 2 * H:3 * H])
        h = (1.0 - z) * n + z * h                                   # (B, H)

        # masked bilinear attention over encoder outputs (MXU einsums)
        enc_bm = enc_bm_ref[...]                                    # (B,Sp,H)
        proj = jnp.dot(h.astype(bf16), w_attn_ref[...],
                       preferred_element_type=f32)
        proj3 = proj.astype(bf16)[:, None, :]                       # (B,1,H)
        scores = jnp.einsum('bqh,bsh->bqs', proj3, enc_bm,
                            preferred_element_type=f32)             # (B,1,Sp)
        scores = jnp.where(mask3, scores, neg_big)
        scores = scores - jnp.max(scores, axis=-1, keepdims=True)
        e = jnp.exp(scores)
        attn = e / jnp.sum(e, axis=-1, keepdims=True)               # (B,1,Sp)
        ctx3 = jnp.einsum('bqs,bsh->bqh', attn.astype(bf16), enc_bm,
                          preferred_element_type=f32)               # (B,1,H)
        ctx = jnp.sum(ctx3, axis=1)                                 # (B,H)

        # output projection over [h ; context] without a lane concat
        logits = (jnp.dot(h.astype(bf16), w_out_h_ref[...],
                          preferred_element_type=f32)
                  + jnp.dot(ctx.astype(bf16), w_out_c_ref[...],
                            preferred_element_type=f32)
                  + b_out_ref[...])                                  # (B, V)
        mx = jnp.max(logits, axis=-1, keepdims=True)
        top = jnp.min(jnp.where(logits == mx, col_ids, V),
                      axis=-1, keepdims=True)       # greedy argmax (first max)

        attn_ref[t] = jnp.sum(attn, axis=1)       # lane-dense (B,Sp) store
        toks = jnp.where(tok_lane == t, top, toks)
        return h, top, toks

    top0 = jnp.full((B, 1), SOS, jnp.int32)
    toks0 = jnp.zeros((B, T_pad), jnp.int32)
    _, _, toks = jax.lax.fori_loop(0, T, dec_step, (h_enc, top0, toks0))
    tokens_ref[...] = toks                        # single dense token store


# ----------------------------------------------------------------------------
# Padding helpers (per-gate padding for the GRU weight/bias layout [r|z|n]).
# ----------------------------------------------------------------------------
def _pad2(a, rows, cols, fill=0.0):
    return jnp.pad(a, ((0, rows - a.shape[0]), (0, cols - a.shape[1])),
                   constant_values=fill)


def _pad_gru_w(w, in_pad, hidden, hidden_pad):
    parts = [_pad2(w[:, g * hidden:(g + 1) * hidden], in_pad, hidden_pad)
             for g in range(3)]
    return jnp.concatenate(parts, axis=1)


def _pad_gru_b(b, hidden, hidden_pad):
    parts = [_pad2(b[:, g * hidden:(g + 1) * hidden], 1, hidden_pad)
             for g in range(3)]
    return jnp.concatenate(parts, axis=1)


# ----------------------------------------------------------------------------
# Wrapper: embedding lookup, tile padding, bf16 casts, pallas_call setup.
# ----------------------------------------------------------------------------
@functools.partial(jax.jit, static_argnames=("max_dec_steps",))
def seq2seq_forward(params, context, context_lens, max_dec_steps):
    """Returns (encoder_outputs (S,B,H), encoder_state (B,H),
                decoded_tokens (T,B) int32, enc_attn_weights (T,B,S))."""
    f32, bf16 = jnp.float32, jnp.bfloat16
    B, S = context.shape
    V, E = params["emb"].shape
    H = params["enc_w_hh"].shape[0]
    T = max_dec_steps

    # batch tile: largest block that fits the MXU M dim (<= 128 rows).
    B_pad = _rup(B, _SUB)
    if B_pad > _MAX_BBLK:
        B_pad = _rup(B, _MAX_BBLK)
        bblk = _MAX_BBLK
    else:
        bblk = B_pad
    nb = B_pad // bblk

    E_pad, H_pad, V_pad = _rup(E, _LANE), _rup(H, _LANE), _rup(V, _LANE)
    S_pad, T_pad = _rup(S, _LANE), _rup(T, _LANE)

    # word_embed(filter_oov(context))  (ext_vocab_size=None -> identity filter)
    ctx_p = jnp.pad(context, ((0, B_pad - B), (0, 0)), constant_values=UNK)
    x_emb = jnp.take(params["emb"], ctx_p, axis=0)            # (B_pad, S, E)
    x_emb = jnp.transpose(x_emb, (1, 0, 2))                   # (S, B_pad, E)
    x_emb = jnp.pad(x_emb, ((0, 0), (0, 0), (0, E_pad - E))).astype(bf16)

    lens_p = jnp.pad(context_lens.astype(jnp.int32),
                     (0, B_pad - B)).reshape(B_pad, 1)

    emb_p = _pad2(params["emb"], V_pad, E_pad).astype(bf16)
    ew_ih = _pad_gru_w(params["enc_w_ih"], E_pad, H, H_pad).astype(bf16)
    ew_hh = _pad_gru_w(params["enc_w_hh"], H_pad, H, H_pad).astype(bf16)
    eb_ih = _pad_gru_b(params["enc_b_ih"], H, H_pad).astype(f32)
    eb_hh = _pad_gru_b(params["enc_b_hh"], H, H_pad).astype(f32)
    dw_ih = _pad_gru_w(params["dec_w_ih"], E_pad, H, H_pad).astype(bf16)
    dw_hh = _pad_gru_w(params["dec_w_hh"], H_pad, H, H_pad).astype(bf16)
    db_ih = _pad_gru_b(params["dec_b_ih"], H, H_pad).astype(f32)
    db_hh = _pad_gru_b(params["dec_b_hh"], H, H_pad).astype(f32)
    w_attn = _pad2(params["w_attn"], H_pad, H_pad).astype(bf16)
    w_out_h = _pad2(params["w_out"][:H], H_pad, V_pad).astype(bf16)
    w_out_c = _pad2(params["w_out"][H:], H_pad, V_pad).astype(bf16)
    b_out = _pad2(params["b_out"], 1, V_pad, fill=-1e9).astype(f32)

    def wfull(shape):
        return pl.BlockSpec(shape, lambda i, _s=shape: (0,) * len(_s))

    in_specs = [
        pl.BlockSpec((bblk, 1), lambda i: (i, 0)),                  # lens
        pl.BlockSpec((S, bblk, E_pad), lambda i: (0, i, 0)),        # x_emb
        wfull((V_pad, E_pad)),                                      # emb
        wfull((E_pad, 3 * H_pad)), wfull((H_pad, 3 * H_pad)),       # enc W
        wfull((1, 3 * H_pad)), wfull((1, 3 * H_pad)),               # enc b
        wfull((E_pad, 3 * H_pad)), wfull((H_pad, 3 * H_pad)),       # dec W
        wfull((1, 3 * H_pad)), wfull((1, 3 * H_pad)),               # dec b
        wfull((H_pad, H_pad)),                                      # w_attn
        wfull((H_pad, V_pad)), wfull((H_pad, V_pad)),               # w_out h/c
        wfull((1, V_pad)),                                          # b_out
    ]
    out_specs = (
        pl.BlockSpec((S, bblk, H_pad), lambda i: (0, i, 0)),        # enc outputs
        pl.BlockSpec((bblk, H_pad), lambda i: (i, 0)),              # enc state
        pl.BlockSpec((bblk, T_pad), lambda i: (i, 0)),              # tokens
        pl.BlockSpec((T, bblk, S_pad), lambda i: (0, i, 0)),        # attn
    )
    out_shape = (
        jax.ShapeDtypeStruct((S, B_pad, H_pad), f32),
        jax.ShapeDtypeStruct((B_pad, H_pad), f32),
        jax.ShapeDtypeStruct((B_pad, T_pad), jnp.int32),
        jax.ShapeDtypeStruct((T, B_pad, S_pad), f32),
    )
    scratch_shapes = [
        pltpu.VMEM((S, bblk, 3 * H_pad), bf16),       # hoisted encoder gx
        pltpu.VMEM((bblk, S_pad, H_pad), bf16),       # batch-major encoder out
    ]

    # generation-aware VMEM budget with headroom for compiler scratch
    def _nbytes(shape, dt):
        n = 1
        for d in shape:
            n *= int(d)
        return n * jnp.dtype(dt).itemsize

    w_bytes = sum(int(a.size) * a.dtype.itemsize for a in
                  (emb_p, ew_ih, ew_hh, eb_ih, eb_hh, dw_ih, dw_hh,
                   db_ih, db_hh, w_attn, w_out_h, w_out_c, b_out))
    blk_in = (_nbytes((bblk, 1), jnp.int32)
              + _nbytes((S, bblk, E_pad), bf16))
    blk_out = (_nbytes((S, bblk, H_pad), f32) + _nbytes((bblk, H_pad), f32)
               + _nbytes((bblk, T_pad), jnp.int32)
               + _nbytes((T, bblk, S_pad), f32))
    scr_bytes = (_nbytes((S, bblk, 3 * H_pad), bf16)
                 + _nbytes((bblk, S_pad, H_pad), bf16))
    try:
        vmem_cap = int(pltpu.get_tpu_info().vmem_capacity_bytes)
    except Exception:
        vmem_cap = 128 * 1024 * 1024
    need = 2 * (w_bytes + blk_in + blk_out) + scr_bytes + (4 << 20)
    vmem_limit = int(min(int(vmem_cap * 0.85), max(32 << 20, need)))

    enc_out_p, enc_state_p, tokens_p, attn_p = pl.pallas_call(
        _seq2seq_kernel,
        out_shape=out_shape,
        grid_spec=pltpu.PrefetchScalarGridSpec(
            num_scalar_prefetch=0,
            grid=(nb,),
            in_specs=in_specs,
            out_specs=out_specs,
            scratch_shapes=scratch_shapes),
        compiler_params=pltpu.CompilerParams(
            dimension_semantics=("parallel",),
            vmem_limit_bytes=vmem_limit),
    )(lens_p, x_emb, emb_p, ew_ih, ew_hh, eb_ih, eb_hh,
      dw_ih, dw_hh, db_ih, db_hh, w_attn, w_out_h, w_out_c, b_out)

    encoder_outputs = enc_out_p[:, :B, :H]                 # (S, B, H)
    encoder_state = enc_state_p[:B, :H]                    # (B, H)
    decoded_tokens = jnp.transpose(tokens_p[:B, :T], (1, 0))   # (T, B)
    enc_attn_weights = attn_p[:, :B, :S]                   # (T, B, S)
    return encoder_outputs, encoder_state, decoded_tokens, enc_attn_weights


# ----------------------------------------------------------------------------
# Deterministic parameter construction (shapes implied by the module config).
# Weight matrices are stored pre-transposed (in_dim, out_dim).
# ----------------------------------------------------------------------------
def make_params(key, vocab, embed_dim, hidden):
    ks = jax.random.split(key, 10)
    n = lambda k, shape, s=0.1: (s * jax.random.normal(k, shape)).astype(jnp.float32)
    return {
        "emb":      n(ks[0], (vocab, embed_dim)),          # word_embedding
        # encoder GRU (pre-transposed: (in, 3H), (H, 3H)), gate order [r|z|n]
        "enc_w_ih": n(ks[1], (embed_dim, 3 * hidden)),
        "enc_w_hh": n(ks[2], (hidden, 3 * hidden)),
        "enc_b_ih": n(ks[3], (1, 3 * hidden)),
        "enc_b_hh": n(ks[4], (1, 3 * hidden)),
        # decoder GRU
        "dec_w_ih": n(ks[5], (embed_dim, 3 * hidden)),
        "dec_w_hh": n(ks[6], (hidden, 3 * hidden)),
        "dec_b_ih": n(ks[7], (1, 3 * hidden)),
        "dec_b_hh": n(ks[8], (1, 3 * hidden)),
        # attention (bilinear) + output projection over [h ; context]
        "w_attn":   n(ks[9], (hidden, hidden)),
        "w_out":    n(jax.random.fold_in(key, 100), (2 * hidden, vocab)),
        "b_out":    jnp.zeros((1, vocab), jnp.float32),
    }


if __name__ == "__main__":
    # deliberately non-tile-aligned small shapes to exercise the padding path
    B, S, V, E, H, T = 2, 12, 60, 48, 64, 5

    key = jax.random.PRNGKey(0)
    k_par, k_tok = jax.random.split(key)
    params = make_params(k_par, V, E, H)

    context = jax.random.randint(k_tok, (B, S), 2, V, dtype=jnp.int32)
    context_lens = jnp.array([S, S - 3], dtype=jnp.int32)

    enc_out, enc_state, decoded, attn = seq2seq_forward(
        params, context, context_lens, T)
    jax.block_until_ready((enc_out, enc_state, decoded, attn))

    assert enc_out.shape == (S, B, H)
    assert enc_state.shape == (B, H)
    assert decoded.shape == (T, B) and decoded.dtype == jnp.int32
    assert attn.shape == (T, B, S)
    assert bool(jnp.all(jnp.isfinite(enc_out)))
    assert bool(jnp.all(jnp.isfinite(enc_state)))
    assert bool(jnp.all(jnp.isfinite(attn)))
    assert bool(jnp.all((decoded >= 0) & (decoded < V)))
    # packed-sequence semantics: outputs past each row's length are zero
    assert bool(jnp.all(enc_out[context_lens[1]:, 1, :] == 0.0))
    # masked attention over source positions should sum to ~1 per (t, b)
    assert bool(jnp.all(jnp.abs(jnp.sum(attn, axis=-1) - 1.0) < 1e-2))
    print("KERNEL_OK")
</pallas_src>

<mosaic_0001>
module attributes {stable_mosaic.version = 11 : i64} {
  func.func @_seq2seq_kernel(%arg0: i32, %arg1: memref<16x1xi32, #tpu.memory_space<vmem>>, %arg2: memref<12x16x128xbf16, #tpu.memory_space<vmem>>, %arg3: memref<128x128xbf16, #tpu.memory_space<vmem>>, %arg4: memref<128x384xbf16, #tpu.memory_space<vmem>>, %arg5: memref<128x384xbf16, #tpu.memory_space<vmem>>, %arg6: memref<1x384xf32, #tpu.memory_space<vmem>>, %arg7: memref<1x384xf32, #tpu.memory_space<vmem>>, %arg8: memref<128x384xbf16, #tpu.memory_space<vmem>>, %arg9: memref<128x384xbf16, #tpu.memory_space<vmem>>, %arg10: memref<1x384xf32, #tpu.memory_space<vmem>>, %arg11: memref<1x384xf32, #tpu.memory_space<vmem>>, %arg12: memref<128x128xbf16, #tpu.memory_space<vmem>>, %arg13: memref<128x128xbf16, #tpu.memory_space<vmem>>, %arg14: memref<128x128xbf16, #tpu.memory_space<vmem>>, %arg15: memref<1x128xf32, #tpu.memory_space<vmem>>, %arg16: memref<12x16x128xf32, #tpu.memory_space<vmem>>, %arg17: memref<16x128xf32, #tpu.memory_space<vmem>>, %arg18: memref<16x128xi32, #tpu.memory_space<vmem>>, %arg19: memref<5x16x128xf32, #tpu.memory_space<vmem>>, %arg20: memref<12x16x384xbf16, #tpu.memory_space<vmem>>, %arg21: memref<16x128x128xbf16, #tpu.memory_space<vmem>>) attributes {dimension_semantics = [#tpu.dimension_semantics<parallel>], iteration_bounds = array<i64: 1>, scalar_prefetch = 0 : i64, scratch_operands = 2 : i64, tpu.core_type = #tpu.core_type<tc>, window_params = [{transform_indices = @transform_0, window_bounds = array<i64: 16, 1>}, {transform_indices = @transform_1, window_bounds = array<i64: 12, 16, 128>}, {pipeline_mode = #tpu.pipeline_mode<synchronous>, transform_indices = @transform_2, window_bounds = array<i64: 128, 128>}, {pipeline_mode = #tpu.pipeline_mode<synchronous>, transform_indices = @transform_3, window_bounds = array<i64: 128, 384>}, {pipeline_mode = #tpu.pipeline_mode<synchronous>, transform_indices = @transform_4, window_bounds = array<i64: 128, 384>}, {pipeline_mode = #tpu.pipeline_mode<synchronous>, transform_indices = @transform_5, window_bounds = array<i64: 1, 384>}, {pipeline_mode = #tpu.pipeline_mode<synchronous>, transform_indices = @transform_6, window_bounds = array<i64: 1, 384>}, {pipeline_mode = #tpu.pipeline_mode<synchronous>, transform_indices = @transform_7, window_bounds = array<i64: 128, 384>}, {pipeline_mode = #tpu.pipeline_mode<synchronous>, transform_indices = @transform_8, window_bounds = array<i64: 128, 384>}, {pipeline_mode = #tpu.pipeline_mode<synchronous>, transform_indices = @transform_9, window_bounds = array<i64: 1, 384>}, {pipeline_mode = #tpu.pipeline_mode<synchronous>, transform_indices = @transform_10, window_bounds = array<i64: 1, 384>}, {pipeline_mode = #tpu.pipeline_mode<synchronous>, transform_indices = @transform_11, window_bounds = array<i64: 128, 128>}, {pipeline_mode = #tpu.pipeline_mode<synchronous>, transform_indices = @transform_12, window_bounds = array<i64: 128, 128>}, {pipeline_mode = #tpu.pipeline_mode<synchronous>, transform_indices = @transform_13, window_bounds = array<i64: 128, 128>}, {pipeline_mode = #tpu.pipeline_mode<synchronous>, transform_indices = @transform_14, window_bounds = array<i64: 1, 128>}, {transform_indices = @transform_15, window_bounds = array<i64: 12, 16, 128>}, {transform_indices = @transform_16, window_bounds = array<i64: 16, 128>}, {transform_indices = @transform_17, window_bounds = array<i64: 16, 128>}, {transform_indices = @transform_18, window_bounds = array<i64: 5, 16, 128>}]} {
    %c0 = arith.constant 0 : index
    %c0_0 = arith.constant 0 : index
    %0 = vector.load %arg1[%c0, %c0_0] : memref<16x1xi32, #tpu.memory_space<vmem>>, vector<16x1xi32>
    %c0_1 = arith.constant 0 : index
    %c0_2 = arith.constant 0 : index
    %c0_3 = arith.constant 0 : index
    %1 = vector.load %arg2[%c0_1, %c0_2, %c0_3] : memref<12x16x128xbf16, #tpu.memory_space<vmem>>, vector<12x16x128xbf16>
    %2 = vector.shape_cast %1 : vector<12x16x128xbf16> to vector<192x128xbf16>
    %c0_4 = arith.constant 0 : index
    %c0_5 = arith.constant 0 : index
    %3 = vector.load %arg4[%c0_4, %c0_5] : memref<128x384xbf16, #tpu.memory_space<vmem>>, vector<128x384xbf16>
    %cst = arith.constant dense<0.000000e+00> : vector<192x384xf32>
    %4 = tpu.matmul %2, %3, %cst {dimension_numbers = #tpu.dot_dimension_numbers<[1], [0], [0], [1], [0, 0, 1, 1], [], []>} : vector<192x128xbf16>, vector<128x384xbf16>, vector<192x384xf32> -> vector<192x384xf32>
    %c0_6 = arith.constant 0 : index
    %c0_7 = arith.constant 0 : index
    %5 = vector.load %arg6[%c0_6, %c0_7] : memref<1x384xf32, #tpu.memory_space<vmem>>, vector<1x384xf32>
    %6 = vector.broadcast %5 : vector<1x384xf32> to vector<192x384xf32>
    %7 = arith.addf %4, %6 : vector<192x384xf32>
    %8 = vector.shape_cast %7 : vector<192x384xf32> to vector<12x16x384xf32>
    %9 = arith.truncf %8 : vector<12x16x384xf32> to vector<12x16x384xbf16>
    %c0_8 = arith.constant 0 : index
    %c0_9 = arith.constant 0 : index
    %c0_10 = arith.constant 0 : index
    %10 = vector.load %arg20[%c0_8, %c0_9, %c0_10] : memref<12x16x384xbf16, #tpu.memory_space<vmem>>, vector<12x16x384xbf16>
    tpu.vector_store %arg20[%c0_8, %c0_9, %c0_10], %9 {strides = array<i32>} : memref<12x16x384xbf16, #tpu.memory_space<vmem>>, vector<12x16x384xbf16>,
    %cst_11 = arith.constant 0.000000e+00 : f32
    %11 = vector.broadcast %cst_11 : f32 to vector<16x128xf32>
    %c0_i32 = arith.constant 0 : i32
    %c12_i32 = arith.constant 12 : i32
    %12 = arith.addi %c0_i32, %c12_i32 : i32
    %c1_i32 = arith.constant 1 : i32
    %13 = scf.for %arg22 = %c0_i32 to %12 step %c1_i32 iter_args(%arg23 = %11) -> (vector<16x128xf32>)  : i32 {
      %88 = arith.index_cast %arg22 : i32 to index
      %c0_87 = arith.constant 0 : index
      %c0_88 = arith.constant 0 : index
      %89 = vector.load %arg20[%88, %c0_87, %c0_88] : memref<12x16x384xbf16, #tpu.memory_space<vmem>>, vector<1x16x384xbf16>
      %90 = vector.shape_cast %89 : vector<1x16x384xbf16> to vector<16x384xbf16>
      %91 = arith.extf %90 : vector<16x384xbf16> to vector<16x384xf32>
      %92 = arith.truncf %arg23 : vector<16x128xf32> to vector<16x128xbf16>
      %c0_89 = arith.constant 0 : index
      %c0_90 = arith.constant 0 : index
      %93 = vector.load %arg5[%c0_89, %c0_90] : memref<128x384xbf16, #tpu.memory_space<vmem>>, vector<128x384xbf16>
      %cst_91 = arith.constant dense<0.000000e+00> : vector<16x384xf32>
      %94 = tpu.matmul %92, %93, %cst_91 {dimension_numbers = #tpu.dot_dimension_numbers<[1], [0], [0], [1], [0, 0, 1, 1], [], []>} : vector<16x128xbf16>, vector<128x384xbf16>, vector<16x384xf32> -> vector<16x384xf32>
      %c0_92 = arith.constant 0 : index
      %c0_93 = arith.constant 0 : index
      %95 = vector.load %arg7[%c0_92, %c0_93] : memref<1x384xf32, #tpu.memory_space<vmem>>, vector<1x384xf32>
      %96 = vector.broadcast %95 : vector<1x384xf32> to vector<16x384xf32>
      %97 = arith.addf %94, %96 : vector<16x384xf32>
      %98 = vector.extract_strided_slice %91 {offsets = [0, 0], sizes = [16, 128], strides = [1, 1]} : vector<16x384xf32> to vector<16x128xf32>
      %99 = vector.extract_strided_slice %97 {offsets = [0, 0], sizes = [16, 128], strides = [1, 1]} : vector<16x384xf32> to vector<16x128xf32>
      %100 = arith.addf %98, %99 : vector<16x128xf32>
      %101 = arith.negf %100 : vector<16x128xf32>
      %102 = math.exp %101 : vector<16x128xf32>
      %cst_94 = arith.constant 1.000000e+00 : f32
      %103 = vector.broadcast %cst_94 : f32 to vector<16x128xf32>
      %104 = arith.addf %103, %102 : vector<16x128xf32>
      %105 = arith.divf %103, %104 : vector<16x128xf32>
      %106 = vector.extract_strided_slice %91 {offsets = [0, 128], sizes = [16, 128], strides = [1, 1]} : vector<16x384xf32> to vector<16x128xf32>
      %107 = vector.extract_strided_slice %97 {offsets = [0, 128], sizes = [16, 128], strides = [1, 1]} : vector<16x384xf32> to vector<16x128xf32>
      %108 = arith.addf %106, %107 : vector<16x128xf32>
      %109 = arith.negf %108 : vector<16x128xf32>
      %110 = math.exp %109 : vector<16x128xf32>
      %cst_95 = arith.constant 1.000000e+00 : f32
      %111 = vector.broadcast %cst_95 : f32 to vector<16x128xf32>
      %112 = arith.addf %111, %110 : vector<16x128xf32>
      %113 = arith.divf %111, %112 : vector<16x128xf32>
      %114 = vector.extract_strided_slice %91 {offsets = [0, 256], sizes = [16, 128], strides = [1, 1]} : vector<16x384xf32> to vector<16x128xf32>
      %115 = vector.extract_strided_slice %97 {offsets = [0, 256], sizes = [16, 128], strides = [1, 1]} : vector<16x384xf32> to vector<16x128xf32>
      %116 = arith.mulf %105, %115 : vector<16x128xf32>
      %117 = arith.addf %114, %116 : vector<16x128xf32>
      %118 = math.tanh %117 : vector<16x128xf32>
      %cst_96 = arith.constant 1.000000e+00 : f32
      %119 = vector.broadcast %cst_96 : f32 to vector<16x128xf32>
      %120 = arith.subf %119, %113 : vector<16x128xf32>
      %121 = arith.mulf %120, %118 : vector<16x128xf32>
      %122 = arith.mulf %113, %arg23 : vector<16x128xf32>
      %123 = arith.addf %121, %122 : vector<16x128xf32>
      %124 = vector.broadcast %arg22 : i32 to vector<16x1xi32>
      %125 = arith.cmpi slt, %124, %0 : vector<16x1xi32>
      %cst_97 = arith.constant 0.000000e+00 : f32
      %126 = vector.shape_cast %125 : vector<16x1xi1> to vector<16x1xi1>
      %127 = vector.broadcast %126 : vector<16x1xi1> to vector<16x128xi1>
      %128 = vector.broadcast %cst_97 : f32 to vector<16x128xf32>
      %129 = arith.select %127, %123, %128 : vector<16x128xi1>, vector<16x128xf32>
      %130 = arith.index_cast %arg22 : i32 to index
      %c0_98 = arith.constant 0 : index
      %c0_99 = arith.constant 0 : index
      %131 = vector.load %arg16[%130, %c0_98, %c0_99] : memref<12x16x128xf32, #tpu.memory_space<vmem>>, vector<1x16x128xf32>
      %132 = vector.shape_cast %131 : vector<1x16x128xf32> to vector<16x128xf32>
      %133 = vector.shape_cast %129 : vector<16x128xf32> to vector<1x16x128xf32>
      tpu.vector_store %arg16[%130, %c0_98, %c0_99], %133 {strides = array<i32>} : memref<12x16x128xf32, #tpu.memory_space<vmem>>, vector<1x16x128xf32>,
      %134 = vector.shape_cast %125 : vector<16x1xi1> to vector<16x1xi1>
      %135 = vector.broadcast %134 : vector<16x1xi1> to vector<16x128xi1>
      %136 = arith.select %135, %123, %arg23 : vector<16x128xi1>, vector<16x128xf32>
      scf.yield %136 : vector<16x128xf32>
    }
    %c12_i32_12 = arith.constant 12 : i32
    %c0_13 = arith.constant 0 : index
    %c0_14 = arith.constant 0 : index
    %14 = vector.load %arg17[%c0_13, %c0_14] : memref<16x128xf32, #tpu.memory_space<vmem>>, vector<16x128xf32>
    tpu.vector_store %arg17[%c0_13, %c0_14], %13 {strides = array<i32>} : memref<16x128xf32, #tpu.memory_space<vmem>>, vector<16x128xf32>,
    %c0_15 = arith.constant 0 : index
    %c0_16 = arith.constant 0 : index
    %c0_17 = arith.constant 0 : index
    %15 = vector.load %arg16[%c0_15, %c0_16, %c0_17] : memref<12x16x128xf32, #tpu.memory_space<vmem>>, vector<1x16x128xf32>
    %16 = vector.shape_cast %15 : vector<1x16x128xf32> to vector<16x128xf32>
    %17 = vector.shape_cast %16 : vector<16x128xf32> to vector<16x1x128xf32>
    %18 = arith.truncf %17 : vector<16x1x128xf32> to vector<16x1x128xbf16>
    %c0_18 = arith.constant 0 : index
    %c0_19 = arith.constant 0 : index
    %c0_20 = arith.constant 0 : index
    %19 = vector.load %arg21[%c0_18, %c0_19, %c0_20] : memref<16x128x128xbf16, #tpu.memory_space<vmem>>, vector<16x1x128xbf16>
    tpu.vector_store %arg21[%c0_18, %c0_19, %c0_20], %18 {strides = array<i32>} : memref<16x128x128xbf16, #tpu.memory_space<vmem>>, vector<16x1x128xbf16>,
    %c1 = arith.constant 1 : index
    %c0_21 = arith.constant 0 : index
    %c0_22 = arith.constant 0 : index
    %20 = vector.load %arg16[%c1, %c0_21, %c0_22] : memref<12x16x128xf32, #tpu.memory_space<vmem>>, vector<1x16x128xf32>
    %21 = vector.shape_cast %20 : vector<1x16x128xf32> to vector<16x128xf32>
    %22 = vector.shape_cast %21 : vector<16x128xf32> to vector<16x1x128xf32>
    %23 = arith.truncf %22 : vector<16x1x128xf32> to vector<16x1x128xbf16>
    %c0_23 = arith.constant 0 : index
    %c1_24 = arith.constant 1 : index
    %c0_25 = arith.constant 0 : index
    %24 = vector.load %arg21[%c0_23, %c1_24, %c0_25] : memref<16x128x128xbf16, #tpu.memory_space<vmem>>, vector<16x1x128xbf16>
    tpu.vector_store %arg21[%c0_23, %c1_24, %c0_25], %23 {strides = array<i32>} : memref<16x128x128xbf16, #tpu.memory_space<vmem>>, vector<16x1x128xbf16>,
    %c2 = arith.constant 2 : index
    %c0_26 = arith.constant 0 : index
    %c0_27 = arith.constant 0 : index
    %25 = vector.load %arg16[%c2, %c0_26, %c0_27] : memref<12x16x128xf32, #tpu.memory_space<vmem>>, vector<1x16x128xf32>
    %26 = vector.shape_cast %25 : vector<1x16x128xf32> to vector<16x128xf32>
    %27 = vector.shape_cast %26 : vector<16x128xf32> to vector<16x1x128xf32>
    %28 = arith.truncf %27 : vector<16x1x128xf32> to vector<16x1x128xbf16>
    %c0_28 = arith.constant 0 : index
    %c2_29 = arith.constant 2 : index
    %c0_30 = arith.constant 0 : index
    %29 = vector.load %arg21[%c0_28, %c2_29, %c0_30] : memref<16x128x128xbf16, #tpu.memory_space<vmem>>, vector<16x1x128xbf16>
    tpu.vector_store %arg21[%c0_28, %c2_29, %c0_30], %28 {strides = array<i32>} : memref<16x128x128xbf16, #tpu.memory_space<vmem>>, vector<16x1x128xbf16>,
    %c3 = arith.constant 3 : index
    %c0_31 = arith.constant 0 : index
    %c0_32 = arith.constant 0 : index
    %30 = vector.load %arg16[%c3, %c0_31, %c0_32] : memref<12x16x128xf32, #tpu.memory_space<vmem>>, vector<1x16x128xf32>
    %31 = vector.shape_cast %30 : vector<1x16x128xf32> to vector<16x128xf32>
    %32 = vector.shape_cast %31 : vector<16x128xf32> to vector<16x1x128xf32>
    %33 = arith.truncf %32 : vector<16x1x128xf32> to vector<16x1x128xbf16>
    %c0_33 = arith.constant 0 : index
    %c3_34 = arith.constant 3 : index
    %c0_35 = arith.constant 0 : index
    %34 = vector.load %arg21[%c0_33, %c3_34, %c0_35] : memref<16x128x128xbf16, #tpu.memory_space<vmem>>, vector<16x1x128xbf16>
    tpu.vector_store %arg21[%c0_33, %c3_34, %c0_35], %33 {strides = array<i32>} : memref<16x128x128xbf16, #tpu.memory_space<vmem>>, vector<16x1x128xbf16>,
    %c4 = arith.constant 4 : index
    %c0_36 = arith.constant 0 : index
    %c0_37 = arith.constant 0 : index
    %35 = vector.load %arg16[%c4, %c0_36, %c0_37] : memref<12x16x128xf32, #tpu.memory_space<vmem>>, vector<1x16x128xf32>
    %36 = vector.shape_cast %35 : vector<1x16x128xf32> to vector<16x128xf32>
    %37 = vector.shape_cast %36 : vector<16x128xf32> to vector<16x1x128xf32>
    %38 = arith.truncf %37 : vector<16x1x128xf32> to vector<16x1x128xbf16>
    %c0_38 = arith.constant 0 : index
    %c4_39 = arith.constant 4 : index
    %c0_40 = arith.constant 0 : index
    %39 = vector.load %arg21[%c0_38, %c4_39, %c0_40] : memref<16x128x128xbf16, #tpu.memory_space<vmem>>, vector<16x1x128xbf16>
    tpu.vector_store %arg21[%c0_38, %c4_39, %c0_40], %38 {strides = array<i32>} : memref<16x128x128xbf16, #tpu.memory_space<vmem>>, vector<16x1x128xbf16>,
    %c5 = arith.constant 5 : index
    %c0_41 = arith.constant 0 : index
    %c0_42 = arith.constant 0 : index
    %40 = vector.load %arg16[%c5, %c0_41, %c0_42] : memref<12x16x128xf32, #tpu.memory_space<vmem>>, vector<1x16x128xf32>
    %41 = vector.shape_cast %40 : vector<1x16x128xf32> to vector<16x128xf32>
    %42 = vector.shape_cast %41 : vector<16x128xf32> to vector<16x1x128xf32>
    %43 = arith.truncf %42 : vector<16x1x128xf32> to vector<16x1x128xbf16>
    %c0_43 = arith.constant 0 : index
    %c5_44 = arith.constant 5 : index
    %c0_45 = arith.constant 0 : index
    %44 = vector.load %arg21[%c0_43, %c5_44, %c0_45] : memref<16x128x128xbf16, #tpu.memory_space<vmem>>, vector<16x1x128xbf16>
    tpu.vector_store %arg21[%c0_43, %c5_44, %c0_45], %43 {strides = array<i32>} : memref<16x128x128xbf16, #tpu.memory_space<vmem>>, vector<16x1x128xbf16>,
    %c6 = arith.constant 6 : index
    %c0_46 = arith.constant 0 : index
    %c0_47 = arith.constant 0 : index
    %45 = vector.load %arg16[%c6, %c0_46, %c0_47] : memref<12x16x128xf32, #tpu.memory_space<vmem>>, vector<1x16x128xf32>
    %46 = vector.shape_cast %45 : vector<1x16x128xf32> to vector<16x128xf32>
    %47 = vector.shape_cast %46 : vector<16x128xf32> to vector<16x1x128xf32>
    %48 = arith.truncf %47 : vector<16x1x128xf32> to vector<16x1x128xbf16>
    %c0_48 = arith.constant 0 : index
    %c6_49 = arith.constant 6 : index
    %c0_50 = arith.constant 0 : index
    %49 = vector.load %arg21[%c0_48, %c6_49, %c0_50] : memref<16x128x128xbf16, #tpu.memory_space<vmem>>, vector<16x1x128xbf16>
    tpu.vector_store %arg21[%c0_48, %c6_49, %c0_50], %48 {strides = array<i32>} : memref<16x128x128xbf16, #tpu.memory_space<vmem>>, vector<16x1x128xbf16>,
    %c7 = arith.constant 7 : index
    %c0_51 = arith.constant 0 : index
    %c0_52 = arith.constant 0 : index
    %50 = vector.load %arg16[%c7, %c0_51, %c0_52] : memref<12x16x128xf32, #tpu.memory_space<vmem>>, vector<1x16x128xf32>
    %51 = vector.shape_cast %50 : vector<1x16x128xf32> to vector<16x128xf32>
    %52 = vector.shape_cast %51 : vector<16x128xf32> to vector<16x1x128xf32>
    %53 = arith.truncf %52 : vector<16x1x128xf32> to vector<16x1x128xbf16>
    %c0_53 = arith.constant 0 : index
    %c7_54 = arith.constant 7 : index
    %c0_55 = arith.constant 0 : index
    %54 = vector.load %arg21[%c0_53, %c7_54, %c0_55] : memref<16x128x128xbf16, #tpu.memory_space<vmem>>, vector<16x1x128xbf16>
    tpu.vector_store %arg21[%c0_53, %c7_54, %c0_55], %53 {strides = array<i32>} : memref<16x128x128xbf16, #tpu.memory_space<vmem>>, vector<16x1x128xbf16>,
    %c8 = arith.constant 8 : index
    %c0_56 = arith.constant 0 : index
    %c0_57 = arith.constant 0 : index
    %55 = vector.load %arg16[%c8, %c0_56, %c0_57] : memref<12x16x128xf32, #tpu.memory_space<vmem>>, vector<1x16x128xf32>
    %56 = vector.shape_cast %55 : vector<1x16x128xf32> to vector<16x128xf32>
    %57 = vector.shape_cast %56 : vector<16x128xf32> to vector<16x1x128xf32>
    %58 = arith.truncf %57 : vector<16x1x128xf32> to vector<16x1x128xbf16>
    %c0_58 = arith.constant 0 : index
    %c8_59 = arith.constant 8 : index
    %c0_60 = arith.constant 0 : index
    %59 = vector.load %arg21[%c0_58, %c8_59, %c0_60] : memref<16x128x128xbf16, #tpu.memory_space<vmem>>, vector<16x1x128xbf16>
    tpu.vector_store %arg21[%c0_58, %c8_59, %c0_60], %58 {strides = array<i32>} : memref<16x128x128xbf16, #tpu.memory_space<vmem>>, vector<16x1x128xbf16>,
    %c9 = arith.constant 9 : index
    %c0_61 = arith.constant 0 : index
    %c0_62 = arith.constant 0 : index
    %60 = vector.load %arg16[%c9, %c0_61, %c0_62] : memref<12x16x128xf32, #tpu.memory_space<vmem>>, vector<1x16x128xf32>
    %61 = vector.shape_cast %60 : vector<1x16x128xf32> to vector<16x128xf32>
    %62 = vector.shape_cast %61 : vector<16x128xf32> to vector<16x1x128xf32>
    %63 = arith.truncf %62 : vector<16x1x128xf32> to vector<16x1x128xbf16>
    %c0_63 = arith.constant 0 : index
    %c9_64 = arith.constant 9 : index
    %c0_65 = arith.constant 0 : index
    %64 = vector.load %arg21[%c0_63, %c9_64, %c0_65] : memref<16x128x128xbf16, #tpu.memory_space<vmem>>, vector<16x1x128xbf16>
    tpu.vector_store %arg21[%c0_63, %c9_64, %c0_65], %63 {strides = array<i32>} : memref<16x128x128xbf16, #tpu.memory_space<vmem>>, vector<16x1x128xbf16>,
    %c10 = arith.constant 10 : index
    %c0_66 = arith.constant 0 : index
    %c0_67 = arith.constant 0 : index
    %65 = vector.load %arg16[%c10, %c0_66, %c0_67] : memref<12x16x128xf32, #tpu.memory_space<vmem>>, vector<1x16x128xf32>
    %66 = vector.shape_cast %65 : vector<1x16x128xf32> to vector<16x128xf32>
    %67 = vector.shape_cast %66 : vector<16x128xf32> to vector<16x1x128xf32>
    %68 = arith.truncf %67 : vector<16x1x128xf32> to vector<16x1x128xbf16>
    %c0_68 = arith.constant 0 : index
    %c10_69 = arith.constant 10 : index
    %c0_70 = arith.constant 0 : index
    %69 = vector.load %arg21[%c0_68, %c10_69, %c0_70] : memref<16x128x128xbf16, #tpu.memory_space<vmem>>, vector<16x1x128xbf16>
    tpu.vector_store %arg21[%c0_68, %c10_69, %c0_70], %68 {strides = array<i32>} : memref<16x128x128xbf16, #tpu.memory_space<vmem>>, vector<16x1x128xbf16>,
    %c11 = arith.constant 11 : index
    %c0_71 = arith.constant 0 : index
    %c0_72 = arith.constant 0 : index
    %70 = vector.load %arg16[%c11, %c0_71, %c0_72] : memref<12x16x128xf32, #tpu.memory_space<vmem>>, vector<1x16x128xf32>
    %71 = vector.shape_cast %70 : vector<1x16x128xf32> to vector<16x128xf32>
    %72 = vector.shape_cast %71 : vector<16x128xf32> to vector<16x1x128xf32>
    %73 = arith.truncf %72 : vector<16x1x128xf32> to vector<16x1x128xbf16>
    %c0_73 = arith.constant 0 : index
    %c11_74 = arith.constant 11 : index
    %c0_75 = arith.constant 0 : index
    %74 = vector.load %arg21[%c0_73, %c11_74, %c0_75] : memref<16x128x128xbf16, #tpu.memory_space<vmem>>, vector<16x1x128xbf16>
    tpu.vector_store %arg21[%c0_73, %c11_74, %c0_75], %73 {strides = array<i32>} : memref<16x128x128xbf16, #tpu.memory_space<vmem>>, vector<16x1x128xbf16>,
    %cst_76 = arith.constant 0.000000e+00 : bf16
    %75 = vector.broadcast %cst_76 : bf16 to vector<16x116x128xbf16>
    %c0_77 = arith.constant 0 : index
    %c12 = arith.constant 12 : index
    %c0_78 = arith.constant 0 : index
    %76 = vector.load %arg21[%c0_77, %c12, %c0_78] : memref<16x128x128xbf16, #tpu.memory_space<vmem>>, vector<16x116x128xbf16>
    tpu.vector_store %arg21[%c0_77, %c12, %c0_78], %75 {strides = array<i32>} : memref<16x128x128xbf16, #tpu.memory_space<vmem>>, vector<16x116x128xbf16>,
    %77 = tpu.iota {dimensions = array<i32: 1>} : vector<16x128xi32>
    %78 = tpu.iota {dimensions = array<i32: 1>} : vector<16x128xi32>
    %79 = tpu.iota {dimensions = array<i32: 2>} : vector<16x1x128xi32>
    %80 = vector.shape_cast %0 : vector<16x1xi32> to vector<16x1x1xi32>
    %81 = vector.broadcast %80 : vector<16x1x1xi32> to vector<16x1x128xi32>
    %82 = arith.cmpi slt, %79, %81 : vector<16x1x128xi32>
    %c1_i32_79 = arith.constant 1 : i32
    %83 = vector.broadcast %c1_i32_79 : i32 to vector<16x1xi32>
    %c0_i32_80 = arith.constant 0 : i32
    %84 = vector.broadcast %c0_i32_80 : i32 to vector<16x128xi32>
    %cst_81 = arith.constant -1.000000e+09 : f32
    %c0_i32_82 = arith.constant 0 : i32
    %c5_i32 = arith.constant 5 : i32
    %85 = arith.addi %c0_i32_82, %c5_i32 : i32
    %c1_i32_83 = arith.constant 1 : i32
    %86:3 = scf.for %arg22 = %c0_i32_82 to %85 step %c1_i32_83 iter_args(%arg23 = %13, %arg24 = %83, %arg25 = %84) -> (vector<16x128xf32>, vector<16x1xi32>, vector<16x128xi32>)  : i32 {
      %88 = vector.broadcast %arg24 : vector<16x1xi32> to vector<16x128xi32>
      %89 = arith.cmpi eq, %77, %88 : vector<16x128xi32>
      %90 = arith.extui %89 : vector<16x128xi1> to vector<16x128xi32>
      %91 = arith.sitofp %90 : vector<16x128xi32> to vector<16x128xf32>
      %92 = arith.truncf %91 : vector<16x128xf32> to vector<16x128xbf16>
      %c0_87 = arith.constant 0 : index
      %c0_88 = arith.constant 0 : index
      %93 = vector.load %arg3[%c0_87, %c0_88] : memref<128x128xbf16, #tpu.memory_space<vmem>>, vector<128x128xbf16>
      %cst_89 = arith.constant dense<0.000000e+00> : vector<16x128xf32>
      %94 = tpu.matmul %92, %93, %cst_89 {dimension_numbers = #tpu.dot_dimension_numbers<[1], [0], [0], [1], [0, 0, 1, 1], [], []>} : vector<16x128xbf16>, vector<128x128xbf16>, vector<16x128xf32> -> vector<16x128xf32>
      %95 = arith.truncf %94 : vector<16x128xf32> to vector<16x128xbf16>
      %c0_90 = arith.constant 0 : index
      %c0_91 = arith.constant 0 : index
      %96 = vector.load %arg8[%c0_90, %c0_91] : memref<128x384xbf16, #tpu.memory_space<vmem>>, vector<128x384xbf16>
      %cst_92 = arith.constant dense<0.000000e+00> : vector<16x384xf32>
      %97 = tpu.matmul %95, %96, %cst_92 {dimension_numbers = #tpu.dot_dimension_numbers<[1], [0], [0], [1], [0, 0, 1, 1], [], []>} : vector<16x128xbf16>, vector<128x384xbf16>, vector<16x384xf32> -> vector<16x384xf32>
      %c0_93 = arith.constant 0 : index
      %c0_94 = arith.constant 0 : index
      %98 = vector.load %arg10[%c0_93, %c0_94] : memref<1x384xf32, #tpu.memory_space<vmem>>, vector<1x384xf32>
      %99 = vector.broadcast %98 : vector<1x384xf32> to vector<16x384xf32>
      %100 = arith.addf %97, %99 : vector<16x384xf32>
      %101 = arith.truncf %arg23 : vector<16x128xf32> to vector<16x128xbf16>
      %c0_95 = arith.constant 0 : index
      %c0_96 = arith.constant 0 : index
      %102 = vector.load %arg9[%c0_95, %c0_96] : memref<128x384xbf16, #tpu.memory_space<vmem>>, vector<128x384xbf16>
      %cst_97 = arith.constant dense<0.000000e+00> : vector<16x384xf32>
      %103 = tpu.matmul %101, %102, %cst_97 {dimension_numbers = #tpu.dot_dimension_numbers<[1], [0], [0], [1], [0, 0, 1, 1], [], []>} : vector<16x128xbf16>, vector<128x384xbf16>, vector<16x384xf32> -> vector<16x384xf32>
      %c0_98 = arith.constant 0 : index
      %c0_99 = arith.constant 0 : index
      %104 = vector.load %arg11[%c0_98, %c0_99] : memref<1x384xf32, #tpu.memory_space<vmem>>, vector<1x384xf32>
      %105 = vector.broadcast %104 : vector<1x384xf32> to vector<16x384xf32>
      %106 = arith.addf %103, %105 : vector<16x384xf32>
      %107 = vector.extract_strided_slice %100 {offsets = [0, 0], sizes = [16, 128], strides = [1, 1]} : vector<16x384xf32> to vector<16x128xf32>
      %108 = vector.extract_strided_slice %106 {offsets = [0, 0], sizes = [16, 128], strides = [1, 1]} : vector<16x384xf32> to vector<16x128xf32>
      %109 = arith.addf %107, %108 : vector<16x128xf32>
      %110 = arith.negf %109 : vector<16x128xf32>
      %111 = math.exp %110 : vector<16x128xf32>
      %cst_100 = arith.constant 1.000000e+00 : f32
      %112 = vector.broadcast %cst_100 : f32 to vector<16x128xf32>
      %113 = arith.addf %112, %111 : vector<16x128xf32>
      %114 = arith.divf %112, %113 : vector<16x128xf32>
      %115 = vector.extract_strided_slice %100 {offsets = [0, 128], sizes = [16, 128], strides = [1, 1]} : vector<16x384xf32> to vector<16x128xf32>
      %116 = vector.extract_strided_slice %106 {offsets = [0, 128], sizes = [16, 128], strides = [1, 1]} : vector<16x384xf32> to vector<16x128xf32>
      %117 = arith.addf %115, %116 : vector<16x128xf32>
      %118 = arith.negf %117 : vector<16x128xf32>
      %119 = math.exp %118 : vector<16x128xf32>
      %cst_101 = arith.constant 1.000000e+00 : f32
      %120 = vector.broadcast %cst_101 : f32 to vector<16x128xf32>
      %121 = arith.addf %120, %119 : vector<16x128xf32>
      %122 = arith.divf %120, %121 : vector<16x128xf32>
      %123 = vector.extract_strided_slice %100 {offsets = [0, 256], sizes = [16, 128], strides = [1, 1]} : vector<16x384xf32> to vector<16x128xf32>
      %124 = vector.extract_strided_slice %106 {offsets = [0, 256], sizes = [16, 128], strides = [1, 1]} : vector<16x384xf32> to vector<16x128xf32>
      %125 = arith.mulf %114, %124 : vector<16x128xf32>
      %126 = arith.addf %123, %125 : vector<16x128xf32>
      %127 = math.tanh %126 : vector<16x128xf32>
      %cst_102 = arith.constant 1.000000e+00 : f32
      %128 = vector.broadcast %cst_102 : f32 to vector<16x128xf32>
      %129 = arith.subf %128, %122 : vector<16x128xf32>
      %130 = arith.mulf %129, %127 : vector<16x128xf32>
      %131 = arith.mulf %122, %arg23 : vector<16x128xf32>
      %132 = arith.addf %130, %131 : vector<16x128xf32>
      %c0_103 = arith.constant 0 : index
      %c0_104 = arith.constant 0 : index
      %c0_105 = arith.constant 0 : index
      %133 = vector.load %arg21[%c0_103, %c0_104, %c0_105] : memref<16x128x128xbf16, #tpu.memory_space<vmem>>, vector<16x128x128xbf16>
      %134 = arith.truncf %132 : vector<16x128xf32> to vector<16x128xbf16>
      %c0_106 = arith.constant 0 : index
      %c0_107 = arith.constant 0 : index
      %135 = vector.load %arg12[%c0_106, %c0_107] : memref<128x128xbf16, #tpu.memory_space<vmem>>, vector<128x128xbf16>
      %cst_108 = arith.constant dense<0.000000e+00> : vector<16x128xf32>
      %136 = tpu.matmul %134, %135, %cst_108 {dimension_numbers = #tpu.dot_dimension_numbers<[1], [0], [0], [1], [0, 0, 1, 1], [], []>} : vector<16x128xbf16>, vector<128x128xbf16>, vector<16x128xf32> -> vector<16x128xf32>
      %137 = arith.truncf %136 : vector<16x128xf32> to vector<16x128xbf16>
      %138 = vector.shape_cast %137 : vector<16x128xbf16> to vector<16x1x128xbf16>
      "tpu.trace_start"() <{level = 10 : i32, message = "bqh,bsh->bqs"}> : () -> ()
      %cst_109 = arith.constant dense<0.000000e+00> : vector<16x1x128xf32>
      %139 = tpu.matmul %138, %133, %cst_109 {dimension_numbers = #tpu.dot_dimension_numbers<[2], [2], [1], [1], [0, 0, 0, 1, 1, 1], [0], [0]>} : vector<16x1x128xbf16>, vector<16x128x128xbf16>, vector<16x1x128xf32> -> vector<16x1x128xf32>
      "tpu.trace_stop"() : () -> ()
      %140 = vector.broadcast %cst_81 : f32 to vector<16x1x128xf32>
      %141 = arith.select %82, %139, %140 : vector<16x1x128xi1>, vector<16x1x128xf32>
      %cst_110 = arith.constant dense<0xFF800000> : vector<16x1xf32>
      %142 = vector.multi_reduction <maximumf>, %141, %cst_110 [2] : vector<16x1x128xf32> to vector<16x1xf32>
      %143 = vector.shape_cast %142 : vector<16x1xf32> to vector<16x1x1xf32>
      %144 = vector.broadcast %143 : vector<16x1x1xf32> to vector<16x1x128xf32>
      %145 = arith.subf %141, %144 : vector<16x1x128xf32>
      %146 = math.exp %145 : vector<16x1x128xf32>
      %cst_111 = arith.constant dense<0.000000e+00> : vector<16x1xf32>
      %147 = vector.multi_reduction <add>, %146, %cst_111 [2] : vector<16x1x128xf32> to vector<16x1xf32>
      %148 = vector.shape_cast %147 : vector<16x1xf32> to vector<16x1x1xf32>
      %149 = vector.broadcast %148 : vector<16x1x1xf32> to vector<16x1x128xf32>
      %150 = arith.divf %146, %149 : vector<16x1x128xf32>
      %151 = arith.truncf %150 : vector<16x1x128xf32> to vector<16x1x128xbf16>
      "tpu.trace_start"() <{level = 10 : i32, message = "bqs,bsh->bqh"}> : () -> ()
      %cst_112 = arith.constant dense<0.000000e+00> : vector<16x1x128xf32>
      %152 = tpu.matmul %151, %133, %cst_112 {dimension_numbers = #tpu.dot_dimension_numbers<[2], [1], [1], [2], [0, 0, 0, 1, 1, 2], [0], [0]>} : vector<16x1x128xbf16>, vector<16x128x128xbf16>, vector<16x1x128xf32> -> vector<16x1x128xf32>
      "tpu.trace_stop"() : () -> ()
      %cst_113 = arith.constant dense<0.000000e+00> : vector<16x128xf32>
      %153 = vector.multi_reduction <add>, %152, %cst_113 [1] : vector<16x1x128xf32> to vector<16x128xf32>
      %154 = arith.truncf %132 : vector<16x128xf32> to vector<16x128xbf16>
      %c0_114 = arith.constant 0 : index
      %c0_115 = arith.constant 0 : index
      %155 = vector.load %arg13[%c0_114, %c0_115] : memref<128x128xbf16, #tpu.memory_space<vmem>>, vector<128x128xbf16>
      %cst_116 = arith.constant dense<0.000000e+00> : vector<16x128xf32>
      %156 = tpu.matmul %154, %155, %cst_116 {dimension_numbers = #tpu.dot_dimension_numbers<[1], [0], [0], [1], [0, 0, 1, 1], [], []>} : vector<16x128xbf16>, vector<128x128xbf16>, vector<16x128xf32> -> vector<16x128xf32>
      %157 = arith.truncf %153 : vector<16x128xf32> to vector<16x128xbf16>
      %c0_117 = arith.constant 0 : index
      %c0_118 = arith.constant 0 : index
      %158 = vector.load %arg14[%c0_117, %c0_118] : memref<128x128xbf16, #tpu.memory_space<vmem>>, vector<128x128xbf16>
      %cst_119 = arith.constant dense<0.000000e+00> : vector<16x128xf32>
      %159 = tpu.matmul %157, %158, %cst_119 {dimension_numbers = #tpu.dot_dimension_numbers<[1], [0], [0], [1], [0, 0, 1, 1], [], []>} : vector<16x128xbf16>, vector<128x128xbf16>, vector<16x128xf32> -> vector<16x128xf32>
      %160 = arith.addf %156, %159 : vector<16x128xf32>
      %c0_120 = arith.constant 0 : index
      %c0_121 = arith.constant 0 : index
      %161 = vector.load %arg15[%c0_120, %c0_121] : memref<1x128xf32, #tpu.memory_space<vmem>>, vector<1x128xf32>
      %162 = vector.broadcast %161 : vector<1x128xf32> to vector<16x128xf32>
      %163 = arith.addf %160, %162 : vector<16x128xf32>
      %cst_122 = arith.constant dense<0xFF800000> : vector<16xf32>
      %164 = vector.multi_reduction <maximumf>, %163, %cst_122 [1] : vector<16x128xf32> to vector<16xf32>
      %165 = vector.shape_cast %164 : vector<16xf32> to vector<16x1xf32>
      %166 = vector.broadcast %165 : vector<16x1xf32> to vector<16x128xf32>
      %167 = arith.cmpf oeq, %163, %166 : vector<16x128xf32>
      %c128_i32 = arith.constant 128 : i32
      %168 = vector.broadcast %c128_i32 : i32 to vector<16x128xi32>
      %169 = arith.select %167, %77, %168 : vector<16x128xi1>, vector<16x128xi32>
      %cst_123 = arith.constant dense<2147483647> : vector<16xi32>
      %170 = vector.multi_reduction <minsi>, %169, %cst_123 [1] : vector<16x128xi32> to vector<16xi32>
      %171 = vector.shape_cast %170 : vector<16xi32> to vector<16x1xi32>
      %cst_124 = arith.constant dense<0.000000e+00> : vector<16x128xf32>
      %172 = vector.multi_reduction <add>, %150, %cst_124 [1] : vector<16x1x128xf32> to vector<16x128xf32>
      %173 = arith.index_cast %arg22 : i32 to index
      %c0_125 = arith.constant 0 : index
      %c0_126 = arith.constant 0 : index
      %174 = vector.load %arg19[%173, %c0_125, %c0_126] : memref<5x16x128xf32, #tpu.memory_space<vmem>>, vector<1x16x128xf32>
      %175 = vector.shape_cast %174 : vector<1x16x128xf32> to vector<16x128xf32>
      %176 = vector.shape_cast %172 : vector<16x128xf32> to vector<1x16x128xf32>
      tpu.vector_store %arg19[%173, %c0_125, %c0_126], %176 {strides = array<i32>} : memref<5x16x128xf32, #tpu.memory_space<vmem>>, vector<1x16x128xf32>,
      %177 = vector.broadcast %arg22 : i32 to vector<16x128xi32>
      %178 = arith.cmpi eq, %78, %177 : vector<16x128xi32>
      %179 = vector.shape_cast %171 : vector<16x1xi32> to vector<16x1xi32>
      %180 = vector.broadcast %179 : vector<16x1xi32> to vector<16x128xi32>
      %181 = arith.select %178, %180, %arg25 : vector<16x128xi1>, vector<16x128xi32>
      scf.yield %132, %171, %181 : vector<16x128xf32>, vector<16x1xi32>, vector<16x128xi32>
    }
    %c5_i32_84 = arith.constant 5 : i32
    %c0_85 = arith.constant 0 : index
    %c0_86 = arith.constant 0 : index
    %87 = vector.load %arg18[%c0_85, %c0_86] : memref<16x128xi32, #tpu.memory_space<vmem>>, vector<16x128xi32>
    tpu.vector_store %arg18[%c0_85, %c0_86], %86#2 {strides = array<i32>} : memref<16x128xi32, #tpu.memory_space<vmem>>, vector<16x128xi32>,
    return
  }
  func.func @transform_0(%arg0: i32) -> (i32, i32) {
    %c0_i32 = arith.constant 0 : i32
    %c0_i32_0 = arith.constant 0 : i32
    return %arg0, %c0_i32 : i32, i32
  }
  func.func @transform_1(%arg0: i32) -> (i32, i32, i32) {
    %c0_i32 = arith.constant 0 : i32
    %c0_i32_0 = arith.constant 0 : i32
    %c0_i32_1 = arith.constant 0 : i32
    return %c0_i32, %arg0, %c0_i32_0 : i32, i32, i32
  }
  func.func @transform_2(%arg0: i32) -> (i32, i32) {
    %c0_i32 = arith.constant 0 : i32
    %c0_i32_0 = arith.constant 0 : i32
    %c0_i32_1 = arith.constant 0 : i32
    return %c0_i32, %c0_i32_0 : i32, i32
  }
  func.func @transform_3(%arg0: i32) -> (i32, i32) {
    %c0_i32 = arith.constant 0 : i32
    %c0_i32_0 = arith.constant 0 : i32
    %c0_i32_1 = arith.constant 0 : i32
    return %c0_i32, %c0_i32_0 : i32, i32
  }
  func.func @transform_4(%arg0: i32) -> (i32, i32) {
    %c0_i32 = arith.constant 0 : i32
    %c0_i32_0 = arith.constant 0 : i32
    %c0_i32_1 = arith.constant 0 : i32
    return %c0_i32, %c0_i32_0 : i32, i32
  }
  func.func @transform_5(%arg0: i32) -> (i32, i32) {
    %c0_i32 = arith.constant 0 : i32
    %c0_i32_0 = arith.constant 0 : i32
    %c0_i32_1 = arith.constant 0 : i32
    return %c0_i32, %c0_i32_0 : i32, i32
  }
  func.func @transform_6(%arg0: i32) -> (i32, i32) {
    %c0_i32 = arith.constant 0 : i32
    %c0_i32_0 = arith.constant 0 : i32
    %c0_i32_1 = arith.constant 0 : i32
    return %c0_i32, %c0_i32_0 : i32, i32
  }
  func.func @transform_7(%arg0: i32) -> (i32, i32) {
    %c0_i32 = arith.constant 0 : i32
    %c0_i32_0 = arith.constant 0 : i32
    %c0_i32_1 = arith.constant 0 : i32
    return %c0_i32, %c0_i32_0 : i32, i32
  }
  func.func @transform_8(%arg0: i32) -> (i32, i32) {
    %c0_i32 = arith.constant 0 : i32
    %c0_i32_0 = arith.constant 0 : i32
    %c0_i32_1 = arith.constant 0 : i32
    return %c0_i32, %c0_i32_0 : i32, i32
  }
  func.func @transform_9(%arg0: i32) -> (i32, i32) {
    %c0_i32 = arith.constant 0 : i32
    %c0_i32_0 = arith.constant 0 : i32
    %c0_i32_1 = arith.constant 0 : i32
    return %c0_i32, %c0_i32_0 : i32, i32
  }
  func.func @transform_10(%arg0: i32) -> (i32, i32) {
    %c0_i32 = arith.constant 0 : i32
    %c0_i32_0 = arith.constant 0 : i32
    %c0_i32_1 = arith.constant 0 : i32
    return %c0_i32, %c0_i32_0 : i32, i32
  }
  func.func @transform_11(%arg0: i32) -> (i32, i32) {
    %c0_i32 = arith.constant 0 : i32
    %c0_i32_0 = arith.constant 0 : i32
    %c0_i32_1 = arith.constant 0 : i32
    return %c0_i32, %c0_i32_0 : i32, i32
  }
  func.func @transform_12(%arg0: i32) -> (i32, i32) {
    %c0_i32 = arith.constant 0 : i32
    %c0_i32_0 = arith.constant 0 : i32
    %c0_i32_1 = arith.constant 0 : i32
    return %c0_i32, %c0_i32_0 : i32, i32
  }
  func.func @transform_13(%arg0: i32) -> (i32, i32) {
    %c0_i32 = arith.constant 0 : i32
    %c0_i32_0 = arith.constant 0 : i32
    %c0_i32_1 = arith.constant 0 : i32
    return %c0_i32, %c0_i32_0 : i32, i32
  }
  func.func @transform_14(%arg0: i32) -> (i32, i32) {
    %c0_i32 = arith.constant 0 : i32
    %c0_i32_0 = arith.constant 0 : i32
    %c0_i32_1 = arith.constant 0 : i32
    return %c0_i32, %c0_i32_0 : i32, i32
  }
  func.func @transform_15(%arg0: i32) -> (i32, i32, i32) {
    %c0_i32 = arith.constant 0 : i32
    %c0_i32_0 = arith.constant 0 : i32
    %c0_i32_1 = arith.constant 0 : i32
    return %c0_i32, %arg0, %c0_i32_0 : i32, i32, i32
  }
  func.func @transform_16(%arg0: i32) -> (i32, i32) {
    %c0_i32 = arith.constant 0 : i32
    %c0_i32_0 = arith.constant 0 : i32
    return %arg0, %c0_i32 : i32, i32
  }
  func.func @transform_17(%arg0: i32) -> (i32, i32) {
    %c0_i32 = arith.constant 0 : i32
    %c0_i32_0 = arith.constant 0 : i32
    return %arg0, %c0_i32 : i32, i32
  }
  func.func @transform_18(%arg0: i32) -> (i32, i32, i32) {
    %c0_i32 = arith.constant 0 : i32
    %c0_i32_0 = arith.constant 0 : i32
    %c0_i32_1 = arith.constant 0 : i32
    return %c0_i32, %arg0, %c0_i32_0 : i32, i32, i32
  }
}

</mosaic_0001>

<llo_original>
// kernel: seq2seq_forward.1
$region0: #{seq2seq_forward.1}
  #allocation0 [shape = 'u32[]', space=smem, size = 0x4, offset = 0x4, fixed_abs, tag = 'smem constant byte address 0x4 - core index']
  #allocation1 [shape = 'u32[72,128]{1,0:T(1,128)}', space=vmem, size = 0x9000, scoped, tag = 'internal scratch']
  #allocation2 [shape = 'bf16[12,16,384]{2,1,0:T(8,128)(2,1)}', space=vmem, size = 0x24000, scoped, tag = 'scratch operand']
  #allocation3 [shape = 'bf16[16,128,128]{2,1,0:T(8,128)(2,1)}', space=vmem, size = 0x80000, scoped, tag = 'scratch operand']
  %s0 = inlined_call_operand.vmem [shape: s32[16,1], index: 0, kind: input, shape index: {}]
  %s1 = inlined_call_operand.vmem [shape: bf16[12,16,128], index: 1, kind: input, shape index: {}]
  %s2 = inlined_call_operand.vmem [shape: bf16[128,128], index: 2, kind: input, shape index: {}]
  %s3 = inlined_call_operand.vmem [shape: bf16[128,384], index: 3, kind: input, shape index: {}]
  %s4 = inlined_call_operand.vmem [shape: bf16[128,384], index: 4, kind: input, shape index: {}]
  %s5 = inlined_call_operand.vmem [shape: f32[1,384], index: 5, kind: input, shape index: {}]
  %s6 = inlined_call_operand.vmem [shape: f32[1,384], index: 6, kind: input, shape index: {}]
  %s7 = inlined_call_operand.vmem [shape: bf16[128,384], index: 7, kind: input, shape index: {}]
  %s8 = inlined_call_operand.vmem [shape: bf16[128,384], index: 8, kind: input, shape index: {}]
  %s9 = inlined_call_operand.vmem [shape: f32[1,384], index: 9, kind: input, shape index: {}]
  %s10 = inlined_call_operand.vmem [shape: f32[1,384], index: 10, kind: input, shape index: {}]
  %s11 = inlined_call_operand.vmem [shape: bf16[128,128], index: 11, kind: input, shape index: {}]
  %s12 = inlined_call_operand.vmem [shape: bf16[128,128], index: 12, kind: input, shape index: {}]
  %s13 = inlined_call_operand.vmem [shape: bf16[128,128], index: 13, kind: input, shape index: {}]
  %s14 = inlined_call_operand.vmem [shape: f32[1,128], index: 14, kind: input, shape index: {}]
  %s15 = inlined_call_operand.vmem [shape: f32[12,16,128], index: 15, kind: output, shape index: {0}]
  %s16 = inlined_call_operand.vmem [shape: f32[16,128], index: 16, kind: output, shape index: {1}]
  %s17 = inlined_call_operand.vmem [shape: s32[16,128], index: 17, kind: output, shape index: {2}]
  %s18 = inlined_call_operand.vmem [shape: f32[5,16,128], index: 18, kind: output, shape index: {3}]
  %19 = xla_tuple %s15, %s16, %s17, %s18
  %s20 = sld [smem:[#allocation0]]
  $region108: #{seq2seq_forward.1} parent=0
    _
  %s22 = ssub.s32 1, %s20
  %s23 = scalar_select 0, %s22, %s20
  // Predicated region
  $region2: #{seq2seq_forward.1} parent=0 // pred_check
    _
  $region3: #{seq2seq_forward.1} parent=0 // pred_check_branch
    %25 = sbr.rel (0) target = $region5
  $region4: #{seq2seq_forward.1} parent=0 // pred_region
    _
  $region5: #{seq2seq_forward.1} parent=0 // pred_fallthru
    _
  // Predicated region
  $region6: #{seq2seq_forward.1} parent=0 // pred_check
    _
  $region7: #{seq2seq_forward.1} parent=0 // pred_check_branch
    %27 = sbr.rel (0) target = $region9
  $region8: #{seq2seq_forward.1} parent=0 // pred_region
    _
  $region9: #{seq2seq_forward.1} parent=0 // pred_fallthru
    _
  // Predicated region
  $region10: #{seq2seq_forward.1} parent=0 // pred_check
    _
  $region11: #{seq2seq_forward.1} parent=0 // pred_check_branch
    %29 = sbr.rel (0) target = $region13
  $region12: #{seq2seq_forward.1} parent=0 // pred_region
    _
  $region13: #{seq2seq_forward.1} parent=0 // pred_fallthru
    _
  // Predicated region
  $region14: #{seq2seq_forward.1} parent=0 // pred_check
    _
  $region15: #{seq2seq_forward.1} parent=0 // pred_check_branch
    %31 = sbr.rel (0) target = $region17
  $region16: #{seq2seq_forward.1} parent=0 // pred_region
    _
  $region17: #{seq2seq_forward.1} parent=0 // pred_fallthru
    _
  // Predicated region
  $region18: #{seq2seq_forward.1} parent=0 // pred_check
    _
  $region19: #{seq2seq_forward.1} parent=0 // pred_check_branch
    %33 = sbr.rel (0) target = $region21
  $region20: #{seq2seq_forward.1} parent=0 // pred_region
    _
  $region21: #{seq2seq_forward.1} parent=0 // pred_fallthru
    _
  // Predicated region
  $region22: #{seq2seq_forward.1} parent=0 // pred_check
    _
  $region23: #{seq2seq_forward.1} parent=0 // pred_check_branch
    %35 = sbr.rel (0) target = $region25
  $region24: #{seq2seq_forward.1} parent=0 // pred_region
    _
  $region25: #{seq2seq_forward.1} parent=0 // pred_fallthru
    _
  // Predicated region
  $region26: #{seq2seq_forward.1} parent=0 // pred_check
    _
  $region27: #{seq2seq_forward.1} parent=0 // pred_check_branch
    %37 = sbr.rel (0) target = $region29
  $region28: #{seq2seq_forward.1} parent=0 // pred_region
    _
  $region29: #{seq2seq_forward.1} parent=0 // pred_fallthru
    _
  // Predicated region
  $region30: #{seq2seq_forward.1} parent=0 // pred_check
    _
  $region31: #{seq2seq_forward.1} parent=0 // pred_check_branch
    %39 = sbr.rel (0) target = $region33
  $region32: #{seq2seq_forward.1} parent=0 // pred_region
    _
  $region33: #{seq2seq_forward.1} parent=0 // pred_fallthru
    _
  // Predicated region
  $region34: #{seq2seq_forward.1} parent=0 // pred_check
    _
  $region35: #{seq2seq_forward.1} parent=0 // pred_check_branch
    %41 = sbr.rel (0) target = $region37
  $region36: #{seq2seq_forward.1} parent=0 // pred_region
    _
  $region37: #{seq2seq_forward.1} parent=0 // pred_fallthru
    _
  // Predicated region
  $region38: #{seq2seq_forward.1} parent=0 // pred_check
    _
  $region39: #{seq2seq_forward.1} parent=0 // pred_check_branch
    %43 = sbr.rel (0) target = $region41
  $region40: #{seq2seq_forward.1} parent=0 // pred_region
    _
  $region41: #{seq2seq_forward.1} parent=0 // pred_fallthru
    _
  // Predicated region
  $region42: #{seq2seq_forward.1} parent=0 // pred_check
    _
  $region43: #{seq2seq_forward.1} parent=0 // pred_check_branch
    %45 = sbr.rel (0) target = $region45
  $region44: #{seq2seq_forward.1} parent=0 // pred_region
    _
  $region45: #{seq2seq_forward.1} parent=0 // pred_fallthru
    _
  // Predicated region
  $region46: #{seq2seq_forward.1} parent=0 // pred_check
    _
  $region47: #{seq2seq_forward.1} parent=0 // pred_check_branch
    %47 = sbr.rel (0) target = $region49
  $region48: #{seq2seq_forward.1} parent=0 // pred_region
    _
  $region49: #{seq2seq_forward.1} parent=0 // pred_fallthru
    _
  // Predicated region
  $region50: #{seq2seq_forward.1} parent=0 // pred_check
    _
  $region51: #{seq2seq_forward.1} parent=0 // pred_check_branch
    %49 = sbr.rel (0) target = $region53
  $region52: #{seq2seq_forward.1} parent=0 // pred_region
    _
  $region53: #{seq2seq_forward.1} parent=0 // pred_fallthru
    _
  // Predicated region
  $region54: #{seq2seq_forward.1} parent=0 // pred_check
    _
  $region55: #{seq2seq_forward.1} parent=0 // pred_check_branch
    %51 = sbr.rel (0) target = $region57
  $region56: #{seq2seq_forward.1} parent=0 // pred_region
    _
  $region57: #{seq2seq_forward.1} parent=0 // pred_fallthru
    _
  // Predicated region
  $region58: #{seq2seq_forward.1} parent=0 // pred_check
    _
  $region59: #{seq2seq_forward.1} parent=0 // pred_check_branch
    %53 = sbr.rel (0) target = $region61
  $region60: #{seq2seq_forward.1} parent=0 // pred_region
    _
  $region61: #{seq2seq_forward.1} parent=0 // pred_fallthru
    _
  %v55 = vld [vmem:[%s0] sm:$0xff]
  %v56 = vld [vmem:[%s0 + $0x8] sm:$0xff]
  %v57 = vld [vmem:[%s1] sm:$0xf]
  %v58 = vld [vmem:[%s1 + $0x4] sm:$0xf]
  %v59 = vld [vmem:[%s1 + $0x8] sm:$0xf]
  %v60 = vld [vmem:[%s1 + $0xc] sm:$0xf]
  %v61 = vld [vmem:[%s1 + $0x10] sm:$0xf]
  %v62 = vld [vmem:[%s1 + $0x14] sm:$0xf]
  %v63 = vld [vmem:[%s1 + $0x18] sm:$0xf]
  %v64 = vld [vmem:[%s1 + $0x1c] sm:$0xf]
  %v65 = vld [vmem:[%s1 + $0x20] sm:$0xf]
  %v66 = vld [vmem:[%s1 + $0x24] sm:$0xf]
  %v67 = vld [vmem:[%s1 + $0x28] sm:$0xf]
  %v68 = vld [vmem:[%s1 + $0x2c] sm:$0xf]
  %v69 = vld [vmem:[%s1 + $0x30] sm:$0xf]
  %v70 = vld [vmem:[%s1 + $0x34] sm:$0xf]
  %v71 = vld [vmem:[%s1 + $0x38] sm:$0xf]
  %v72 = vld [vmem:[%s1 + $0x3c] sm:$0xf]
  %v73 = vld [vmem:[%s1 + $0x40] sm:$0xf]
  %v74 = vld [vmem:[%s1 + $0x44] sm:$0xf]
  %v75 = vld [vmem:[%s1 + $0x48] sm:$0xf]
  %v76 = vld [vmem:[%s1 + $0x4c] sm:$0xf]
  %v77 = vld [vmem:[%s1 + $0x50] sm:$0xf]
  %v78 = vld [vmem:[%s1 + $0x54] sm:$0xf]
  %v79 = vld [vmem:[%s1 + $0x58] sm:$0xf]
  %v80 = vld [vmem:[%s1 + $0x5c] sm:$0xf]
  %v81 = vld [vmem:[%s3] sm:$0xff]
  %v82 = vld [vmem:[%s3 + $0x8] sm:$0xf]
  %v83 = vld [vmem:[%s3 + $0xc] sm:$0xff]
  %v84 = vld [vmem:[%s3 + $0x14] sm:$0xf]
  %v85 = vld [vmem:[%s3 + $0x18] sm:$0xff]
  %v86 = vld [vmem:[%s3 + $0x20] sm:$0xf]
  %v87 = vld [vmem:[%s3 + $0x24] sm:$0xff]
  %v88 = vld [vmem:[%s3 + $0x2c] sm:$0xf]
  %v89 = vld [vmem:[%s3 + $0x30] sm:$0xff]
  %v90 = vld [vmem:[%s3 + $0x38] sm:$0xf]
  %v91 = vld [vmem:[%s3 + $0x3c] sm:$0xff]
  %v92 = vld [vmem:[%s3 + $0x44] sm:$0xf]
  %v93 = vld [vmem:[%s3 + $0x48] sm:$0xff]
  %v94 = vld [vmem:[%s3 + $0x50] sm:$0xf]
  %v95 = vld [vmem:[%s3 + $0x54] sm:$0xff]
  %v96 = vld [vmem:[%s3 + $0x5c] sm:$0xf]
  %v97 = vld [vmem:[%s3 + $0x60] sm:$0xff]
  %v98 = vld [vmem:[%s3 + $0x68] sm:$0xf]
  %v99 = vld [vmem:[%s3 + $0x6c] sm:$0xff]
  %v100 = vld [vmem:[%s3 + $0x74] sm:$0xf]
  %v101 = vld [vmem:[%s3 + $0x78] sm:$0xff]
  %v102 = vld [vmem:[%s3 + $0x80] sm:$0xf]
  %v103 = vld [vmem:[%s3 + $0x84] sm:$0xff]
  %v104 = vld [vmem:[%s3 + $0x8c] sm:$0xf]
  %v105 = vld [vmem:[%s3 + $0x90] sm:$0xff]
  %v106 = vld [vmem:[%s3 + $0x98] sm:$0xf]
  %v107 = vld [vmem:[%s3 + $0x9c] sm:$0xff]
  %v108 = vld [vmem:[%s3 + $0xa4] sm:$0xf]
  %v109 = vld [vmem:[%s3 + $0xa8] sm:$0xff]
  %v110 = vld [vmem:[%s3 + $0xb0] sm:$0xf]
  %v111 = vld [vmem:[%s3 + $0xb4] sm:$0xff]
  %v112 = vld [vmem:[%s3 + $0xbc] sm:$0xf]
  %v113 = vld [vmem:[%s5] sm:$0x7]
  %v115 = vperm.slane %v113, 0
  %v116 = vperm.slane %v113, 1
  %v117 = vperm.slane %v113, 2
  %v145 = vunpack.c.l.b16 %v57
  %v146 = vunpack.c.l.b16 %v58
  %v147 = vunpack.c.l.b16 %v59
  %v148 = vunpack.c.l.b16 %v60
  %v149 = vunpack.c.l.b16 %v61
  %v150 = vunpack.c.l.b16 %v62
  %v151 = vunpack.c.l.b16 %v63
  %v152 = vunpack.c.l.b16 %v64
  %v153 = vunpack.c.l.b16 %v65
  %v154 = vunpack.c.l.b16 %v66
  %v155 = vunpack.c.l.b16 %v67
  %v156 = vunpack.c.l.b16 %v68
  %v157 = vunpack.c.l.b16 %v69
  %v158 = vunpack.c.l.b16 %v70
  %v159 = vunpack.c.l.b16 %v71
  %v160 = vunpack.c.l.b16 %v72
  %v161 = vunpack.c.l.b16 %v73
  %v162 = vunpack.c.l.b16 %v74
  %v163 = vunpack.c.l.b16 %v75
  %v164 = vunpack.c.l.b16 %v76
  %v165 = vunpack.c.l.b16 %v77
  %v166 = vunpack.c.l.b16 %v78
  %v167 = vunpack.c.l.b16 %v79
  %v168 = vunpack.c.l.b16 %v80
  %v169 = vpack.c.b16 %v146, %v145
  %v170 = vpack.c.b16 %v148, %v147
  %v171 = vpack.c.b16 %v150, %v149
  %v172 = vpack.c.b16 %v152, %v151
  %v173 = vpack.c.b16 %v154, %v153
  %v174 = vpack.c.b16 %v156, %v155
  %v175 = vpack.c.b16 %v158, %v157
  %v176 = vpack.c.b16 %v160, %v159
  %v177 = vpack.c.b16 %v162, %v161
  %v178 = vpack.c.b16 %v164, %v163
  %v179 = vpack.c.b16 %v166, %v165
  %v180 = vpack.c.b16 %v168, %v167
  %v225 = vunpack.c.l.b16 %v81
  %v226 = vunpack.c.h.b16 %v81
  %v227 = vunpack.c.l.b16 %v82
  %v228 = vunpack.c.l.b16 %v83
  %v229 = vunpack.c.h.b16 %v83
  %v230 = vunpack.c.l.b16 %v84
  %v231 = vunpack.c.l.b16 %v85
  %v232 = vunpack.c.h.b16 %v85
  %v233 = vunpack.c.l.b16 %v86
  %v234 = vunpack.c.l.b16 %v87
  %v235 = vunpack.c.h.b16 %v87
  %v236 = vunpack.c.l.b16 %v88
  %v237 = vunpack.c.l.b16 %v89
  %v238 = vunpack.c.h.b16 %v89
  %v239 = vunpack.c.l.b16 %v90
  %v240 = vunpack.c.l.b16 %v91
  %v241 = vunpack.c.h.b16 %v91
  %v242 = vunpack.c.l.b16 %v92
  %v243 = vunpack.c.l.b16 %v93
  %v244 = vunpack.c.h.b16 %v93
  %v245 = vunpack.c.l.b16 %v94
  %v246 = vunpack.c.l.b16 %v95
  %v247 = vunpack.c.h.b16 %v95
  %v248 = vunpack.c.l.b16 %v96
  %v249 = vunpack.c.l.b16 %v97
  %v250 = vunpack.c.h.b16 %v97
  %v251 = vunpack.c.l.b16 %v98
  %v252 = vunpack.c.l.b16 %v99
  %v253 = vunpack.c.h.b16 %v99
  %v254 = vunpack.c.l.b16 %v100
  %v255 = vunpack.c.l.b16 %v101
  %v256 = vunpack.c.h.b16 %v101
  %v257 = vunpack.c.l.b16 %v102
  %v258 = vunpack.c.l.b16 %v103
  %v259 = vunpack.c.h.b16 %v103
  %v260 = vunpack.c.l.b16 %v104
  %v261 = vunpack.c.l.b16 %v105
  %v262 = vunpack.c.h.b16 %v105
  %v263 = vunpack.c.l.b16 %v106
  %v264 = vunpack.c.l.b16 %v107
  %v265 = vunpack.c.h.b16 %v107
  %v266 = vunpack.c.l.b16 %v108
  %v267 = vunpack.c.l.b16 %v109
  %v268 = vunpack.c.h.b16 %v109
  %v269 = vunpack.c.l.b16 %v110
  %v270 = vunpack.c.l.b16 %v111
  %v271 = vunpack.c.h.b16 %v111
  %v272 = vunpack.c.l.b16 %v112
  %v273 = vpack.c.b16 %v228, %v225
  %v274 = vpack.c.b16 %v229, %v226
  %v275 = vpack.c.b16 %v230, %v227
  %v276 = vpack.c.b16 %v234, %v231
  %v277 = vpack.c.b16 %v235, %v232
  %v278 = vpack.c.b16 %v236, %v233
  %v279 = vpack.c.b16 %v240, %v237
  %v280 = vpack.c.b16 %v241, %v238
  %v281 = vpack.c.b16 %v242, %v239
  %v282 = vpack.c.b16 %v246, %v243
  %v283 = vpack.c.b16 %v247, %v244
  %v284 = vpack.c.b16 %v248, %v245
  %v285 = vpack.c.b16 %v252, %v249
  %v286 = vpack.c.b16 %v253, %v250
  %v287 = vpack.c.b16 %v254, %v251
  %v288 = vpack.c.b16 %v258, %v255
  %v289 = vpack.c.b16 %v259, %v256
  %v290 = vpack.c.b16 %v260, %v257
  %v291 = vpack.c.b16 %v264, %v261
  %v292 = vpack.c.b16 %v265, %v262
  %v293 = vpack.c.b16 %v266, %v263
  %v294 = vpack.c.b16 %v270, %v267
  %v295 = vpack.c.b16 %v271, %v268
  %v296 = vpack.c.b16 %v272, %v269
  %321 = vmatpush.bf16.msra.mxu0 %v294
  %322 = vmatpush.bf16.msra.mxu0 %v291
  %323 = vmatpush.bf16.msra.mxu0 %v288
  %324 = vmatpush.bf16.msra.mxu0 %v285
  %325 = vmatpush.bf16.msra.mxu0 %v282
  %326 = vmatpush.bf16.msra.mxu0 %v279
  %327 = vmatpush.bf16.msra.mxu0 %v276
  %328 = vmatpush.bf16.msra.mxu0 %v273
  %329 = vmatmul.bf16.gmra.mxu0 %v169
  %v330 = vpop.f32.mrf.mxu0
  %v331 = vadd.f32 %v115, %v330
  %v332 = vpop.f32.mrf.mxu0
  %v333 = vadd.f32 %v115, %v332
  %334 = vmatmul.bf16.gmra.mxu0 %v170
  %v335 = vpop.f32.mrf.mxu0
  %v336 = vadd.f32 %v115, %v335
  %v337 = vpop.f32.mrf.mxu0
  %v338 = vadd.f32 %v115, %v337
  %339 = vmatmul.bf16.gmra.mxu0 %v171
  %v340 = vpop.f32.mrf.mxu0
  %v341 = vadd.f32 %v115, %v340
  %v342 = vpop.f32.mrf.mxu0
  %v343 = vadd.f32 %v115, %v342
  %344 = vmatmul.bf16.gmra.mxu0 %v172
  %v345 = vpop.f32.mrf.mxu0
  %v346 = vadd.f32 %v115, %v345
  %v347 = vpop.f32.mrf.mxu0
  %v348 = vadd.f32 %v115, %v347
  %349 = vmatmul.bf16.gmra.mxu0 %v173
  %v350 = vpop.f32.mrf.mxu0
  %v351 = vadd.f32 %v115, %v350
  %v352 = vpop.f32.mrf.mxu0
  %v353 = vadd.f32 %v115, %v352
  %354 = vmatmul.bf16.gmra.mxu0 %v174
  %v355 = vpop.f32.mrf.mxu0
  %v356 = vadd.f32 %v115, %v355
  %v357 = vpop.f32.mrf.mxu0
  %v358 = vadd.f32 %v115, %v357
  %359 = vmatmul.bf16.gmra.mxu0 %v175
  %v360 = vpop.f32.mrf.mxu0
  %v361 = vadd.f32 %v115, %v360
  %v362 = vpop.f32.mrf.mxu0
  %v363 = vadd.f32 %v115, %v362
  %364 = vmatmul.bf16.gmra.mxu0 %v176
  %v365 = vpop.f32.mrf.mxu0
  %v366 = vadd.f32 %v115, %v365
  %v367 = vpop.f32.mrf.mxu0
  %v368 = vadd.f32 %v115, %v367
  %369 = vmatmul.bf16.gmra.mxu0 %v177
  %v370 = vpop.f32.mrf.mxu0
  %v371 = vadd.f32 %v115, %v370
  %v372 = vpop.f32.mrf.mxu0
  %v373 = vadd.f32 %v115, %v372
  %374 = vmatmul.bf16.gmra.mxu0 %v178
  %v375 = vpop.f32.mrf.mxu0
  %v376 = vadd.f32 %v115, %v375
  %v377 = vpop.f32.mrf.mxu0
  %v378 = vadd.f32 %v115, %v377
  %379 = vmatmul.bf16.gmra.mxu0 %v179
  %v380 = vpop.f32.mrf.mxu0
  %v381 = vadd.f32 %v115, %v380
  %v382 = vpop.f32.mrf.mxu0
  %v383 = vadd.f32 %v115, %v382
  %384 = vmatmul.bf16.gmra.mxu0 %v180
  %v385 = vpop.f32.mrf.mxu0
  %v386 = vadd.f32 %v115, %v385
  %v387 = vpop.f32.mrf.mxu0
  %v388 = vadd.f32 %v115, %v387
  %389 = vdwg.mxu0
  %390 = vmatpush.bf16.msra.mxu0 %v295
  %391 = vmatpush.bf16.msra.mxu0 %v292
  %392 = vmatpush.bf16.msra.mxu0 %v289
  %393 = vmatpush.bf16.msra.mxu0 %v286
  %394 = vmatpush.bf16.msra.mxu0 %v283
  %395 = vmatpush.bf16.msra.mxu0 %v280
  %396 = vmatpush.bf16.msra.mxu0 %v277
  %397 = vmatpush.bf16.msra.mxu0 %v274
  %398 = vmatmul.bf16.gmra.mxu0 %v169
  %v399 = vpop.f32.mrf.mxu0
  %v400 = vadd.f32 %v116, %v399
  %v401 = vpop.f32.mrf.mxu0
  %v402 = vadd.f32 %v116, %v401
  %403 = vmatmul.bf16.gmra.mxu0 %v170
  %v404 = vpop.f32.mrf.mxu0
  %v405 = vadd.f32 %v116, %v404
  %v406 = vpop.f32.mrf.mxu0
  %v407 = vadd.f32 %v116, %v406
  %408 = vmatmul.bf16.gmra.mxu0 %v171
  %v409 = vpop.f32.mrf.mxu0
  %v410 = vadd.f32 %v116, %v409
  %v411 = vpop.f32.mrf.mxu0
  %v412 = vadd.f32 %v116, %v411
  %413 = vmatmul.bf16.gmra.mxu0 %v172
  %v414 = vpop.f32.mrf.mxu0
  %v415 = vadd.f32 %v116, %v414
  %v416 = vpop.f32.mrf.mxu0
  %v417 = vadd.f32 %v116, %v416
  %418 = vmatmul.bf16.gmra.mxu0 %v173
  %v419 = vpop.f32.mrf.mxu0
  %v420 = vadd.f32 %v116, %v419
  %v421 = vpop.f32.mrf.mxu0
  %v422 = vadd.f32 %v116, %v421
  %423 = vmatmul.bf16.gmra.mxu0 %v174
  %v424 = vpop.f32.mrf.mxu0
  %v425 = vadd.f32 %v116, %v424
  %v426 = vpop.f32.mrf.mxu0
  %v427 = vadd.f32 %v116, %v426
  %428 = vmatmul.bf16.gmra.mxu0 %v175
  %v429 = vpop.f32.mrf.mxu0
  %v430 = vadd.f32 %v116, %v429
  %v431 = vpop.f32.mrf.mxu0
  %v432 = vadd.f32 %v116, %v431
  %433 = vmatmul.bf16.gmra.mxu0 %v176
  %v434 = vpop.f32.mrf.mxu0
  %v435 = vadd.f32 %v116, %v434
  %v436 = vpop.f32.mrf.mxu0
  %v437 = vadd.f32 %v116, %v436
  %438 = vmatmul.bf16.gmra.mxu0 %v177
  %v439 = vpop.f32.mrf.mxu0
  %v440 = vadd.f32 %v116, %v439
  %v441 = vpop.f32.mrf.mxu0
  %v442 = vadd.f32 %v116, %v441
  %443 = vmatmul.bf16.gmra.mxu0 %v178
  %v444 = vpop.f32.mrf.mxu0
  %v445 = vadd.f32 %v116, %v444
  %v446 = vpop.f32.mrf.mxu0
  %v447 = vadd.f32 %v116, %v446
  %448 = vmatmul.bf16.gmra.mxu0 %v179
  %v449 = vpop.f32.mrf.mxu0
  %v450 = vadd.f32 %v116, %v449
  %v451 = vpop.f32.mrf.mxu0
  %v452 = vadd.f32 %v116, %v451
  %453 = vmatmul.bf16.gmra.mxu0 %v180
  %v454 = vpop.f32.mrf.mxu0
  %v455 = vadd.f32 %v116, %v454
  %v456 = vpop.f32.mrf.mxu0
  %v457 = vadd.f32 %v116, %v456
  %458 = vdwg.mxu0
  %459 = vmatpush.bf16.msra.mxu0 %v296
  %460 = vmatpush.bf16.msra.mxu0 %v293
  %461 = vmatpush.bf16.msra.mxu0 %v290
  %462 = vmatpush.bf16.msra.mxu0 %v287
  %463 = vmatpush.bf16.msra.mxu0 %v284
  %464 = vmatpush.bf16.msra.mxu0 %v281
  %465 = vmatpush.bf16.msra.mxu0 %v278
  %466 = vmatpush.bf16.msra.mxu0 %v275
  %467 = vmatmul.bf16.gmra.mxu0 %v169
  %v468 = vpop.f32.mrf.mxu0
  %v469 = vadd.f32 %v117, %v468
  %v470 = vpop.f32.mrf.mxu0
  %v471 = vadd.f32 %v117, %v470
  %472 = vmatmul.bf16.gmra.mxu0 %v170
  %v473 = vpop.f32.mrf.mxu0
  %v474 = vadd.f32 %v117, %v473
  %v475 = vpop.f32.mrf.mxu0
  %v476 = vadd.f32 %v117, %v475
  %477 = vmatmul.bf16.gmra.mxu0 %v171
  %v478 = vpop.f32.mrf.mxu0
  %v479 = vadd.f32 %v117, %v478
  %v480 = vpop.f32.mrf.mxu0
  %v481 = vadd.f32 %v117, %v480
  %482 = vmatmul.bf16.gmra.mxu0 %v172
  %v483 = vpop.f32.mrf.mxu0
  %v484 = vadd.f32 %v117, %v483
  %v485 = vpop.f32.mrf.mxu0
  %v486 = vadd.f32 %v117, %v485
  %487 = vmatmul.bf16.gmra.mxu0 %v173
  %v488 = vpop.f32.mrf.mxu0
  %v489 = vadd.f32 %v117, %v488
  %v490 = vpop.f32.mrf.mxu0
  %v491 = vadd.f32 %v117, %v490
  %492 = vmatmul.bf16.gmra.mxu0 %v174
  %v493 = vpop.f32.mrf.mxu0
  %v494 = vadd.f32 %v117, %v493
  %v495 = vpop.f32.mrf.mxu0
  %v496 = vadd.f32 %v117, %v495
  %497 = vmatmul.bf16.gmra.mxu0 %v175
  %v498 = vpop.f32.mrf.mxu0
  %v499 = vadd.f32 %v117, %v498
  %v500 = vpop.f32.mrf.mxu0
  %v501 = vadd.f32 %v117, %v500
  %502 = vmatmul.bf16.gmra.mxu0 %v176
  %v503 = vpop.f32.mrf.mxu0
  %v504 = vadd.f32 %v117, %v503
  %v505 = vpop.f32.mrf.mxu0
  %v506 = vadd.f32 %v117, %v505
  %507 = vmatmul.bf16.gmra.mxu0 %v177
  %v508 = vpop.f32.mrf.mxu0
  %v509 = vadd.f32 %v117, %v508
  %v510 = vpop.f32.mrf.mxu0
  %v511 = vadd.f32 %v117, %v510
  %512 = vmatmul.bf16.gmra.mxu0 %v178
  %v513 = vpop.f32.mrf.mxu0
  %v514 = vadd.f32 %v117, %v513
  %v515 = vpop.f32.mrf.mxu0
  %v516 = vadd.f32 %v117, %v515
  %517 = vmatmul.bf16.gmra.mxu0 %v179
  %v518 = vpop.f32.mrf.mxu0
  %v519 = vadd.f32 %v117, %v518
  %v520 = vpop.f32.mrf.mxu0
  %v521 = vadd.f32 %v117, %v520
  %522 = vmatmul.bf16.gmra.mxu0 %v180
  %v523 = vpop.f32.mrf.mxu0
  %v524 = vadd.f32 %v117, %v523
  %v525 = vpop.f32.mrf.mxu0
  %v526 = vadd.f32 %v117, %v525
  %527 = vdwg.mxu0
  %v528 = vpack.c.bf16 %v400, %v331
  %v529 = vpack.c.bf16 %v469, %v469
  %v530 = vpack.c.bf16 %v402, %v333
  %v531 = vpack.c.bf16 %v471, %v471
  %v532 = vpack.c.bf16 %v405, %v336
  %v533 = vpack.c.bf16 %v474, %v474
  %v534 = vpack.c.bf16 %v407, %v338
  %v535 = vpack.c.bf16 %v476, %v476
  %v536 = vpack.c.bf16 %v410, %v341
  %v537 = vpack.c.bf16 %v479, %v479
  %v538 = vpack.c.bf16 %v412, %v343
  %v539 = vpack.c.bf16 %v481, %v481
  %v540 = vpack.c.bf16 %v415, %v346
  %v541 = vpack.c.bf16 %v484, %v484
  %v542 = vpack.c.bf16 %v417, %v348
  %v543 = vpack.c.bf16 %v486, %v486
  %v544 = vpack.c.bf16 %v420, %v351
  %v545 = vpack.c.bf16 %v489, %v489
  %v546 = vpack.c.bf16 %v422, %v353
  %v547 = vpack.c.bf16 %v491, %v491
  %v548 = vpack.c.bf16 %v425, %v356
  %v549 = vpack.c.bf16 %v494, %v494
  %v550 = vpack.c.bf16 %v427, %v358
  %v551 = vpack.c.bf16 %v496, %v496
  %v552 = vpack.c.bf16 %v430, %v361
  %v553 = vpack.c.bf16 %v499, %v499
  %v554 = vpack.c.bf16 %v432, %v363
  %v555 = vpack.c.bf16 %v501, %v501
  %v556 = vpack.c.bf16 %v435, %v366
  %v557 = vpack.c.bf16 %v504, %v504
  %v558 = vpack.c.bf16 %v437, %v368
  %v559 = vpack.c.bf16 %v506, %v506
  %v560 = vpack.c.bf16 %v440, %v371
  %v561 = vpack.c.bf16 %v509, %v509
  %v562 = vpack.c.bf16 %v442, %v373
  %v563 = vpack.c.bf16 %v511, %v511
  %v564 = vpack.c.bf16 %v445, %v376
  %v565 = vpack.c.bf16 %v514, %v514
  %v566 = vpack.c.bf16 %v447, %v378
  %v567 = vpack.c.bf16 %v516, %v516
  %v568 = vpack.c.bf16 %v450, %v381
  %v569 = vpack.c.bf16 %v519, %v519
  %v570 = vpack.c.bf16 %v452, %v383
  %v571 = vpack.c.bf16 %v521, %v521
  %v572 = vpack.c.bf16 %v455, %v386
  %v573 = vpack.c.bf16 %v524, %v524
  %v574 = vpack.c.bf16 %v457, %v388
  %v575 = vpack.c.bf16 %v526, %v526
  %576 = vst [vmem:[#allocation2] sm:$0xff] %v528
  %577 = vst [vmem:[#allocation2 + $0x8] sm:$0xf] %v529
  %578 = vst [vmem:[#allocation2 + $0xc] sm:$0xff] %v530
  %579 = vst [vmem:[#allocation2 + $0x14] sm:$0xf] %v531
  %580 = vst [vmem:[#allocation2 + $0x18] sm:$0xff] %v532
  %581 = vst [vmem:[#allocation2 + $0x20] sm:$0xf] %v533
  %582 = vst [vmem:[#allocation2 + $0x24] sm:$0xff] %v534
  %583 = vst [vmem:[#allocation2 + $0x2c] sm:$0xf] %v535
  %584 = vst [vmem:[#allocation2 + $0x30] sm:$0xff] %v536
  %585 = vst [vmem:[#allocation2 + $0x38] sm:$0xf] %v537
  %586 = vst [vmem:[#allocation2 + $0x3c] sm:$0xff] %v538
  %587 = vst [vmem:[#allocation2 + $0x44] sm:$0xf] %v539
  %588 = vst [vmem:[#allocation2 + $0x48] sm:$0xff] %v540
  %589 = vst [vmem:[#allocation2 + $0x50] sm:$0xf] %v541
  %590 = vst [vmem:[#allocation2 + $0x54] sm:$0xff] %v542
  %591 = vst [vmem:[#allocation2 + $0x5c] sm:$0xf] %v543
  %592 = vst [vmem:[#allocation2 + $0x60] sm:$0xff] %v544
  %593 = vst [vmem:[#allocation2 + $0x68] sm:$0xf] %v545
  %594 = vst [vmem:[#allocation2 + $0x6c] sm:$0xff] %v546
  %595 = vst [vmem:[#allocation2 + $0x74] sm:$0xf] %v547
  %596 = vst [vmem:[#allocation2 + $0x78] sm:$0xff] %v548
  %597 = vst [vmem:[#allocation2 + $0x80] sm:$0xf] %v549
  %598 = vst [vmem:[#allocation2 + $0x84] sm:$0xff] %v550
  %599 = vst [vmem:[#allocation2 + $0x8c] sm:$0xf] %v551
  %600 = vst [vmem:[#allocation2 + $0x90] sm:$0xff] %v552
  %601 = vst [vmem:[#allocation2 + $0x98] sm:$0xf] %v553
  %602 = vst [vmem:[#allocation2 + $0x9c] sm:$0xff] %v554
  %603 = vst [vmem:[#allocation2 + $0xa4] sm:$0xf] %v555
  %604 = vst [vmem:[#allocation2 + $0xa8] sm:$0xff] %v556
  %605 = vst [vmem:[#allocation2 + $0xb0] sm:$0xf] %v557
  %606 = vst [vmem:[#allocation2 + $0xb4] sm:$0xff] %v558
  %607 = vst [vmem:[#allocation2 + $0xbc] sm:$0xf] %v559
  %608 = vst [vmem:[#allocation2 + $0xc0] sm:$0xff] %v560
  %609 = vst [vmem:[#allocation2 + $0xc8] sm:$0xf] %v561
  %610 = vst [vmem:[#allocation2 + $0xcc] sm:$0xff] %v562
  %611 = vst [vmem:[#allocation2 + $0xd4] sm:$0xf] %v563
  %612 = vst [vmem:[#allocation2 + $0xd8] sm:$0xff] %v564
  %613 = vst [vmem:[#allocation2 + $0xe0] sm:$0xf] %v565
  %614 = vst [vmem:[#allocation2 + $0xe4] sm:$0xff] %v566
  %615 = vst [vmem:[#allocation2 + $0xec] sm:$0xf] %v567
  %616 = vst [vmem:[#allocation2 + $0xf0] sm:$0xff] %v568
  %617 = vst [vmem:[#allocation2 + $0xf8] sm:$0xf] %v569
  %618 = vst [vmem:[#allocation2 + $0xfc] sm:$0xff] %v570
  %619 = vst [vmem:[#allocation2 + $0x104] sm:$0xf] %v571
  %620 = vst [vmem:[#allocation2 + $0x108] sm:$0xff] %v572
  %621 = vst [vmem:[#allocation2 + $0x110] sm:$0xf] %v573
  %622 = vst [vmem:[#allocation2 + $0x114] sm:$0xff] %v574
  %623 = vst [vmem:[#allocation2 + $0x11c] sm:$0xf] %v575
  loop: start=0, step=1, limit=12
  $region62: #{seq2seq_forward.1} parent=0 // loop_pre_header
    _
  $region63: #{seq2seq_forward.1} parent=0 // loop_header
    %s625 = sphi 0, %s629
    %p626 = scmp.ge.s32.totalorder %s625, 12
    %v630 = vphi 0.0, %v969
    %v631 = vphi 0.0, %v970
  $region64: #{seq2seq_forward.1} parent=0 // loop_header_branch
    %628 = sbr.rel (%p626) target = $region68
  $region65: #{seq2seq_forward.1} parent=0 // loop_body
    %s632 = smul.u32 %s625, 6
    %s633 = smul.addr %s632, 4
    %s634 = scalar_lea.vmem [#allocation2], %s633
    %v635 = vld [vmem:[%s634] sm:$0xff]
    %v636 = vld [vmem:[%s634 + $0x8] sm:$0xf]
    %v637 = vld [vmem:[%s634 + $0xc] sm:$0xff]
    %v638 = vld [vmem:[%s634 + $0x14] sm:$0xf]
    %v639 = vunpack.c.l.bf16 %v635
    %v640 = vunpack.c.h.bf16 %v635
    %v641 = vunpack.c.l.bf16 %v636
    %v642 = vunpack.c.l.bf16 %v637
    %v643 = vunpack.c.h.bf16 %v637
    %v644 = vunpack.c.l.bf16 %v638
    %v645 = vpack.c.bf16 %v631, %v630
    %v646 = vld [vmem:[%s4] sm:$0xff]
    %v647 = vld [vmem:[%s4 + $0x8] sm:$0xf]
    %v648 = vld [vmem:[%s4 + $0xc] sm:$0xff]
    %v649 = vld [vmem:[%s4 + $0x14] sm:$0xf]
    %v650 = vld [vmem:[%s4 + $0x18] sm:$0xff]
    %v651 = vld [vmem:[%s4 + $0x20] sm:$0xf]
    %v652 = vld [vmem:[%s4 + $0x24] sm:$0xff]
    %v653 = vld [vmem:[%s4 + $0x2c] sm:$0xf]
    %v654 = vld [vmem:[%s4 + $0x30] sm:$0xff]
    %v655 = vld [vmem:[%s4 + $0x38] sm:$0xf]
    %v656 = vld [vmem:[%s4 + $0x3c] sm:$0xff]
    %v657 = vld [vmem:[%s4 + $0x44] sm:$0xf]
    %v658 = vld [vmem:[%s4 + $0x48] sm:$0xff]
    %v659 = vld [vmem:[%s4 + $0x50] sm:$0xf]
    %v660 = vld [vmem:[%s4 + $0x54] sm:$0xff]
    %v661 = vld [vmem:[%s4 + $0x5c] sm:$0xf]
    %v662 = vld [vmem:[%s4 + $0x60] sm:$0xff]
    %v663 = vld [vmem:[%s4 + $0x68] sm:$0xf]
    %v664 = vld [vmem:[%s4 + $0x6c] sm:$0xff]
    %v665 = vld [vmem:[%s4 + $0x74] sm:$0xf]
    %v666 = vld [vmem:[%s4 + $0x78] sm:$0xff]
    %v667 = vld [vmem:[%s4 + $0x80] sm:$0xf]
    %v668 = vld [vmem:[%s4 + $0x84] sm:$0xff]
    %v669 = vld [vmem:[%s4 + $0x8c] sm:$0xf]
    %v670 = vld [vmem:[%s4 + $0x90] sm:$0xff]
    %v671 = vld [vmem:[%s4 + $0x98] sm:$0xf]
    %v672 = vld [vmem:[%s4 + $0x9c] sm:$0xff]
    %v673 = vld [vmem:[%s4 + $0xa4] sm:$0xf]
    %v674 = vld [vmem:[%s4 + $0xa8] sm:$0xff]
    %v675 = vld [vmem:[%s4 + $0xb0] sm:$0xf]
    %v676 = vld [vmem:[%s4 + $0xb4] sm:$0xff]
    %v677 = vld [vmem:[%s4 + $0xbc] sm:$0xf]
    %v678 = vld [vmem:[%s6] sm:$0x7]
    %v680 = vperm.slane %v678, 0
    %v681 = vperm.slane %v678, 1
    %v682 = vperm.slane %v678, 2
    %v718 = vunpack.c.l.b16 %v646
    %v719 = vunpack.c.h.b16 %v646
    %v720 = vunpack.c.l.b16 %v647
    %v721 = vunpack.c.l.b16 %v648
    %v722 = vunpack.c.h.b16 %v648
    %v723 = vunpack.c.l.b16 %v649
    %v724 = vunpack.c.l.b16 %v650
    %v725 = vunpack.c.h.b16 %v650
    %v726 = vunpack.c.l.b16 %v651
    %v727 = vunpack.c.l.b16 %v652
    %v728 = vunpack.c.h.b16 %v652
    %v729 = vunpack.c.l.b16 %v653
    %v730 = vunpack.c.l.b16 %v654
    %v731 = vunpack.c.h.b16 %v654
    %v732 = vunpack.c.l.b16 %v655
    %v733 = vunpack.c.l.b16 %v656
    %v734 = vunpack.c.h.b16 %v656
    %v735 = vunpack.c.l.b16 %v657
    %v736 = vunpack.c.l.b16 %v658
    %v737 = vunpack.c.h.b16 %v658
    %v738 = vunpack.c.l.b16 %v659
    %v739 = vunpack.c.l.b16 %v660
    %v740 = vunpack.c.h.b16 %v660
    %v741 = vunpack.c.l.b16 %v661
    %v742 = vunpack.c.l.b16 %v662
    %v743 = vunpack.c.h.b16 %v662
    %v744 = vunpack.c.l.b16 %v663
    %v745 = vunpack.c.l.b16 %v664
    %v746 = vunpack.c.h.b16 %v664
    %v747 = vunpack.c.l.b16 %v665
    %v748 = vunpack.c.l.b16 %v666
    %v749 = vunpack.c.h.b16 %v666
    %v750 = vunpack.c.l.b16 %v667
    %v751 = vunpack.c.l.b16 %v668
    %v752 = vunpack.c.h.b16 %v668
    %v753 = vunpack.c.l.b16 %v669
    %v754 = vunpack.c.l.b16 %v670
    %v755 = vunpack.c.h.b16 %v670
    %v756 = vunpack.c.l.b16 %v671
    %v757 = vunpack.c.l.b16 %v672
    %v758 = vunpack.c.h.b16 %v672
    %v759 = vunpack.c.l.b16 %v673
    %v760 = vunpack.c.l.b16 %v674
    %v761 = vunpack.c.h.b16 %v674
    %v762 = vunpack.c.l.b16 %v675
    %v763 = vunpack.c.l.b16 %v676
    %v764 = vunpack.c.h.b16 %v676
    %v765 = vunpack.c.l.b16 %v677
    %v766 = vpack.c.b16 %v721, %v718
    %v767 = vpack.c.b16 %v722, %v719
    %v768 = vpack.c.b16 %v723, %v720
    %v769 = vpack.c.b16 %v727, %v724
    %v770 = vpack.c.b16 %v728, %v725
    %v771 = vpack.c.b16 %v729, %v726
    %v772 = vpack.c.b16 %v733, %v730
    %v773 = vpack.c.b16 %v734, %v731
    %v774 = vpack.c.b16 %v735, %v732
    %v775 = vpack.c.b16 %v739, %v736
    %v776 = vpack.c.b16 %v740, %v737
    %v777 = vpack.c.b16 %v741, %v738
    %v778 = vpack.c.b16 %v745, %v742
    %v779 = vpack.c.b16 %v746, %v743
    %v780 = vpack.c.b16 %v747, %v744
    %v781 = vpack.c.b16 %v751, %v748
    %v782 = vpack.c.b16 %v752, %v749
    %v783 = vpack.c.b16 %v753, %v750
    %v784 = vpack.c.b16 %v757, %v754
    %v785 = vpack.c.b16 %v758, %v755
    %v786 = vpack.c.b16 %v759, %v756
    %v787 = vpack.c.b16 %v763, %v760
    %v788 = vpack.c.b16 %v764, %v761
    %v789 = vpack.c.b16 %v765, %v762
    %814 = vmatpush.bf16.msra.mxu0 %v787
    %815 = vmatpush.bf16.msra.mxu0 %v784
    %816 = vmatpush.bf16.msra.mxu0 %v781
    %817 = vmatpush.bf16.msra.mxu0 %v778
    %818 = vmatpush.bf16.msra.mxu0 %v775
    %819 = vmatpush.bf16.msra.mxu0 %v772
    %820 = vmatpush.bf16.msra.mxu0 %v769
    %821 = vmatpush.bf16.msra.mxu0 %v766
    %822 = vmatmul.bf16.gmra.mxu0 %v645
    %v823 = vpop.f32.mrf.mxu0
    %v824 = vadd.f32 %v680, %v823
    %v825 = vpop.f32.mrf.mxu0
    %v826 = vadd.f32 %v680, %v825
    %827 = vdwg.mxu0
    %828 = vmatpush.bf16.msra.mxu0 %v788
    %829 = vmatpush.bf16.msra.mxu0 %v785
    %830 = vmatpush.bf16.msra.mxu0 %v782
    %831 = vmatpush.bf16.msra.mxu0 %v779
    %832 = vmatpush.bf16.msra.mxu0 %v776
    %833 = vmatpush.bf16.msra.mxu0 %v773
    %834 = vmatpush.bf16.msra.mxu0 %v770
    %835 = vmatpush.bf16.msra.mxu0 %v767
    %836 = vmatmul.bf16.gmra.mxu0 %v645
    %v837 = vpop.f32.mrf.mxu0
    %v838 = vadd.f32 %v681, %v837
    %v839 = vpop.f32.mrf.mxu0
    %v840 = vadd.f32 %v681, %v839
    %841 = vdwg.mxu0
    %842 = vmatpush.bf16.msra.mxu0 %v789
    %843 = vmatpush.bf16.msra.mxu0 %v786
    %844 = vmatpush.bf16.msra.mxu0 %v783
    %845 = vmatpush.bf16.msra.mxu0 %v780
    %846 = vmatpush.bf16.msra.mxu0 %v777
    %847 = vmatpush.bf16.msra.mxu0 %v774
    %848 = vmatpush.bf16.msra.mxu0 %v771
    %849 = vmatpush.bf16.msra.mxu0 %v768
    %850 = vmatmul.bf16.gmra.mxu0 %v645
    %v851 = vpop.f32.mrf.mxu0
    %v852 = vadd.f32 %v682, %v851
    %v853 = vpop.f32.mrf.mxu0
    %v854 = vadd.f32 %v682, %v853
    %855 = vdwg.mxu0
    %v856 = vadd.f32 %v639, %v824
    %v857 = vadd.f32 %v642, %v826
    %v858 = vxor.u32 %v856, 2147483648
    %v859 = vxor.u32 %v857, 2147483648
    %v860 = vmul.f32 %v858, 1.442695
    %v861 = vpow.pop %v860
    %v862 = vmul.f32 %v859, 1.442695
    %v863 = vpow.pop %v862
    %v864 = vadd.f32 %v861, 1.0
    %v865 = vadd.f32 %v863, 1.0
    %v866 = vrcp.pop %v864
    %v867 = vmul.f32 %v864, %v866
    %v868 = vsub.f32 1.0, %v867
    %v869 = vmul.f32 %v866, %v868
    %v870 = vadd.f32 %v866, %v869
    %vm871 = vweird.f32 %v864
    %vm872 = vweird.f32 %v866
    %vm873 = vmor %vm871, %vm872
    %v874 = vsel %vm873, %v866, %v870
    %v875 = vand.u32 2147483647, %v864
    %vm876 = vcmp.eq.f32.partialorder %v875, 8.507059e+37
    %v877 = vand.u32 %v864, 2147483648
    %v878 = vor.u32 1.1754944e-38, %v877
    %v879 = vsel %vm876, %v878, %v874
    %v880 = vmul.f32 1.0, %v879
    %v881 = vrcp.pop %v865
    %v882 = vmul.f32 %v865, %v881
    %v883 = vsub.f32 1.0, %v882
    %v884 = vmul.f32 %v881, %v883
    %v885 = vadd.f32 %v881, %v884
    %vm886 = vweird.f32 %v865
    %vm887 = vweird.f32 %v881
    %vm888 = vmor %vm886, %vm887
    %v889 = vsel %vm888, %v881, %v885
    %v890 = vand.u32 2147483647, %v865
    %vm891 = vcmp.eq.f32.partialorder %v890, 8.507059e+37
    %v892 = vand.u32 %v865, 2147483648
    %v893 = vor.u32 1.1754944e-38, %v892
    %v894 = vsel %vm891, %v893, %v889
    %v895 = vmul.f32 1.0, %v894
    %v896 = vadd.f32 %v640, %v838
    %v897 = vadd.f32 %v643, %v840
    %v898 = vxor.u32 %v896, 2147483648
    %v899 = vxor.u32 %v897, 2147483648
    %v900 = vmul.f32 %v898, 1.442695
    %v901 = vpow.pop %v900
    %v902 = vmul.f32 %v899, 1.442695
    %v903 = vpow.pop %v902
    %v904 = vadd.f32 %v901, 1.0
    %v905 = vadd.f32 %v903, 1.0
    %v906 = vrcp.pop %v904
    %v907 = vmul.f32 %v904, %v906
    %v908 = vsub.f32 1.0, %v907
    %v909 = vmul.f32 %v906, %v908
    %v910 = vadd.f32 %v906, %v909
    %vm911 = vweird.f32 %v904
    %vm912 = vweird.f32 %v906
    %vm913 = vmor %vm911, %vm912
    %v914 = vsel %vm913, %v906, %v910
    %v915 = vand.u32 2147483647, %v904
    %vm916 = vcmp.eq.f32.partialorder %v915, 8.507059e+37
    %v917 = vand.u32 %v904, 2147483648
    %v918 = vor.u32 1.1754944e-38, %v917
    %v919 = vsel %vm916, %v918, %v914
    %v920 = vmul.f32 1.0, %v919
    %v921 = vrcp.pop %v905
    %v922 = vmul.f32 %v905, %v921
    %v923 = vsub.f32 1.0, %v922
    %v924 = vmul.f32 %v921, %v923
    %v925 = vadd.f32 %v921, %v924
    %vm926 = vweird.f32 %v905
    %vm927 = vweird.f32 %v921
    %vm928 = vmor %vm926, %vm927
    %v929 = vsel %vm928, %v921, %v925
    %v930 = vand.u32 2147483647, %v905
    %vm931 = vcmp.eq.f32.partialorder %v930, 8.507059e+37
    %v932 = vand.u32 %v905, 2147483648
    %v933 = vor.u32 1.1754944e-38, %v932
    %v934 = vsel %vm931, %v933, %v929
    %v935 = vmul.f32 1.0, %v934
    %v936 = vmul.f32 %v880, %v852
    %v937 = vmul.f32 %v895, %v854
    %v938 = vadd.f32 %v641, %v936
    %v939 = vadd.f32 %v644, %v937
    %v940 = vtanh.pop %v938
    %v941 = vtanh.pop %v939
    %v942 = vsub.f32 1.0, %v920
    %v943 = vsub.f32 1.0, %v935
    %v944 = vmul.f32 %v942, %v940
    %v945 = vmul.f32 %v943, %v941
    %v946 = vmul.f32 %v920, %v630
    %v947 = vmul.f32 %v935, %v631
    %v948 = vadd.f32 %v944, %v946
    %v949 = vadd.f32 %v945, %v947
    %v950 = vstv %s625
    %vm951 = vcmp.lt.s32.totalorder %v950, %v55
    %vm952 = vcmp.lt.s32.totalorder %v950, %v56
    %v953 = vsel %vm951, 1, 0
    %v954 = vsel %vm952, 1, 0
    %955 = vset.pattern.permute.xlu0 0
    %956 = vperm.xlu0 %955, %v953
    %v957 = vpop.permute.xlu0 %956
    %958 = vset.pattern.permute.xlu0 0
    %959 = vperm.xlu0 %958, %v954
    %v960 = vpop.permute.xlu0 %959
    %vm961 = vcmp.eq.s32.totalorder %v957, 1
    %vm962 = vcmp.eq.s32.totalorder %v960, 1
    %v963 = vsel %vm961, %v948, 0.0
    %v964 = vsel %vm962, %v949, 0.0
    %s965 = smul.u32 %s625, 16
    %s966 = scalar_lea.vmem %s15, %s965
    %967 = vst [vmem:[%s966] sm:$0xff] %v963
    %968 = vst [vmem:[%s966 + $0x8] sm:$0xff] %v964
    %v969 = vsel %vm961, %v948, %v630
    %v970 = vsel %vm962, %v949, %v631
  $region66: #{seq2seq_forward.1} parent=0 // loop_footer
    %s629 = sadd.s32 1, %s625
  $region67: #{seq2seq_forward.1} parent=0 // loop_footer_branch
    %624 = sbr.rel target = $region63
  $region68: #{seq2seq_forward.1} parent=0 // loop_exit
    _
  %971 = vst [vmem:[%s16] sm:$0xff] %v630
  %972 = vst [vmem:[%s16 + $0x8] sm:$0xff] %v631
  %v973 = vld [vmem:[%s15] sm:$0xff]
  %v974 = vld [vmem:[%s15 + $0x8] sm:$0xff]
  %v977 = vrot.slane %v973, 1
  %v978 = vrot.slane %v973, 2
  %v979 = vrot.slane %v973, 3
  %v980 = vrot.slane %v973, 4
  %v981 = vrot.slane %v973, 5
  %v982 = vrot.slane %v973, 6
  %v983 = vrot.slane %v973, 7
  %v984 = vrot.slane %v974, 1
  %v985 = vrot.slane %v974, 2
  %v986 = vrot.slane %v974, 3
  %v987 = vrot.slane %v974, 4
  %v988 = vrot.slane %v974, 5
  %v989 = vrot.slane %v974, 6
  %v990 = vrot.slane %v974, 7
  %v1005 = vpack.c.bf16 %v973, %v973
  %v1006 = vpack.c.bf16 %v977, %v977
  %v1007 = vpack.c.bf16 %v978, %v978
  %v1008 = vpack.c.bf16 %v979, %v979
  %v1009 = vpack.c.bf16 %v980, %v980
  %v1010 = vpack.c.bf16 %v981, %v981
  %v1011 = vpack.c.bf16 %v982, %v982
  %v1012 = vpack.c.bf16 %v983, %v983
  %v1013 = vpack.c.bf16 %v974, %v974
  %v1014 = vpack.c.bf16 %v984, %v984
  %v1015 = vpack.c.bf16 %v985, %v985
  %v1016 = vpack.c.bf16 %v986, %v986
  %v1017 = vpack.c.bf16 %v987, %v987
  %v1018 = vpack.c.bf16 %v988, %v988
  %v1019 = vpack.c.bf16 %v989, %v989
  %v1020 = vpack.c.bf16 %v990, %v990
  %vm1021 = vcmask 1040384
  %vm1022 = vsmask.f32 256
  %vm1023 = vmand %vm1021, %vm1022
  %v1024 = vld [vmem:[#allocation3] sm:$0x1]
  %v1025 = vsel %vm1023, %v1005, %v1024
  %1026 = vst [vmem:[#allocation3] sm:$0x1] %v1025
  %v1027 = vld [vmem:[#allocation3 + $0x40] sm:$0x1]
  %v1028 = vsel %vm1023, %v1006, %v1027
  %1029 = vst [vmem:[#allocation3 + $0x40] sm:$0x1] %v1028
  %v1030 = vld [vmem:[#allocation3 + $0x80] sm:$0x1]
  %v1031 = vsel %vm1023, %v1007, %v1030
  %1032 = vst [vmem:[#allocation3 + $0x80] sm:$0x1] %v1031
  %v1033 = vld [vmem:[#allocation3 + $0xc0] sm:$0x1]
  %v1034 = vsel %vm1023, %v1008, %v1033
  %1035 = vst [vmem:[#allocation3 + $0xc0] sm:$0x1] %v1034
  %v1036 = vld [vmem:[#allocation3 + $0x100] sm:$0x1]
  %v1037 = vsel %vm1023, %v1009, %v1036
  %1038 = vst [vmem:[#allocation3 + $0x100] sm:$0x1] %v1037
  %v1039 = vld [vmem:[#allocation3 + $0x140] sm:$0x1]
  %v1040 = vsel %vm1023, %v1010, %v1039
  %1041 = vst [vmem:[#allocation3 + $0x140] sm:$0x1] %v1040
  %v1042 = vld [vmem:[#allocation3 + $0x180] sm:$0x1]
  %v1043 = vsel %vm1023, %v1011, %v1042
  %1044 = vst [vmem:[#allocation3 + $0x180] sm:$0x1] %v1043
  %v1045 = vld [vmem:[#allocation3 + $0x1c0] sm:$0x1]
  %v1046 = vsel %vm1023, %v1012, %v1045
  %1047 = vst [vmem:[#allocation3 + $0x1c0] sm:$0x1] %v1046
  %v1048 = vld [vmem:[#allocation3 + $0x200] sm:$0x1]
  %v1049 = vsel %vm1023, %v1013, %v1048
  %1050 = vst [vmem:[#allocation3 + $0x200] sm:$0x1] %v1049
  %v1051 = vld [vmem:[#allocation3 + $0x240] sm:$0x1]
  %v1052 = vsel %vm1023, %v1014, %v1051
  %1053 = vst [vmem:[#allocation3 + $0x240] sm:$0x1] %v1052
  %v1054 = vld [vmem:[#allocation3 + $0x280] sm:$0x1]
  %v1055 = vsel %vm1023, %v1015, %v1054
  %1056 = vst [vmem:[#allocation3 + $0x280] sm:$0x1] %v1055
  %v1057 = vld [vmem:[#allocation3 + $0x2c0] sm:$0x1]
  %v1058 = vsel %vm1023, %v1016, %v1057
  %1059 = vst [vmem:[#allocation3 + $0x2c0] sm:$0x1] %v1058
  %v1060 = vld [vmem:[#allocation3 + $0x300] sm:$0x1]
  %v1061 = vsel %vm1023, %v1017, %v1060
  %1062 = vst [vmem:[#allocation3 + $0x300] sm:$0x1] %v1061
  %v1063 = vld [vmem:[#allocation3 + $0x340] sm:$0x1]
  %v1064 = vsel %vm1023, %v1018, %v1063
  %1065 = vst [vmem:[#allocation3 + $0x340] sm:$0x1] %v1064
  %v1066 = vld [vmem:[#allocation3 + $0x380] sm:$0x1]
  %v1067 = vsel %vm1023, %v1019, %v1066
  %1068 = vst [vmem:[#allocation3 + $0x380] sm:$0x1] %v1067
  %v1069 = vld [vmem:[#allocation3 + $0x3c0] sm:$0x1]
  %v1070 = vsel %vm1023, %v1020, %v1069
  %1071 = vst [vmem:[#allocation3 + $0x3c0] sm:$0x1] %v1070
  %s1072 = scalar_lea.vmem %s15, 16
  %v1073 = vld [vmem:[%s1072] sm:$0xff]
  %v1074 = vld [vmem:[%s1072 + $0x8] sm:$0xff]
  %v1077 = vrot.slane %v1073, 1
  %v1078 = vrot.slane %v1073, 2
  %v1079 = vrot.slane %v1073, 3
  %v1080 = vrot.slane %v1073, 4
  %v1081 = vrot.slane %v1073, 5
  %v1082 = vrot.slane %v1073, 6
  %v1083 = vrot.slane %v1073, 7
  %v1084 = vrot.slane %v1074, 1
  %v1085 = vrot.slane %v1074, 2
  %v1086 = vrot.slane %v1074, 3
  %v1087 = vrot.slane %v1074, 4
  %v1088 = vrot.slane %v1074, 5
  %v1089 = vrot.slane %v1074, 6
  %v1090 = vrot.slane %v1074, 7
  %v1105 = vpack.c.bf16 %v1073, %v1073
  %v1106 = vpack.c.bf16 %v1077, %v1077
  %v1107 = vpack.c.bf16 %v1078, %v1078
  %v1108 = vpack.c.bf16 %v1079, %v1079
  %v1109 = vpack.c.bf16 %v1080, %v1080
  %v1110 = vpack.c.bf16 %v1081, %v1081
  %v1111 = vpack.c.bf16 %v1082, %v1082
  %v1112 = vpack.c.bf16 %v1083, %v1083
  %v1113 = vpack.c.bf16 %v1074, %v1074
  %v1114 = vpack.c.bf16 %v1084, %v1084
  %v1115 = vpack.c.bf16 %v1085, %v1085
  %v1116 = vpack.c.bf16 %v1086, %v1086
  %v1117 = vpack.c.bf16 %v1087, %v1087
  %v1118 = vpack.c.bf16 %v1088, %v1088
  %v1119 = vpack.c.bf16 %v1089, %v1089
  %v1120 = vpack.c.bf16 %v1090, %v1090
  %v1122 = vshll.u32 %v1105, 16
  %v1125 = vshll.u32 %v1106, 16
  %v1128 = vshll.u32 %v1107, 16
  %v1131 = vshll.u32 %v1108, 16
  %v1134 = vshll.u32 %v1109, 16
  %v1137 = vshll.u32 %v1110, 16
  %v1140 = vshll.u32 %v1111, 16
  %v1143 = vshll.u32 %v1112, 16
  %v1146 = vshll.u32 %v1113, 16
  %v1149 = vshll.u32 %v1114, 16
  %v1152 = vshll.u32 %v1115, 16
  %v1155 = vshll.u32 %v1116, 16
  %v1158 = vshll.u32 %v1117, 16
  %v1161 = vshll.u32 %v1118, 16
  %v1164 = vshll.u32 %v1119, 16
  %v1167 = vshll.u32 %v1120, 16
  %vm1185 = vsmask.f32 7938
  %vm1186 = vmand %vm1021, %vm1185
  %v1187 = vld [vmem:[#allocation3] sm:$0x1]
  %v1188 = vsel %vm1186, %v1122, %v1187
  %1189 = vst [vmem:[#allocation3] sm:$0x1] %v1188
  %v1190 = vld [vmem:[#allocation3 + $0x40] sm:$0x1]
  %v1191 = vsel %vm1186, %v1125, %v1190
  %1192 = vst [vmem:[#allocation3 + $0x40] sm:$0x1] %v1191
  %v1193 = vld [vmem:[#allocation3 + $0x80] sm:$0x1]
  %v1194 = vsel %vm1186, %v1128, %v1193
  %1195 = vst [vmem:[#allocation3 + $0x80] sm:$0x1] %v1194
  %v1196 = vld [vmem:[#allocation3 + $0xc0] sm:$0x1]
  %v1197 = vsel %vm1186, %v1131, %v1196
  %1198 = vst [vmem:[#allocation3 + $0xc0] sm:$0x1] %v1197
  %v1199 = vld [vmem:[#allocation3 + $0x100] sm:$0x1]
  %v1200 = vsel %vm1186, %v1134, %v1199
  %1201 = vst [vmem:[#allocation3 + $0x100] sm:$0x1] %v1200
  %v1202 = vld [vmem:[#allocation3 + $0x140] sm:$0x1]
  %v1203 = vsel %vm1186, %v1137, %v1202
  %1204 = vst [vmem:[#allocation3 + $0x140] sm:$0x1] %v1203
  %v1205 = vld [vmem:[#allocation3 + $0x180] sm:$0x1]
  %v1206 = vsel %vm1186, %v1140, %v1205
  %1207 = vst [vmem:[#allocation3 + $0x180] sm:$0x1] %v1206
  %v1208 = vld [vmem:[#allocation3 + $0x1c0] sm:$0x1]
  %v1209 = vsel %vm1186, %v1143, %v1208
  %1210 = vst [vmem:[#allocation3 + $0x1c0] sm:$0x1] %v1209
  %v1211 = vld [vmem:[#allocation3 + $0x200] sm:$0x1]
  %v1212 = vsel %vm1186, %v1146, %v1211
  %1213 = vst [vmem:[#allocation3 + $0x200] sm:$0x1] %v1212
  %v1214 = vld [vmem:[#allocation3 + $0x240] sm:$0x1]
  %v1215 = vsel %vm1186, %v1149, %v1214
  %1216 = vst [vmem:[#allocation3 + $0x240] sm:$0x1] %v1215
  %v1217 = vld [vmem:[#allocation3 + $0x280] sm:$0x1]
  %v1218 = vsel %vm1186, %v1152, %v1217
  %1219 = vst [vmem:[#allocation3 + $0x280] sm:$0x1] %v1218
  %v1220 = vld [vmem:[#allocation3 + $0x2c0] sm:$0x1]
  %v1221 = vsel %vm1186, %v1155, %v1220
  %1222 = vst [vmem:[#allocation3 + $0x2c0] sm:$0x1] %v1221
  %v1223 = vld [vmem:[#allocation3 + $0x300] sm:$0x1]
  %v1224 = vsel %vm1186, %v1158, %v1223
  %1225 = vst [vmem:[#allocation3 + $0x300] sm:$0x1] %v1224
  %v1226 = vld [vmem:[#allocation3 + $0x340] sm:$0x1]
  %v1227 = vsel %vm1186, %v1161, %v1226
  %1228 = vst [vmem:[#allocation3 + $0x340] sm:$0x1] %v1227
  %v1229 = vld [vmem:[#allocation3 + $0x380] sm:$0x1]
  %v1230 = vsel %vm1186, %v1164, %v1229
  %1231 = vst [vmem:[#allocation3 + $0x380] sm:$0x1] %v1230
  %v1232 = vld [vmem:[#allocation3 + $0x3c0] sm:$0x1]
  %v1233 = vsel %vm1186, %v1167, %v1232
  %1234 = vst [vmem:[#allocation3 + $0x3c0] sm:$0x1] %v1233
  %s1235 = scalar_lea.vmem %s15, 32
  %v1236 = vld [vmem:[%s1235] sm:$0xff]
  %v1237 = vld [vmem:[%s1235 + $0x8] sm:$0xff]
  %v1240 = vrot.slane %v1236, 1
  %v1241 = vrot.slane %v1236, 2
  %v1242 = vrot.slane %v1236, 3
  %v1243 = vrot.slane %v1236, 4
  %v1244 = vrot.slane %v1236, 5
  %v1245 = vrot.slane %v1236, 6
  %v1246 = vrot.slane %v1236, 7
  %v1247 = vrot.slane %v1237, 1
  %v1248 = vrot.slane %v1237, 2
  %v1249 = vrot.slane %v1237, 3
  %v1250 = vrot.slane %v1237, 4
  %v1251 = vrot.slane %v1237, 5
  %v1252 = vrot.slane %v1237, 6
  %v1253 = vrot.slane %v1237, 7
  %v1268 = vpack.c.bf16 %v1236, %v1236
  %v1269 = vpack.c.bf16 %v1240, %v1240
  %v1270 = vpack.c.bf16 %v1241, %v1241
  %v1271 = vpack.c.bf16 %v1242, %v1242
  %v1272 = vpack.c.bf16 %v1243, %v1243
  %v1273 = vpack.c.bf16 %v1244, %v1244
  %v1274 = vpack.c.bf16 %v1245, %v1245
  %v1275 = vpack.c.bf16 %v1246, %v1246
  %v1276 = vpack.c.bf16 %v1237, %v1237
  %v1277 = vpack.c.bf16 %v1247, %v1247
  %v1278 = vpack.c.bf16 %v1248, %v1248
  %v1279 = vpack.c.bf16 %v1249, %v1249
  %v1280 = vpack.c.bf16 %v1250, %v1250
  %v1281 = vpack.c.bf16 %v1251, %v1251
  %v1282 = vpack.c.bf16 %v1252, %v1252
  %v1283 = vpack.c.bf16 %v1253, %v1253
  %v1300 = vrot.slane %v1268, 7
  %v1301 = vrot.slane %v1269, 7
  %v1302 = vrot.slane %v1270, 7
  %v1303 = vrot.slane %v1271, 7
  %v1304 = vrot.slane %v1272, 7
  %v1305 = vrot.slane %v1273, 7
  %v1306 = vrot.slane %v1274, 7
  %v1307 = vrot.slane %v1275, 7
  %v1308 = vrot.slane %v1276, 7
  %v1309 = vrot.slane %v1277, 7
  %v1310 = vrot.slane %v1278, 7
  %v1311 = vrot.slane %v1279, 7
  %v1312 = vrot.slane %v1280, 7
  %v1313 = vrot.slane %v1281, 7
  %v1314 = vrot.slane %v1282, 7
  %v1315 = vrot.slane %v1283, 7
  %vm1332 = vcmask 1041409
  %vm1333 = vsmask.f32 1280
  %vm1334 = vmand %vm1332, %vm1333
  %v1335 = vld [vmem:[#allocation3] sm:$0x2]
  %v1336 = vsel %vm1334, %v1300, %v1335
  %1337 = vst [vmem:[#allocation3] sm:$0x2] %v1336
  %v1338 = vld [vmem:[#allocation3 + $0x40] sm:$0x2]
  %v1339 = vsel %vm1334, %v1301, %v1338
  %1340 = vst [vmem:[#allocation3 + $0x40] sm:$0x2] %v1339
  %v1341 = vld [vmem:[#allocation3 + $0x80] sm:$0x2]
  %v1342 = vsel %vm1334, %v1302, %v1341
  %1343 = vst [vmem:[#allocation3 + $0x80] sm:$0x2] %v1342
  %v1344 = vld [vmem:[#allocation3 + $0xc0] sm:$0x2]
  %v1345 = vsel %vm1334, %v1303, %v1344
  %1346 = vst [vmem:[#allocation3 + $0xc0] sm:$0x2] %v1345
  %v1347 = vld [vmem:[#allocation3 + $0x100] sm:$0x2]
  %v1348 = vsel %vm1334, %v1304, %v1347
  %1349 = vst [vmem:[#allocation3 + $0x100] sm:$0x2] %v1348
  %v1350 = vld [vmem:[#allocation3 + $0x140] sm:$0x2]
  %v1351 = vsel %vm1334, %v1305, %v1350
  %1352 = vst [vmem:[#allocation3 + $0x140] sm:$0x2] %v1351
  %v1353 = vld [vmem:[#allocation3 + $0x180] sm:$0x2]
  %v1354 = vsel %vm1334, %v1306, %v1353
  %1355 = vst [vmem:[#allocation3 + $0x180] sm:$0x2] %v1354
  %v1356 = vld [vmem:[#allocation3 + $0x1c0] sm:$0x2]
  %v1357 = vsel %vm1334, %v1307, %v1356
  %1358 = vst [vmem:[#allocation3 + $0x1c0] sm:$0x2] %v1357
  %v1359 = vld [vmem:[#allocation3 + $0x200] sm:$0x2]
  %v1360 = vsel %vm1334, %v1308, %v1359
  %1361 = vst [vmem:[#allocation3 + $0x200] sm:$0x2] %v1360
  %v1362 = vld [vmem:[#allocation3 + $0x240] sm:$0x2]
  %v1363 = vsel %vm1334, %v1309, %v1362
  %1364 = vst [vmem:[#allocation3 + $0x240] sm:$0x2] %v1363
  %v1365 = vld [vmem:[#allocation3 + $0x280] sm:$0x2]
  %v1366 = vsel %vm1334, %v1310, %v1365
  %1367 = vst [vmem:[#allocation3 + $0x280] sm:$0x2] %v1366
  %v1368 = vld [vmem:[#allocation3 + $0x2c0] sm:$0x2]
  %v1369 = vsel %vm1334, %v1311, %v1368
  %1370 = vst [vmem:[#allocation3 + $0x2c0] sm:$0x2] %v1369
  %v1371 = vld [vmem:[#allocation3 + $0x300] sm:$0x2]
  %v1372 = vsel %vm1334, %v1312, %v1371
  %1373 = vst [vmem:[#allocation3 + $0x300] sm:$0x2] %v1372
  %v1374 = vld [vmem:[#allocation3 + $0x340] sm:$0x2]
  %v1375 = vsel %vm1334, %v1313, %v1374
  %1376 = vst [vmem:[#allocation3 + $0x340] sm:$0x2] %v1375
  %v1377 = vld [vmem:[#allocation3 + $0x380] sm:$0x2]
  %v1378 = vsel %vm1334, %v1314, %v1377
  %1379 = vst [vmem:[#allocation3 + $0x380] sm:$0x2] %v1378
  %v1380 = vld [vmem:[#allocation3 + $0x3c0] sm:$0x2]
  %v1381 = vsel %vm1334, %v1315, %v1380
  %1382 = vst [vmem:[#allocation3 + $0x3c0] sm:$0x2] %v1381
  %s1383 = scalar_lea.vmem %s15, 48
  %v1384 = vld [vmem:[%s1383] sm:$0xff]
  %v1385 = vld [vmem:[%s1383 + $0x8] sm:$0xff]
  %v1388 = vrot.slane %v1384, 1
  %v1389 = vrot.slane %v1384, 2
  %v1390 = vrot.slane %v1384, 3
  %v1391 = vrot.slane %v1384, 4
  %v1392 = vrot.slane %v1384, 5
  %v1393 = vrot.slane %v1384, 6
  %v1394 = vrot.slane %v1384, 7
  %v1395 = vrot.slane %v1385, 1
  %v1396 = vrot.slane %v1385, 2
  %v1397 = vrot.slane %v1385, 3
  %v1398 = vrot.slane %v1385, 4
  %v1399 = vrot.slane %v1385, 5
  %v1400 = vrot.slane %v1385, 6
  %v1401 = vrot.slane %v1385, 7
  %v1416 = vpack.c.bf16 %v1384, %v1384
  %v1417 = vpack.c.bf16 %v1388, %v1388
  %v1418 = vpack.c.bf16 %v1389, %v1389
  %v1419 = vpack.c.bf16 %v1390, %v1390
  %v1420 = vpack.c.bf16 %v1391, %v1391
  %v1421 = vpack.c.bf16 %v1392, %v1392
  %v1422 = vpack.c.bf16 %v1393, %v1393
  %v1423 = vpack.c.bf16 %v1394, %v1394
  %v1424 = vpack.c.bf16 %v1385, %v1385
  %v1425 = vpack.c.bf16 %v1395, %v1395
  %v1426 = vpack.c.bf16 %v1396, %v1396
  %v1427 = vpack.c.bf16 %v1397, %v1397
  %v1428 = vpack.c.bf16 %v1398, %v1398
  %v1429 = vpack.c.bf16 %v1399, %v1399
  %v1430 = vpack.c.bf16 %v1400, %v1400
  %v1431 = vpack.c.bf16 %v1401, %v1401
  %v1433 = vshll.u32 %v1416, 16
  %v1435 = vrot.slane %v1433, 7
  %v1437 = vshll.u32 %v1417, 16
  %v1439 = vrot.slane %v1437, 7
  %v1441 = vshll.u32 %v1418, 16
  %v1443 = vrot.slane %v1441, 7
  %v1445 = vshll.u32 %v1419, 16
  %v1447 = vrot.slane %v1445, 7
  %v1449 = vshll.u32 %v1420, 16
  %v1451 = vrot.slane %v1449, 7
  %v1453 = vshll.u32 %v1421, 16
  %v1455 = vrot.slane %v1453, 7
  %v1457 = vshll.u32 %v1422, 16
  %v1459 = vrot.slane %v1457, 7
  %v1461 = vshll.u32 %v1423, 16
  %v1463 = vrot.slane %v1461, 7
  %v1465 = vshll.u32 %v1424, 16
  %v1467 = vrot.slane %v1465, 7
  %v1469 = vshll.u32 %v1425, 16
  %v1471 = vrot.slane %v1469, 7
  %v1473 = vshll.u32 %v1426, 16
  %v1475 = vrot.slane %v1473, 7
  %v1477 = vshll.u32 %v1427, 16
  %v1479 = vrot.slane %v1477, 7
  %v1481 = vshll.u32 %v1428, 16
  %v1483 = vrot.slane %v1481, 7
  %v1485 = vshll.u32 %v1429, 16
  %v1487 = vrot.slane %v1485, 7
  %v1489 = vshll.u32 %v1430, 16
  %v1491 = vrot.slane %v1489, 7
  %v1493 = vshll.u32 %v1431, 16
  %v1495 = vrot.slane %v1493, 7
  %vm1512 = vsmask.f32 7942
  %vm1513 = vmand %vm1332, %vm1512
  %v1514 = vld [vmem:[#allocation3] sm:$0x2]
  %v1515 = vsel %vm1513, %v1435, %v1514
  %1516 = vst [vmem:[#allocation3] sm:$0x2] %v1515
  %v1517 = vld [vmem:[#allocation3 + $0x40] sm:$0x2]
  %v1518 = vsel %vm1513, %v1439, %v1517
  %1519 = vst [vmem:[#allocation3 + $0x40] sm:$0x2] %v1518
  %v1520 = vld [vmem:[#allocation3 + $0x80] sm:$0x2]
  %v1521 = vsel %vm1513, %v1443, %v1520
  %1522 = vst [vmem:[#allocation3 + $0x80] sm:$0x2] %v1521
  %v1523 = vld [vmem:[#allocation3 + $0xc0] sm:$0x2]
  %v1524 = vsel %vm1513, %v1447, %v1523
  %1525 = vst [vmem:[#allocation3 + $0xc0] sm:$0x2] %v1524
  %v1526 = vld [vmem:[#allocation3 + $0x100] sm:$0x2]
  %v1527 = vsel %vm1513, %v1451, %v1526
  %1528 = vst [vmem:[#allocation3 + $0x100] sm:$0x2] %v1527
  %v1529 = vld [vmem:[#allocation3 + $0x140] sm:$0x2]
  %v1530 = vsel %vm1513, %v1455, %v1529
  %1531 = vst [vmem:[#allocation3 + $0x140] sm:$0x2] %v1530
  %v1532 = vld [vmem:[#allocation3 + $0x180] sm:$0x2]
  %v1533 = vsel %vm1513, %v1459, %v1532
  %1534 = vst [vmem:[#allocation3 + $0x180] sm:$0x2] %v1533
  %v1535 = vld [vmem:[#allocation3 + $0x1c0] sm:$0x2]
  %v1536 = vsel %vm1513, %v1463, %v1535
  %1537 = vst [vmem:[#allocation3 + $0x1c0] sm:$0x2] %v1536
  %v1538 = vld [vmem:[#allocation3 + $0x200] sm:$0x2]
  %v1539 = vsel %vm1513, %v1467, %v1538
  %1540 = vst [vmem:[#allocation3 + $0x200] sm:$0x2] %v1539
  %v1541 = vld [vmem:[#allocation3 + $0x240] sm:$0x2]
  %v1542 = vsel %vm1513, %v1471, %v1541
  %1543 = vst [vmem:[#allocation3 + $0x240] sm:$0x2] %v1542
  %v1544 = vld [vmem:[#allocation3 + $0x280] sm:$0x2]
  %v1545 = vsel %vm1513, %v1475, %v1544
  %1546 = vst [vmem:[#allocation3 + $0x280] sm:$0x2] %v1545
  %v1547 = vld [vmem:[#allocation3 + $0x2c0] sm:$0x2]
  %v1548 = vsel %vm1513, %v1479, %v1547
  %1549 = vst [vmem:[#allocation3 + $0x2c0] sm:$0x2] %v1548
  %v1550 = vld [vmem:[#allocation3 + $0x300] sm:$0x2]
  %v1551 = vsel %vm1513, %v1483, %v1550
  %1552 = vst [vmem:[#allocation3 + $0x300] sm:$0x2] %v1551
  %v1553 = vld [vmem:[#allocation3 + $0x340] sm:$0x2]
  %v1554 = vsel %vm1513, %v1487, %v1553
  %1555 = vst [vmem:[#allocation3 + $0x340] sm:$0x2] %v1554
  %v1556 = vld [vmem:[#allocation3 + $0x380] sm:$0x2]
  %v1557 = vsel %vm1513, %v1491, %v1556
  %1558 = vst [vmem:[#allocation3 + $0x380] sm:$0x2] %v1557
  %v1559 = vld [vmem:[#allocation3 + $0x3c0] sm:$0x2]
  %v1560 = vsel %vm1513, %v1495, %v1559
  %1561 = vst [vmem:[#allocation3 + $0x3c0] sm:$0x2] %v1560
  %s1562 = scalar_lea.vmem %s15, 64
  %v1563 = vld [vmem:[%s1562] sm:$0xff]
  %v1564 = vld [vmem:[%s1562 + $0x8] sm:$0xff]
  %v1567 = vrot.slane %v1563, 1
  %v1568 = vrot.slane %v1563, 2
  %v1569 = vrot.slane %v1563, 3
  %v1570 = vrot.slane %v1563, 4
  %v1571 = vrot.slane %v1563, 5
  %v1572 = vrot.slane %v1563, 6
  %v1573 = vrot.slane %v1563, 7
  %v1574 = vrot.slane %v1564, 1
  %v1575 = vrot.slane %v1564, 2
  %v1576 = vrot.slane %v1564, 3
  %v1577 = vrot.slane %v1564, 4
  %v1578 = vrot.slane %v1564, 5
  %v1579 = vrot.slane %v1564, 6
  %v1580 = vrot.slane %v1564, 7
  %v1595 = vpack.c.bf16 %v1563, %v1563
  %v1596 = vpack.c.bf16 %v1567, %v1567
  %v1597 = vpack.c.bf16 %v1568, %v1568
  %v1598 = vpack.c.bf16 %v1569, %v1569
  %v1599 = vpack.c.bf16 %v1570, %v1570
  %v1600 = vpack.c.bf16 %v1571, %v1571
  %v1601 = vpack.c.bf16 %v1572, %v1572
  %v1602 = vpack.c.bf16 %v1573, %v1573
  %v1603 = vpack.c.bf16 %v1564, %v1564
  %v1604 = vpack.c.bf16 %v1574, %v1574
  %v1605 = vpack.c.bf16 %v1575, %v1575
  %v1606 = vpack.c.bf16 %v1576, %v1576
  %v1607 = vpack.c.bf16 %v1577, %v1577
  %v1608 = vpack.c.bf16 %v1578, %v1578
  %v1609 = vpack.c.bf16 %v1579, %v1579
  %v1610 = vpack.c.bf16 %v1580, %v1580
  %v1627 = vrot.slane %v1595, 6
  %v1628 = vrot.slane %v1596, 6
  %v1629 = vrot.slane %v1597, 6
  %v1630 = vrot.slane %v1598, 6
  %v1631 = vrot.slane %v1599, 6
  %v1632 = vrot.slane %v1600, 6
  %v1633 = vrot.slane %v1601, 6
  %v1634 = vrot.slane %v1602, 6
  %v1635 = vrot.slane %v1603, 6
  %v1636 = vrot.slane %v1604, 6
  %v1637 = vrot.slane %v1605, 6
  %v1638 = vrot.slane %v1606, 6
  %v1639 = vrot.slane %v1607, 6
  %v1640 = vrot.slane %v1608, 6
  %v1641 = vrot.slane %v1609, 6
  %v1642 = vrot.slane %v1610, 6
  %vm1659 = vcmask 1042434
  %vm1660 = vsmask.f32 2304
  %vm1661 = vmand %vm1659, %vm1660
  %v1662 = vld [vmem:[#allocation3] sm:$0x4]
  %v1663 = vsel %vm1661, %v1627, %v1662
  %1664 = vst [vmem:[#allocation3] sm:$0x4] %v1663
  %v1665 = vld [vmem:[#allocation3 + $0x40] sm:$0x4]
  %v1666 = vsel %vm1661, %v1628, %v1665
  %1667 = vst [vmem:[#allocation3 + $0x40] sm:$0x4] %v1666
  %v1668 = vld [vmem:[#allocation3 + $0x80] sm:$0x4]
  %v1669 = vsel %vm1661, %v1629, %v1668
  %1670 = vst [vmem:[#allocation3 + $0x80] sm:$0x4] %v1669
  %v1671 = vld [vmem:[#allocation3 + $0xc0] sm:$0x4]
  %v1672 = vsel %vm1661, %v1630, %v1671
  %1673 = vst [vmem:[#allocation3 + $0xc0] sm:$0x4] %v1672
  %v1674 = vld [vmem:[#allocation3 + $0x100] sm:$0x4]
  %v1675 = vsel %vm1661, %v1631, %v1674
  %1676 = vst [vmem:[#allocation3 + $0x100] sm:$0x4] %v1675
  %v1677 = vld [vmem:[#allocation3 + $0x140] sm:$0x4]
  %v1678 = vsel %vm1661, %v1632, %v1677
  %1679 = vst [vmem:[#allocation3 + $0x140] sm:$0x4] %v1678
  %v1680 = vld [vmem:[#allocation3 + $0x180] sm:$0x4]
  %v1681 = vsel %vm1661, %v1633, %v1680
  %1682 = vst [vmem:[#allocation3 + $0x180] sm:$0x4] %v1681
  %v1683 = vld [vmem:[#allocation3 + $0x1c0] sm:$0x4]
  %v1684 = vsel %vm1661, %v1634, %v1683
  %1685 = vst [vmem:[#allocation3 + $0x1c0] sm:$0x4] %v1684
  %v1686 = vld [vmem:[#allocation3 + $0x200] sm:$0x4]
  %v1687 = vsel %vm1661, %v1635, %v1686
  %1688 = vst [vmem:[#allocation3 + $0x200] sm:$0x4] %v1687
  %v1689 = vld [vmem:[#allocation3 + $0x240] sm:$0x4]
  %v1690 = vsel %vm1661, %v1636, %v1689
  %1691 = vst [vmem:[#allocation3 + $0x240] sm:$0x4] %v1690
  %v1692 = vld [vmem:[#allocation3 + $0x280] sm:$0x4]
  %v1693 = vsel %vm1661, %v1637, %v1692
  %1694 = vst [vmem:[#allocation3 + $0x280] sm:$0x4] %v1693
  %v1695 = vld [vmem:[#allocation3 + $0x2c0] sm:$0x4]
  %v1696 = vsel %vm1661, %v1638, %v1695
  %1697 = vst [vmem:[#allocation3 + $0x2c0] sm:$0x4] %v1696
  %v1698 = vld [vmem:[#allocation3 + $0x300] sm:$0x4]
  %v1699 = vsel %vm1661, %v1639, %v1698
  %1700 = vst [vmem:[#allocation3 + $0x300] sm:$0x4] %v1699
  %v1701 = vld [vmem:[#allocation3 + $0x340] sm:$0x4]
  %v1702 = vsel %vm1661, %v1640, %v1701
  %1703 = vst [vmem:[#allocation3 + $0x340] sm:$0x4] %v1702
  %v1704 = vld [vmem:[#allocation3 + $0x380] sm:$0x4]
  %v1705 = vsel %vm1661, %v1641, %v1704
  %1706 = vst [vmem:[#allocation3 + $0x380] sm:$0x4] %v1705
  %v1707 = vld [vmem:[#allocation3 + $0x3c0] sm:$0x4]
  %v1708 = vsel %vm1661, %v1642, %v1707
  %1709 = vst [vmem:[#allocation3 + $0x3c0] sm:$0x4] %v1708
  %s1710 = scalar_lea.vmem %s15, 80
  %v1711 = vld [vmem:[%s1710] sm:$0xff]
  %v1712 = vld [vmem:[%s1710 + $0x8] sm:$0xff]
  %v1715 = vrot.slane %v1711, 1
  %v1716 = vrot.slane %v1711, 2
  %v1717 = vrot.slane %v1711, 3
  %v1718 = vrot.slane %v1711, 4
  %v1719 = vrot.slane %v1711, 5
  %v1720 = vrot.slane %v1711, 6
  %v1721 = vrot.slane %v1711, 7
  %v1722 = vrot.slane %v1712, 1
  %v1723 = vrot.slane %v1712, 2
  %v1724 = vrot.slane %v1712, 3
  %v1725 = vrot.slane %v1712, 4
  %v1726 = vrot.slane %v1712, 5
  %v1727 = vrot.slane %v1712, 6
  %v1728 = vrot.slane %v1712, 7
  %v1743 = vpack.c.bf16 %v1711, %v1711
  %v1744 = vpack.c.bf16 %v1715, %v1715
  %v1745 = vpack.c.bf16 %v1716, %v1716
  %v1746 = vpack.c.bf16 %v1717, %v1717
  %v1747 = vpack.c.bf16 %v1718, %v1718
  %v1748 = vpack.c.bf16 %v1719, %v1719
  %v1749 = vpack.c.bf16 %v1720, %v1720
  %v1750 = vpack.c.bf16 %v1721, %v1721
  %v1751 = vpack.c.bf16 %v1712, %v1712
  %v1752 = vpack.c.bf16 %v1722, %v1722
  %v1753 = vpack.c.bf16 %v1723, %v1723
  %v1754 = vpack.c.bf16 %v1724, %v1724
  %v1755 = vpack.c.bf16 %v1725, %v1725
  %v1756 = vpack.c.bf16 %v1726, %v1726
  %v1757 = vpack.c.bf16 %v1727, %v1727
  %v1758 = vpack.c.bf16 %v1728, %v1728
  %v1760 = vshll.u32 %v1743, 16
  %v1762 = vrot.slane %v1760, 6
  %v1764 = vshll.u32 %v1744, 16
  %v1766 = vrot.slane %v1764, 6
  %v1768 = vshll.u32 %v1745, 16
  %v1770 = vrot.slane %v1768, 6
  %v1772 = vshll.u32 %v1746, 16
  %v1774 = vrot.slane %v1772, 6
  %v1776 = vshll.u32 %v1747, 16
  %v1778 = vrot.slane %v1776, 6
  %v1780 = vshll.u32 %v1748, 16
  %v1782 = vrot.slane %v1780, 6
  %v1784 = vshll.u32 %v1749, 16
  %v1786 = vrot.slane %v1784, 6
  %v1788 = vshll.u32 %v1750, 16
  %v1790 = vrot.slane %v1788, 6
  %v1792 = vshll.u32 %v1751, 16
  %v1794 = vrot.slane %v1792, 6
  %v1796 = vshll.u32 %v1752, 16
  %v1798 = vrot.slane %v1796, 6
  %v1800 = vshll.u32 %v1753, 16
  %v1802 = vrot.slane %v1800, 6
  %v1804 = vshll.u32 %v1754, 16
  %v1806 = vrot.slane %v1804, 6
  %v1808 = vshll.u32 %v1755, 16
  %v1810 = vrot.slane %v1808, 6
  %v1812 = vshll.u32 %v1756, 16
  %v1814 = vrot.slane %v1812, 6
  %v1816 = vshll.u32 %v1757, 16
  %v1818 = vrot.slane %v1816, 6
  %v1820 = vshll.u32 %v1758, 16
  %v1822 = vrot.slane %v1820, 6
  %vm1839 = vsmask.f32 7946
  %vm1840 = vmand %vm1659, %vm1839
  %v1841 = vld [vmem:[#allocation3] sm:$0x4]
  %v1842 = vsel %vm1840, %v1762, %v1841
  %1843 = vst [vmem:[#allocation3] sm:$0x4] %v1842
  %v1844 = vld [vmem:[#allocation3 + $0x40] sm:$0x4]
  %v1845 = vsel %vm1840, %v1766, %v1844
  %1846 = vst [vmem:[#allocation3 + $0x40] sm:$0x4] %v1845
  %v1847 = vld [vmem:[#allocation3 + $0x80] sm:$0x4]
  %v1848 = vsel %vm1840, %v1770, %v1847
  %1849 = vst [vmem:[#allocation3 + $0x80] sm:$0x4] %v1848
  %v1850 = vld [vmem:[#allocation3 + $0xc0] sm:$0x4]
  %v1851 = vsel %vm1840, %v1774, %v1850
  %1852 = vst [vmem:[#allocation3 + $0xc0] sm:$0x4] %v1851
  %v1853 = vld [vmem:[#allocation3 + $0x100] sm:$0x4]
  %v1854 = vsel %vm1840, %v1778, %v1853
  %1855 = vst [vmem:[#allocation3 + $0x100] sm:$0x4] %v1854
  %v1856 = vld [vmem:[#allocation3 + $0x140] sm:$0x4]
  %v1857 = vsel %vm1840, %v1782, %v1856
  %1858 = vst [vmem:[#allocation3 + $0x140] sm:$0x4] %v1857
  %v1859 = vld [vmem:[#allocation3 + $0x180] sm:$0x4]
  %v1860 = vsel %vm1840, %v1786, %v1859
  %1861 = vst [vmem:[#allocation3 + $0x180] sm:$0x4] %v1860
  %v1862 = vld [vmem:[#allocation3 + $0x1c0] sm:$0x4]
  %v1863 = vsel %vm1840, %v1790, %v1862
  %1864 = vst [vmem:[#allocation3 + $0x1c0] sm:$0x4] %v1863
  %v1865 = vld [vmem:[#allocation3 + $0x200] sm:$0x4]
  %v1866 = vsel %vm1840, %v1794, %v1865
  %1867 = vst [vmem:[#allocation3 + $0x200] sm:$0x4] %v1866
  %v1868 = vld [vmem:[#allocation3 + $0x240] sm:$0x4]
  %v1869 = vsel %vm1840, %v1798, %v1868
  %1870 = vst [vmem:[#allocation3 + $0x240] sm:$0x4] %v1869
  %v1871 = vld [vmem:[#allocation3 + $0x280] sm:$0x4]
  %v1872 = vsel %vm1840, %v1802, %v1871
  %1873 = vst [vmem:[#allocation3 + $0x280] sm:$0x4] %v1872
  %v1874 = vld [vmem:[#allocation3 + $0x2c0] sm:$0x4]
  %v1875 = vsel %vm1840, %v1806, %v1874
  %1876 = vst [vmem:[#allocation3 + $0x2c0] sm:$0x4] %v1875
  %v1877 = vld [vmem:[#allocation3 + $0x300] sm:$0x4]
  %v1878 = vsel %vm1840, %v1810, %v1877
  %1879 = vst [vmem:[#allocation3 + $0x300] sm:$0x4] %v1878
  %v1880 = vld [vmem:[#allocation3 + $0x340] sm:$0x4]
  %v1881 = vsel %vm1840, %v1814, %v1880
  %1882 = vst [vmem:[#allocation3 + $0x340] sm:$0x4] %v1881
  %v1883 = vld [vmem:[#allocation3 + $0x380] sm:$0x4]
  %v1884 = vsel %vm1840, %v1818, %v1883
  %1885 = vst [vmem:[#allocation3 + $0x380] sm:$0x4] %v1884
  %v1886 = vld [vmem:[#allocation3 + $0x3c0] sm:$0x4]
  %v1887 = vsel %vm1840, %v1822, %v1886
  %1888 = vst [vmem:[#allocation3 + $0x3c0] sm:$0x4] %v1887
  %s1889 = scalar_lea.vmem %s15, 96
  %v1890 = vld [vmem:[%s1889] sm:$0xff]
  %v1891 = vld [vmem:[%s1889 + $0x8] sm:$0xff]
  %v1894 = vrot.slane %v1890, 1
  %v1895 = vrot.slane %v1890, 2
  %v1896 = vrot.slane %v1890, 3
  %v1897 = vrot.slane %v1890, 4
  %v1898 = vrot.slane %v1890, 5
  %v1899 = vrot.slane %v1890, 6
  %v1900 = vrot.slane %v1890, 7
  %v1901 = vrot.slane %v1891, 1
  %v1902 = vrot.slane %v1891, 2
  %v1903 = vrot.slane %v1891, 3
  %v1904 = vrot.slane %v1891, 4
  %v1905 = vrot.slane %v1891, 5
  %v1906 = vrot.slane %v1891, 6
  %v1907 = vrot.slane %v1891, 7
  %v1922 = vpack.c.bf16 %v1890, %v1890
  %v1923 = vpack.c.bf16 %v1894, %v1894
  %v1924 = vpack.c.bf16 %v1895, %v1895
  %v1925 = vpack.c.bf16 %v1896, %v1896
  %v1926 = vpack.c.bf16 %v1897, %v1897
  %v1927 = vpack.c.bf16 %v1898, %v1898
  %v1928 = vpack.c.bf16 %v1899, %v1899
  %v1929 = vpack.c.bf16 %v1900, %v1900
  %v1930 = vpack.c.bf16 %v1891, %v1891
  %v1931 = vpack.c.bf16 %v1901, %v1901
  %v1932 = vpack.c.bf16 %v1902, %v1902
  %v1933 = vpack.c.bf16 %v1903, %v1903
  %v1934 = vpack.c.bf16 %v1904, %v1904
  %v1935 = vpack.c.bf16 %v1905, %v1905
  %v1936 = vpack.c.bf16 %v1906, %v1906
  %v1937 = vpack.c.bf16 %v1907, %v1907
  %v1954 = vrot.slane %v1922, 5
  %v1955 = vrot.slane %v1923, 5
  %v1956 = vrot.slane %v1924, 5
  %v1957 = vrot.slane %v1925, 5
  %v1958 = vrot.slane %v1926, 5
  %v1959 = vrot.slane %v1927, 5
  %v1960 = vrot.slane %v1928, 5
  %v1961 = vrot.slane %v1929, 5
  %v1962 = vrot.slane %v1930, 5
  %v1963 = vrot.slane %v1931, 5
  %v1964 = vrot.slane %v1932, 5
  %v1965 = vrot.slane %v1933, 5
  %v1966 = vrot.slane %v1934, 5
  %v1967 = vrot.slane %v1935, 5
  %v1968 = vrot.slane %v1936, 5
  %v1969 = vrot.slane %v1937, 5
  %vm1986 = vcmask 1043459
  %vm1987 = vsmask.f32 3328
  %vm1988 = vmand %vm1986, %vm1987
  %v1989 = vld [vmem:[#allocation3] sm:$0x8]
  %v1990 = vsel %vm1988, %v1954, %v1989
  %1991 = vst [vmem:[#allocation3] sm:$0x8] %v1990
  %v1992 = vld [vmem:[#allocation3 + $0x40] sm:$0x8]
  %v1993 = vsel %vm1988, %v1955, %v1992
  %1994 = vst [vmem:[#allocation3 + $0x40] sm:$0x8] %v1993
  %v1995 = vld [vmem:[#allocation3 + $0x80] sm:$0x8]
  %v1996 = vsel %vm1988, %v1956, %v1995
  %1997 = vst [vmem:[#allocation3 + $0x80] sm:$0x8] %v1996
  %v1998 = vld [vmem:[#allocation3 + $0xc0] sm:$0x8]
  %v1999 = vsel %vm1988, %v1957, %v1998
  %2000 = vst [vmem:[#allocation3 + $0xc0] sm:$0x8] %v1999
  %v2001 = vld [vmem:[#allocation3 + $0x100] sm:$0x8]
  %v2002 = vsel %vm1988, %v1958, %v2001
  %2003 = vst [vmem:[#allocation3 + $0x100] sm:$0x8] %v2002
  %v2004 = vld [vmem:[#allocation3 + $0x140] sm:$0x8]
  %v2005 = vsel %vm1988, %v1959, %v2004
  %2006 = vst [vmem:[#allocation3 + $0x140] sm:$0x8] %v2005
  %v2007 = vld [vmem:[#allocation3 + $0x180] sm:$0x8]
  %v2008 = vsel %vm1988, %v1960, %v2007
  %2009 = vst [vmem:[#allocation3 + $0x180] sm:$0x8] %v2008
  %v2010 = vld [vmem:[#allocation3 + $0x1c0] sm:$0x8]
  %v2011 = vsel %vm1988, %v1961, %v2010
  %2012 = vst [vmem:[#allocation3 + $0x1c0] sm:$0x8] %v2011
  %v2013 = vld [vmem:[#allocation3 + $0x200] sm:$0x8]
  %v2014 = vsel %vm1988, %v1962, %v2013
  %2015 = vst [vmem:[#allocation3 + $0x200] sm:$0x8] %v2014
  %v2016 = vld [vmem:[#allocation3 + $0x240] sm:$0x8]
  %v2017 = vsel %vm1988, %v1963, %v2016
  %2018 = vst [vmem:[#allocation3 + $0x240] sm:$0x8] %v2017
  %v2019 = vld [vmem:[#allocation3 + $0x280] sm:$0x8]
  %v2020 = vsel %vm1988, %v1964, %v2019
  %2021 = vst [vmem:[#allocation3 + $0x280] sm:$0x8] %v2020
  %v2022 = vld [vmem:[#allocation3 + $0x2c0] sm:$0x8]
  %v2023 = vsel %vm1988, %v1965, %v2022
  %2024 = vst [vmem:[#allocation3 + $0x2c0] sm:$0x8] %v2023
  %v2025 = vld [vmem:[#allocation3 + $0x300] sm:$0x8]
  %v2026 = vsel %vm1988, %v1966, %v2025
  %2027 = vst [vmem:[#allocation3 + $0x300] sm:$0x8] %v2026
  %v2028 = vld [vmem:[#allocation3 + $0x340] sm:$0x8]
  %v2029 = vsel %vm1988, %v1967, %v2028
  %2030 = vst [vmem:[#allocation3 + $0x340] sm:$0x8] %v2029
  %v2031 = vld [vmem:[#allocation3 + $0x380] sm:$0x8]
  %v2032 = vsel %vm1988, %v1968, %v2031
  %2033 = vst [vmem:[#allocation3 + $0x380] sm:$0x8] %v2032
  %v2034 = vld [vmem:[#allocation3 + $0x3c0] sm:$0x8]
  %v2035 = vsel %vm1988, %v1969, %v2034
  %2036 = vst [vmem:[#allocation3 + $0x3c0] sm:$0x8] %v2035
  %s2037 = scalar_lea.vmem %s15, 112
  %v2038 = vld [vmem:[%s2037] sm:$0xff]
  %v2039 = vld [vmem:[%s2037 + $0x8] sm:$0xff]
  %v2042 = vrot.slane %v2038, 1
  %v2043 = vrot.slane %v2038, 2
  %v2044 = vrot.slane %v2038, 3
  %v2045 = vrot.slane %v2038, 4
  %v2046 = vrot.slane %v2038, 5
  %v2047 = vrot.slane %v2038, 6
  %v2048 = vrot.slane %v2038, 7
  %v2049 = vrot.slane %v2039, 1
  %v2050 = vrot.slane %v2039, 2
  %v2051 = vrot.slane %v2039, 3
  %v2052 = vrot.slane %v2039, 4
  %v2053 = vrot.slane %v2039, 5
  %v2054 = vrot.slane %v2039, 6
  %v2055 = vrot.slane %v2039, 7
  %v2070 = vpack.c.bf16 %v2038, %v2038
  %v2071 = vpack.c.bf16 %v2042, %v2042
  %v2072 = vpack.c.bf16 %v2043, %v2043
  %v2073 = vpack.c.bf16 %v2044, %v2044
  %v2074 = vpack.c.bf16 %v2045, %v2045
  %v2075 = vpack.c.bf16 %v2046, %v2046
  %v2076 = vpack.c.bf16 %v2047, %v2047
  %v2077 = vpack.c.bf16 %v2048, %v2048
  %v2078 = vpack.c.bf16 %v2039, %v2039
  %v2079 = vpack.c.bf16 %v2049, %v2049
  %v2080 = vpack.c.bf16 %v2050, %v2050
  %v2081 = vpack.c.bf16 %v2051, %v2051
  %v2082 = vpack.c.bf16 %v2052, %v2052
  %v2083 = vpack.c.bf16 %v2053, %v2053
  %v2084 = vpack.c.bf16 %v2054, %v2054
  %v2085 = vpack.c.bf16 %v2055, %v2055
  %v2087 = vshll.u32 %v2070, 16
  %v2089 = vrot.slane %v2087, 5
  %v2091 = vshll.u32 %v2071, 16
  %v2093 = vrot.slane %v2091, 5
  %v2095 = vshll.u32 %v2072, 16
  %v2097 = vrot.slane %v2095, 5
  %v2099 = vshll.u32 %v2073, 16
  %v2101 = vrot.slane %v2099, 5
  %v2103 = vshll.u32 %v2074, 16
  %v2105 = vrot.slane %v2103, 5
  %v2107 = vshll.u32 %v2075, 16
  %v2109 = vrot.slane %v2107, 5
  %v2111 = vshll.u32 %v2076, 16
  %v2113 = vrot.slane %v2111, 5
  %v2115 = vshll.u32 %v2077, 16
  %v2117 = vrot.slane %v2115, 5
  %v2119 = vshll.u32 %v2078, 16
  %v2121 = vrot.slane %v2119, 5
  %v2123 = vshll.u32 %v2079, 16
  %v2125 = vrot.slane %v2123, 5
  %v2127 = vshll.u32 %v2080, 16
  %v2129 = vrot.slane %v2127, 5
  %v2131 = vshll.u32 %v2081, 16
  %v2133 = vrot.slane %v2131, 5
  %v2135 = vshll.u32 %v2082, 16
  %v2137 = vrot.slane %v2135, 5
  %v2139 = vshll.u32 %v2083, 16
  %v2141 = vrot.slane %v2139, 5
  %v2143 = vshll.u32 %v2084, 16
  %v2145 = vrot.slane %v2143, 5
  %v2147 = vshll.u32 %v2085, 16
  %v2149 = vrot.slane %v2147, 5
  %vm2166 = vsmask.f32 7950
  %vm2167 = vmand %vm1986, %vm2166
  %v2168 = vld [vmem:[#allocation3] sm:$0x8]
  %v2169 = vsel %vm2167, %v2089, %v2168
  %2170 = vst [vmem:[#allocation3] sm:$0x8] %v2169
  %v2171 = vld [vmem:[#allocation3 + $0x40] sm:$0x8]
  %v2172 = vsel %vm2167, %v2093, %v2171
  %2173 = vst [vmem:[#allocation3 + $0x40] sm:$0x8] %v2172
  %v2174 = vld [vmem:[#allocation3 + $0x80] sm:$0x8]
  %v2175 = vsel %vm2167, %v2097, %v2174
  %2176 = vst [vmem:[#allocation3 + $0x80] sm:$0x8] %v2175
  %v2177 = vld [vmem:[#allocation3 + $0xc0] sm:$0x8]
  %v2178 = vsel %vm2167, %v2101, %v2177
  %2179 = vst [vmem:[#allocation3 + $0xc0] sm:$0x8] %v2178
  %v2180 = vld [vmem:[#allocation3 + $0x100] sm:$0x8]
  %v2181 = vsel %vm2167, %v2105, %v2180
  %2182 = vst [vmem:[#allocation3 + $0x100] sm:$0x8] %v2181
  %v2183 = vld [vmem:[#allocation3 + $0x140] sm:$0x8]
  %v2184 = vsel %vm2167, %v2109, %v2183
  %2185 = vst [vmem:[#allocation3 + $0x140] sm:$0x8] %v2184
  %v2186 = vld [vmem:[#allocation3 + $0x180] sm:$0x8]
  %v2187 = vsel %vm2167, %v2113, %v2186
  %2188 = vst [vmem:[#allocation3 + $0x180] sm:$0x8] %v2187
  %v2189 = vld [vmem:[#allocation3 + $0x1c0] sm:$0x8]
  %v2190 = vsel %vm2167, %v2117, %v2189
  %2191 = vst [vmem:[#allocation3 + $0x1c0] sm:$0x8] %v2190
  %v2192 = vld [vmem:[#allocation3 + $0x200] sm:$0x8]
  %v2193 = vsel %vm2167, %v2121, %v2192
  %2194 = vst [vmem:[#allocation3 + $0x200] sm:$0x8] %v2193
  %v2195 = vld [vmem:[#allocation3 + $0x240] sm:$0x8]
  %v2196 = vsel %vm2167, %v2125, %v2195
  %2197 = vst [vmem:[#allocation3 + $0x240] sm:$0x8] %v2196
  %v2198 = vld [vmem:[#allocation3 + $0x280] sm:$0x8]
  %v2199 = vsel %vm2167, %v2129, %v2198
  %2200 = vst [vmem:[#allocation3 + $0x280] sm:$0x8] %v2199
  %v2201 = vld [vmem:[#allocation3 + $0x2c0] sm:$0x8]
  %v2202 = vsel %vm2167, %v2133, %v2201
  %2203 = vst [vmem:[#allocation3 + $0x2c0] sm:$0x8] %v2202
  %v2204 = vld [vmem:[#allocation3 + $0x300] sm:$0x8]
  %v2205 = vsel %vm2167, %v2137, %v2204
  %2206 = vst [vmem:[#allocation3 + $0x300] sm:$0x8] %v2205
  %v2207 = vld [vmem:[#allocation3 + $0x340] sm:$0x8]
  %v2208 = vsel %vm2167, %v2141, %v2207
  %2209 = vst [vmem:[#allocation3 + $0x340] sm:$0x8] %v2208
  %v2210 = vld [vmem:[#allocation3 + $0x380] sm:$0x8]
  %v2211 = vsel %vm2167, %v2145, %v2210
  %2212 = vst [vmem:[#allocation3 + $0x380] sm:$0x8] %v2211
  %v2213 = vld [vmem:[#allocation3 + $0x3c0] sm:$0x8]
  %v2214 = vsel %vm2167, %v2149, %v2213
  %2215 = vst [vmem:[#allocation3 + $0x3c0] sm:$0x8] %v2214
  %s2216 = scalar_lea.vmem %s15, 128
  %v2217 = vld [vmem:[%s2216] sm:$0xff]
  %v2218 = vld [vmem:[%s2216 + $0x8] sm:$0xff]
  %v2221 = vrot.slane %v2217, 1
  %v2222 = vrot.slane %v2217, 2
  %v2223 = vrot.slane %v2217, 3
  %v2224 = vrot.slane %v2217, 4
  %v2225 = vrot.slane %v2217, 5
  %v2226 = vrot.slane %v2217, 6
  %v2227 = vrot.slane %v2217, 7
  %v2228 = vrot.slane %v2218, 1
  %v2229 = vrot.slane %v2218, 2
  %v2230 = vrot.slane %v2218, 3
  %v2231 = vrot.slane %v2218, 4
  %v2232 = vrot.slane %v2218, 5
  %v2233 = vrot.slane %v2218, 6
  %v2234 = vrot.slane %v2218, 7
  %v2249 = vpack.c.bf16 %v2217, %v2217
  %v2250 = vpack.c.bf16 %v2221, %v2221
  %v2251 = vpack.c.bf16 %v2222, %v2222
  %v2252 = vpack.c.bf16 %v2223, %v2223
  %v2253 = vpack.c.bf16 %v2224, %v2224
  %v2254 = vpack.c.bf16 %v2225, %v2225
  %v2255 = vpack.c.bf16 %v2226, %v2226
  %v2256 = vpack.c.bf16 %v2227, %v2227
  %v2257 = vpack.c.bf16 %v2218, %v2218
  %v2258 = vpack.c.bf16 %v2228, %v2228
  %v2259 = vpack.c.bf16 %v2229, %v2229
  %v2260 = vpack.c.bf16 %v2230, %v2230
  %v2261 = vpack.c.bf16 %v2231, %v2231
  %v2262 = vpack.c.bf16 %v2232, %v2232
  %v2263 = vpack.c.bf16 %v2233, %v2233
  %v2264 = vpack.c.bf16 %v2234, %v2234
  %v2265 = vld [vmem:[#allocation3 + $0x4] sm:$0x1]
  %v2266 = vsel %vm1023, %v2249, %v2265
  %2267 = vst [vmem:[#allocation3 + $0x4] sm:$0x1] %v2266
  %v2268 = vld [vmem:[#allocation3 + $0x44] sm:$0x1]
  %v2269 = vsel %vm1023, %v2250, %v2268
  %2270 = vst [vmem:[#allocation3 + $0x44] sm:$0x1] %v2269
  %v2271 = vld [vmem:[#allocation3 + $0x84] sm:$0x1]
  %v2272 = vsel %vm1023, %v2251, %v2271
  %2273 = vst [vmem:[#allocation3 + $0x84] sm:$0x1] %v2272
  %v2274 = vld [vmem:[#allocation3 + $0xc4] sm:$0x1]
  %v2275 = vsel %vm1023, %v2252, %v2274
  %2276 = vst [vmem:[#allocation3 + $0xc4] sm:$0x1] %v2275
  %v2277 = vld [vmem:[#allocation3 + $0x104] sm:$0x1]
  %v2278 = vsel %vm1023, %v2253, %v2277
  %2279 = vst [vmem:[#allocation3 + $0x104] sm:$0x1] %v2278
  %v2280 = vld [vmem:[#allocation3 + $0x144] sm:$0x1]
  %v2281 = vsel %vm1023, %v2254, %v2280
  %2282 = vst [vmem:[#allocation3 + $0x144] sm:$0x1] %v2281
  %v2283 = vld [vmem:[#allocation3 + $0x184] sm:$0x1]
  %v2284 = vsel %vm1023, %v2255, %v2283
  %2285 = vst [vmem:[#allocation3 + $0x184] sm:$0x1] %v2284
  %v2286 = vld [vmem:[#allocation3 + $0x1c4] sm:$0x1]
  %v2287 = vsel %vm1023, %v2256, %v2286
  %2288 = vst [vmem:[#allocation3 + $0x1c4] sm:$0x1] %v2287
  %v2289 = vld [vmem:[#allocation3 + $0x204] sm:$0x1]
  %v2290 = vsel %vm1023, %v2257, %v2289
  %2291 = vst [vmem:[#allocation3 + $0x204] sm:$0x1] %v2290
  %v2292 = vld [vmem:[#allocation3 + $0x244] sm:$0x1]
  %v2293 = vsel %vm1023, %v2258, %v2292
  %2294 = vst [vmem:[#allocation3 + $0x244] sm:$0x1] %v2293
  %v2295 = vld [vmem:[#allocation3 + $0x284] sm:$0x1]
  %v2296 = vsel %vm1023, %v2259, %v2295
  %2297 = vst [vmem:[#allocation3 + $0x284] sm:$0x1] %v2296
  %v2298 = vld [vmem:[#allocation3 + $0x2c4] sm:$0x1]
  %v2299 = vsel %vm1023, %v2260, %v2298
  %2300 = vst [vmem:[#allocation3 + $0x2c4] sm:$0x1] %v2299
  %v2301 = vld [vmem:[#allocation3 + $0x304] sm:$0x1]
  %v2302 = vsel %vm1023, %v2261, %v2301
  %2303 = vst [vmem:[#allocation3 + $0x304] sm:$0x1] %v2302
  %v2304 = vld [vmem:[#allocation3 + $0x344] sm:$0x1]
  %v2305 = vsel %vm1023, %v2262, %v2304
  %2306 = vst [vmem:[#allocation3 + $0x344] sm:$0x1] %v2305
  %v2307 = vld [vmem:[#allocation3 + $0x384] sm:$0x1]
  %v2308 = vsel %vm1023, %v2263, %v2307
  %2309 = vst [vmem:[#allocation3 + $0x384] sm:$0x1] %v2308
  %v2310 = vld [vmem:[#allocation3 + $0x3c4] sm:$0x1]
  %v2311 = vsel %vm1023, %v2264, %v2310
  %2312 = vst [vmem:[#allocation3 + $0x3c4] sm:$0x1] %v2311
  %s2313 = scalar_lea.vmem %s15, 144
  %v2314 = vld [vmem:[%s2313] sm:$0xff]
  %v2315 = vld [vmem:[%s2313 + $0x8] sm:$0xff]
  %v2318 = vrot.slane %v2314, 1
  %v2319 = vrot.slane %v2314, 2
  %v2320 = vrot.slane %v2314, 3
  %v2321 = vrot.slane %v2314, 4
  %v2322 = vrot.slane %v2314, 5
  %v2323 = vrot.slane %v2314, 6
  %v2324 = vrot.slane %v2314, 7
  %v2325 = vrot.slane %v2315, 1
  %v2326 = vrot.slane %v2315, 2
  %v2327 = vrot.slane %v2315, 3
  %v2328 = vrot.slane %v2315, 4
  %v2329 = vrot.slane %v2315, 5
  %v2330 = vrot.slane %v2315, 6
  %v2331 = vrot.slane %v2315, 7
  %v2346 = vpack.c.bf16 %v2314, %v2314
  %v2347 = vpack.c.bf16 %v2318, %v2318
  %v2348 = vpack.c.bf16 %v2319, %v2319
  %v2349 = vpack.c.bf16 %v2320, %v2320
  %v2350 = vpack.c.bf16 %v2321, %v2321
  %v2351 = vpack.c.bf16 %v2322, %v2322
  %v2352 = vpack.c.bf16 %v2323, %v2323
  %v2353 = vpack.c.bf16 %v2324, %v2324
  %v2354 = vpack.c.bf16 %v2315, %v2315
  %v2355 = vpack.c.bf16 %v2325, %v2325
  %v2356 = vpack.c.bf16 %v2326, %v2326
  %v2357 = vpack.c.bf16 %v2327, %v2327
  %v2358 = vpack.c.bf16 %v2328, %v2328
  %v2359 = vpack.c.bf16 %v2329, %v2329
  %v2360 = vpack.c.bf16 %v2330, %v2330
  %v2361 = vpack.c.bf16 %v2331, %v2331
  %v2363 = vshll.u32 %v2346, 16
  %v2366 = vshll.u32 %v2347, 16
  %v2369 = vshll.u32 %v2348, 16
  %v2372 = vshll.u32 %v2349, 16
  %v2375 = vshll.u32 %v2350, 16
  %v2378 = vshll.u32 %v2351, 16
  %v2381 = vshll.u32 %v2352, 16
  %v2384 = vshll.u32 %v2353, 16
  %v2387 = vshll.u32 %v2354, 16
  %v2390 = vshll.u32 %v2355, 16
  %v2393 = vshll.u32 %v2356, 16
  %v2396 = vshll.u32 %v2357, 16
  %v2399 = vshll.u32 %v2358, 16
  %v2402 = vshll.u32 %v2359, 16
  %v2405 = vshll.u32 %v2360, 16
  %v2408 = vshll.u32 %v2361, 16
  %v2426 = vld [vmem:[#allocation3 + $0x4] sm:$0x1]
  %v2427 = vsel %vm1186, %v2363, %v2426
  %2428 = vst [vmem:[#allocation3 + $0x4] sm:$0x1] %v2427
  %v2429 = vld [vmem:[#allocation3 + $0x44] sm:$0x1]
  %v2430 = vsel %vm1186, %v2366, %v2429
  %2431 = vst [vmem:[#allocation3 + $0x44] sm:$0x1] %v2430
  %v2432 = vld [vmem:[#allocation3 + $0x84] sm:$0x1]
  %v2433 = vsel %vm1186, %v2369, %v2432
  %2434 = vst [vmem:[#allocation3 + $0x84] sm:$0x1] %v2433
  %v2435 = vld [vmem:[#allocation3 + $0xc4] sm:$0x1]
  %v2436 = vsel %vm1186, %v2372, %v2435
  %2437 = vst [vmem:[#allocation3 + $0xc4] sm:$0x1] %v2436
  %v2438 = vld [vmem:[#allocation3 + $0x104] sm:$0x1]
  %v2439 = vsel %vm1186, %v2375, %v2438
  %2440 = vst [vmem:[#allocation3 + $0x104] sm:$0x1] %v2439
  %v2441 = vld [vmem:[#allocation3 + $0x144] sm:$0x1]
  %v2442 = vsel %vm1186, %v2378, %v2441
  %2443 = vst [vmem:[#allocation3 + $0x144] sm:$0x1] %v2442
  %v2444 = vld [vmem:[#allocation3 + $0x184] sm:$0x1]
  %v2445 = vsel %vm1186, %v2381, %v2444
  %2446 = vst [vmem:[#allocation3 + $0x184] sm:$0x1] %v2445
  %v2447 = vld [vmem:[#allocation3 + $0x1c4] sm:$0x1]
  %v2448 = vsel %vm1186, %v2384, %v2447
  %2449 = vst [vmem:[#allocation3 + $0x1c4] sm:$0x1] %v2448
  %v2450 = vld [vmem:[#allocation3 + $0x204] sm:$0x1]
  %v2451 = vsel %vm1186, %v2387, %v2450
  %2452 = vst [vmem:[#allocation3 + $0x204] sm:$0x1] %v2451
  %v2453 = vld [vmem:[#allocation3 + $0x244] sm:$0x1]
  %v2454 = vsel %vm1186, %v2390, %v2453
  %2455 = vst [vmem:[#allocation3 + $0x244] sm:$0x1] %v2454
  %v2456 = vld [vmem:[#allocation3 + $0x284] sm:$0x1]
  %v2457 = vsel %vm1186, %v2393, %v2456
  %2458 = vst [vmem:[#allocation3 + $0x284] sm:$0x1] %v2457
  %v2459 = vld [vmem:[#allocation3 + $0x2c4] sm:$0x1]
  %v2460 = vsel %vm1186, %v2396, %v2459
  %2461 = vst [vmem:[#allocation3 + $0x2c4] sm:$0x1] %v2460
  %v2462 = vld [vmem:[#allocation3 + $0x304] sm:$0x1]
  %v2463 = vsel %vm1186, %v2399, %v2462
  %2464 = vst [vmem:[#allocation3 + $0x304] sm:$0x1] %v2463
  %v2465 = vld [vmem:[#allocation3 + $0x344] sm:$0x1]
  %v2466 = vsel %vm1186, %v2402, %v2465
  %2467 = vst [vmem:[#allocation3 + $0x344] sm:$0x1] %v2466
  %v2468 = vld [vmem:[#allocation3 + $0x384] sm:$0x1]
  %v2469 = vsel %vm1186, %v2405, %v2468
  %2470 = vst [vmem:[#allocation3 + $0x384] sm:$0x1] %v2469
  %v2471 = vld [vmem:[#allocation3 + $0x3c4] sm:$0x1]
  %v2472 = vsel %vm1186, %v2408, %v2471
  %2473 = vst [vmem:[#allocation3 + $0x3c4] sm:$0x1] %v2472
  %s2474 = scalar_lea.vmem %s15, 160
  %v2475 = vld [vmem:[%s2474] sm:$0xff]
  %v2476 = vld [vmem:[%s2474 + $0x8] sm:$0xff]
  %v2479 = vrot.slane %v2475, 1
  %v2480 = vrot.slane %v2475, 2
  %v2481 = vrot.slane %v2475, 3
  %v2482 = vrot.slane %v2475, 4
  %v2483 = vrot.slane %v2475, 5
  %v2484 = vrot.slane %v2475, 6
  %v2485 = vrot.slane %v2475, 7
  %v2486 = vrot.slane %v2476, 1
  %v2487 = vrot.slane %v2476, 2
  %v2488 = vrot.slane %v2476, 3
  %v2489 = vrot.slane %v2476, 4
  %v2490 = vrot.slane %v2476, 5
  %v2491 = vrot.slane %v2476, 6
  %v2492 = vrot.slane %v2476, 7
  %v2507 = vpack.c.bf16 %v2475, %v2475
  %v2508 = vpack.c.bf16 %v2479, %v2479
  %v2509 = vpack.c.bf16 %v2480, %v2480
  %v2510 = vpack.c.bf16 %v2481, %v2481
  %v2511 = vpack.c.bf16 %v2482, %v2482
  %v2512 = vpack.c.bf16 %v2483, %v2483
  %v2513 = vpack.c.bf16 %v2484, %v2484
  %v2514 = vpack.c.bf16 %v2485, %v2485
  %v2515 = vpack.c.bf16 %v2476, %v2476
  %v2516 = vpack.c.bf16 %v2486, %v2486
  %v2517 = vpack.c.bf16 %v2487, %v2487
  %v2518 = vpack.c.bf16 %v2488, %v2488
  %v2519 = vpack.c.bf16 %v2489, %v2489
  %v2520 = vpack.c.bf16 %v2490, %v2490
  %v2521 = vpack.c.bf16 %v2491, %v2491
  %v2522 = vpack.c.bf16 %v2492, %v2492
  %v2539 = vrot.slane %v2507, 7
  %v2540 = vrot.slane %v2508, 7
  %v2541 = vrot.slane %v2509, 7
  %v2542 = vrot.slane %v2510, 7
  %v2543 = vrot.slane %v2511, 7
  %v2544 = vrot.slane %v2512, 7
  %v2545 = vrot.slane %v2513, 7
  %v2546 = vrot.slane %v2514, 7
  %v2547 = vrot.slane %v2515, 7
  %v2548 = vrot.slane %v2516, 7
  %v2549 = vrot.slane %v2517, 7
  %v2550 = vrot.slane %v2518, 7
  %v2551 = vrot.slane %v2519, 7
  %v2552 = vrot.slane %v2520, 7
  %v2553 = vrot.slane %v2521, 7
  %v2554 = vrot.slane %v2522, 7
  %v2571 = vld [vmem:[#allocation3 + $0x4] sm:$0x2]
  %v2572 = vsel %vm1334, %v2539, %v2571
  %2573 = vst [vmem:[#allocation3 + $0x4] sm:$0x2] %v2572
  %v2574 = vld [vmem:[#allocation3 + $0x44] sm:$0x2]
  %v2575 = vsel %vm1334, %v2540, %v2574
  %2576 = vst [vmem:[#allocation3 + $0x44] sm:$0x2] %v2575
  %v2577 = vld [vmem:[#allocation3 + $0x84] sm:$0x2]
  %v2578 = vsel %vm1334, %v2541, %v2577
  %2579 = vst [vmem:[#allocation3 + $0x84] sm:$0x2] %v2578
  %v2580 = vld [vmem:[#allocation3 + $0xc4] sm:$0x2]
  %v2581 = vsel %vm1334, %v2542, %v2580
  %2582 = vst [vmem:[#allocation3 + $0xc4] sm:$0x2] %v2581
  %v2583 = vld [vmem:[#allocation3 + $0x104] sm:$0x2]
  %v2584 = vsel %vm1334, %v2543, %v2583
  %2585 = vst [vmem:[#allocation3 + $0x104] sm:$0x2] %v2584
  %v2586 = vld [vmem:[#allocation3 + $0x144] sm:$0x2]
  %v2587 = vsel %vm1334, %v2544, %v2586
  %2588 = vst [vmem:[#allocation3 + $0x144] sm:$0x2] %v2587
  %v2589 = vld [vmem:[#allocation3 + $0x184] sm:$0x2]
  %v2590 = vsel %vm1334, %v2545, %v2589
  %2591 = vst [vmem:[#allocation3 + $0x184] sm:$0x2] %v2590
  %v2592 = vld [vmem:[#allocation3 + $0x1c4] sm:$0x2]
  %v2593 = vsel %vm1334, %v2546, %v2592
  %2594 = vst [vmem:[#allocation3 + $0x1c4] sm:$0x2] %v2593
  %v2595 = vld [vmem:[#allocation3 + $0x204] sm:$0x2]
  %v2596 = vsel %vm1334, %v2547, %v2595
  %2597 = vst [vmem:[#allocation3 + $0x204] sm:$0x2] %v2596
  %v2598 = vld [vmem:[#allocation3 + $0x244] sm:$0x2]
  %v2599 = vsel %vm1334, %v2548, %v2598
  %2600 = vst [vmem:[#allocation3 + $0x244] sm:$0x2] %v2599
  %v2601 = vld [vmem:[#allocation3 + $0x284] sm:$0x2]
  %v2602 = vsel %vm1334, %v2549, %v2601
  %2603 = vst [vmem:[#allocation3 + $0x284] sm:$0x2] %v2602
  %v2604 = vld [vmem:[#allocation3 + $0x2c4] sm:$0x2]
  %v2605 = vsel %vm1334, %v2550, %v2604
  %2606 = vst [vmem:[#allocation3 + $0x2c4] sm:$0x2] %v2605
  %v2607 = vld [vmem:[#allocation3 + $0x304] sm:$0x2]
  %v2608 = vsel %vm1334, %v2551, %v2607
  %2609 = vst [vmem:[#allocation3 + $0x304] sm:$0x2] %v2608
  %v2610 = vld [vmem:[#allocation3 + $0x344] sm:$0x2]
  %v2611 = vsel %vm1334, %v2552, %v2610
  %2612 = vst [vmem:[#allocation3 + $0x344] sm:$0x2] %v2611
  %v2613 = vld [vmem:[#allocation3 + $0x384] sm:$0x2]
  %v2614 = vsel %vm1334, %v2553, %v2613
  %2615 = vst [vmem:[#allocation3 + $0x384] sm:$0x2] %v2614
  %v2616 = vld [vmem:[#allocation3 + $0x3c4] sm:$0x2]
  %v2617 = vsel %vm1334, %v2554, %v2616
  %2618 = vst [vmem:[#allocation3 + $0x3c4] sm:$0x2] %v2617
  %s2619 = scalar_lea.vmem %s15, 176
  %v2620 = vld [vmem:[%s2619] sm:$0xff]
  %v2621 = vld [vmem:[%s2619 + $0x8] sm:$0xff]
  %v2624 = vrot.slane %v2620, 1
  %v2625 = vrot.slane %v2620, 2
  %v2626 = vrot.slane %v2620, 3
  %v2627 = vrot.slane %v2620, 4
  %v2628 = vrot.slane %v2620, 5
  %v2629 = vrot.slane %v2620, 6
  %v2630 = vrot.slane %v2620, 7
  %v2631 = vrot.slane %v2621, 1
  %v2632 = vrot.slane %v2621, 2
  %v2633 = vrot.slane %v2621, 3
  %v2634 = vrot.slane %v2621, 4
  %v2635 = vrot.slane %v2621, 5
  %v2636 = vrot.slane %v2621, 6
  %v2637 = vrot.slane %v2621, 7
  %v2652 = vpack.c.bf16 %v2620, %v2620
  %v2653 = vpack.c.bf16 %v2624, %v2624
  %v2654 = vpack.c.bf16 %v2625, %v2625
  %v2655 = vpack.c.bf16 %v2626, %v2626
  %v2656 = vpack.c.bf16 %v2627, %v2627
  %v2657 = vpack.c.bf16 %v2628, %v2628
  %v2658 = vpack.c.bf16 %v2629, %v2629
  %v2659 = vpack.c.bf16 %v2630, %v2630
  %v2660 = vpack.c.bf16 %v2621, %v2621
  %v2661 = vpack.c.bf16 %v2631, %v2631
  %v2662 = vpack.c.bf16 %v2632, %v2632
  %v2663 = vpack.c.bf16 %v2633, %v2633
  %v2664 = vpack.c.bf16 %v2634, %v2634
  %v2665 = vpack.c.bf16 %v2635, %v2635
  %v2666 = vpack.c.bf16 %v2636, %v2636
  %v2667 = vpack.c.bf16 %v2637, %v2637
  %v2669 = vshll.u32 %v2652, 16
  %v2671 = vrot.slane %v2669, 7
  %v2673 = vshll.u32 %v2653, 16
  %v2675 = vrot.slane %v2673, 7
  %v2677 = vshll.u32 %v2654, 16
  %v2679 = vrot.slane %v2677, 7
  %v2681 = vshll.u32 %v2655, 16
  %v2683 = vrot.slane %v2681, 7
  %v2685 = vshll.u32 %v2656, 16
  %v2687 = vrot.slane %v2685, 7
  %v2689 = vshll.u32 %v2657, 16
  %v2691 = vrot.slane %v2689, 7
  %v2693 = vshll.u32 %v2658, 16
  %v2695 = vrot.slane %v2693, 7
  %v2697 = vshll.u32 %v2659, 16
  %v2699 = vrot.slane %v2697, 7
  %v2701 = vshll.u32 %v2660, 16
  %v2703 = vrot.slane %v2701, 7
  %v2705 = vshll.u32 %v2661, 16
  %v2707 = vrot.slane %v2705, 7
  %v2709 = vshll.u32 %v2662, 16
  %v2711 = vrot.slane %v2709, 7
  %v2713 = vshll.u32 %v2663, 16
  %v2715 = vrot.slane %v2713, 7
  %v2717 = vshll.u32 %v2664, 16
  %v2719 = vrot.slane %v2717, 7
  %v2721 = vshll.u32 %v2665, 16
  %v2723 = vrot.slane %v2721, 7
  %v2725 = vshll.u32 %v2666, 16
  %v2727 = vrot.slane %v2725, 7
  %v2729 = vshll.u32 %v2667, 16
  %v2731 = vrot.slane %v2729, 7
  %v2748 = vld [vmem:[#allocation3 + $0x4] sm:$0x2]
  %v2749 = vsel %vm1513, %v2671, %v2748
  %2750 = vst [vmem:[#allocation3 + $0x4] sm:$0x2] %v2749
  %v2751 = vld [vmem:[#allocation3 + $0x44] sm:$0x2]
  %v2752 = vsel %vm1513, %v2675, %v2751
  %2753 = vst [vmem:[#allocation3 + $0x44] sm:$0x2] %v2752
  %v2754 = vld [vmem:[#allocation3 + $0x84] sm:$0x2]
  %v2755 = vsel %vm1513, %v2679, %v2754
  %2756 = vst [vmem:[#allocation3 + $0x84] sm:$0x2] %v2755
  %v2757 = vld [vmem:[#allocation3 + $0xc4] sm:$0x2]
  %v2758 = vsel %vm1513, %v2683, %v2757
  %2759 = vst [vmem:[#allocation3 + $0xc4] sm:$0x2] %v2758
  %v2760 = vld [vmem:[#allocation3 + $0x104] sm:$0x2]
  %v2761 = vsel %vm1513, %v2687, %v2760
  %2762 = vst [vmem:[#allocation3 + $0x104] sm:$0x2] %v2761
  %v2763 = vld [vmem:[#allocation3 + $0x144] sm:$0x2]
  %v2764 = vsel %vm1513, %v2691, %v2763
  %2765 = vst [vmem:[#allocation3 + $0x144] sm:$0x2] %v2764
  %v2766 = vld [vmem:[#allocation3 + $0x184] sm:$0x2]
  %v2767 = vsel %vm1513, %v2695, %v2766
  %2768 = vst [vmem:[#allocation3 + $0x184] sm:$0x2] %v2767
  %v2769 = vld [vmem:[#allocation3 + $0x1c4] sm:$0x2]
  %v2770 = vsel %vm1513, %v2699, %v2769
  %2771 = vst [vmem:[#allocation3 + $0x1c4] sm:$0x2] %v2770
  %v2772 = vld [vmem:[#allocation3 + $0x204] sm:$0x2]
  %v2773 = vsel %vm1513, %v2703, %v2772
  %2774 = vst [vmem:[#allocation3 + $0x204] sm:$0x2] %v2773
  %v2775 = vld [vmem:[#allocation3 + $0x244] sm:$0x2]
  %v2776 = vsel %vm1513, %v2707, %v2775
  %2777 = vst [vmem:[#allocation3 + $0x244] sm:$0x2] %v2776
  %v2778 = vld [vmem:[#allocation3 + $0x284] sm:$0x2]
  %v2779 = vsel %vm1513, %v2711, %v2778
  %2780 = vst [vmem:[#allocation3 + $0x284] sm:$0x2] %v2779
  %v2781 = vld [vmem:[#allocation3 + $0x2c4] sm:$0x2]
  %v2782 = vsel %vm1513, %v2715, %v2781
  %2783 = vst [vmem:[#allocation3 + $0x2c4] sm:$0x2] %v2782
  %v2784 = vld [vmem:[#allocation3 + $0x304] sm:$0x2]
  %v2785 = vsel %vm1513, %v2719, %v2784
  %2786 = vst [vmem:[#allocation3 + $0x304] sm:$0x2] %v2785
  %v2787 = vld [vmem:[#allocation3 + $0x344] sm:$0x2]
  %v2788 = vsel %vm1513, %v2723, %v2787
  %2789 = vst [vmem:[#allocation3 + $0x344] sm:$0x2] %v2788
  %v2790 = vld [vmem:[#allocation3 + $0x384] sm:$0x2]
  %v2791 = vsel %vm1513, %v2727, %v2790
  %2792 = vst [vmem:[#allocation3 + $0x384] sm:$0x2] %v2791
  %v2793 = vld [vmem:[#allocation3 + $0x3c4] sm:$0x2]
  %v2794 = vsel %vm1513, %v2731, %v2793
  %2795 = vst [vmem:[#allocation3 + $0x3c4] sm:$0x2] %v2794
  %2796 = vst [vmem:[#allocation3 + $0x4] sm:$0xc] 0
  %2797 = vst [vmem:[#allocation3 + $0x8] sm:$0xf] 0
  %2798 = vst [vmem:[#allocation3 + $0xc] sm:$0xf] 0
  %2799 = vst [vmem:[#allocation3 + $0x10] sm:$0xf] 0
  %2800 = vst [vmem:[#allocation3 + $0x14] sm:$0xf] 0
  %2801 = vst [vmem:[#allocation3 + $0x18] sm:$0xf] 0
  %2802 = vst [vmem:[#allocation3 + $0x1c] sm:$0xf] 0
  %2803 = vst [vmem:[#allocation3 + $0x20] sm:$0xf] 0
  %2804 = vst [vmem:[#allocation3 + $0x24] sm:$0xf] 0
  %2805 = vst [vmem:[#allocation3 + $0x28] sm:$0xf] 0
  %2806 = vst [vmem:[#allocation3 + $0x2c] sm:$0xf] 0
  %2807 = vst [vmem:[#allocation3 + $0x30] sm:$0xf] 0
  %2808 = vst [vmem:[#allocation3 + $0x34] sm:$0xf] 0
  %2809 = vst [vmem:[#allocation3 + $0x38] sm:$0xf] 0
  %2810 = vst [vmem:[#allocation3 + $0x3c] sm:$0xf] 0
  %2811 = vst [vmem:[#allocation3 + $0x44] sm:$0xc] 0
  %2812 = vst [vmem:[#allocation3 + $0x48] sm:$0xf] 0
  %2813 = vst [vmem:[#allocation3 + $0x4c] sm:$0xf] 0
  %2814 = vst [vmem:[#allocation3 + $0x50] sm:$0xf] 0
  %2815 = vst [vmem:[#allocation3 + $0x54] sm:$0xf] 0
  %2816 = vst [vmem:[#allocation3 + $0x58] sm:$0xf] 0
  %2817 = vst [vmem:[#allocation3 + $0x5c] sm:$0xf] 0
  %2818 = vst [vmem:[#allocation3 + $0x60] sm:$0xf] 0
  %2819 = vst [vmem:[#allocation3 + $0x64] sm:$0xf] 0
  %2820 = vst [vmem:[#allocation3 + $0x68] sm:$0xf] 0
  %2821 = vst [vmem:[#allocation3 + $0x6c] sm:$0xf] 0
  %2822 = vst [vmem:[#allocation3 + $0x70] sm:$0xf] 0
  %2823 = vst [vmem:[#allocation3 + $0x74] sm:$0xf] 0
  %2824 = vst [vmem:[#allocation3 + $0x78] sm:$0xf] 0
  %2825 = vst [vmem:[#allocation3 + $0x7c] sm:$0xf] 0
  %2826 = vst [vmem:[#allocation3 + $0x84] sm:$0xc] 0
  %2827 = vst [vmem:[#allocation3 + $0x88] sm:$0xf] 0
  %2828 = vst [vmem:[#allocation3 + $0x8c] sm:$0xf] 0
  %2829 = vst [vmem:[#allocation3 + $0x90] sm:$0xf] 0
  %2830 = vst [vmem:[#allocation3 + $0x94] sm:$0xf] 0
  %2831 = vst [vmem:[#allocation3 + $0x98] sm:$0xf] 0
  %2832 = vst [vmem:[#allocation3 + $0x9c] sm:$0xf] 0
  %2833 = vst [vmem:[#allocation3 + $0xa0] sm:$0xf] 0
  %2834 = vst [vmem:[#allocation3 + $0xa4] sm:$0xf] 0
  %2835 = vst [vmem:[#allocation3 + $0xa8] sm:$0xf] 0
  %2836 = vst [vmem:[#allocation3 + $0xac] sm:$0xf] 0
  %2837 = vst [vmem:[#allocation3 + $0xb0] sm:$0xf] 0
  %2838 = vst [vmem:[#allocation3 + $0xb4] sm:$0xf] 0
  %2839 = vst [vmem:[#allocation3 + $0xb8] sm:$0xf] 0
  %2840 = vst [vmem:[#allocation3 + $0xbc] sm:$0xf] 0
  %2841 = vst [vmem:[#allocation3 + $0xc4] sm:$0xc] 0
  %2842 = vst [vmem:[#allocation3 + $0xc8] sm:$0xf] 0
  %2843 = vst [vmem:[#allocation3 + $0xcc] sm:$0xf] 0
  %2844 = vst [vmem:[#allocation3 + $0xd0] sm:$0xf] 0
  %2845 = vst [vmem:[#allocation3 + $0xd4] sm:$0xf] 0
  %2846 = vst [vmem:[#allocation3 + $0xd8] sm:$0xf] 0
  %2847 = vst [vmem:[#allocation3 + $0xdc] sm:$0xf] 0
  %2848 = vst [vmem:[#allocation3 + $0xe0] sm:$0xf] 0
  %2849 = vst [vmem:[#allocation3 + $0xe4] sm:$0xf] 0
  %2850 = vst [vmem:[#allocation3 + $0xe8] sm:$0xf] 0
  %2851 = vst [vmem:[#allocation3 + $0xec] sm:$0xf] 0
  %2852 = vst [vmem:[#allocation3 + $0xf0] sm:$0xf] 0
  %2853 = vst [vmem:[#allocation3 + $0xf4] sm:$0xf] 0
  %2854 = vst [vmem:[#allocation3 + $0xf8] sm:$0xf] 0
  %2855 = vst [vmem:[#allocation3 + $0xfc] sm:$0xf] 0
  %2856 = vst [vmem:[#allocation3 + $0x104] sm:$0xc] 0
  %2857 = vst [vmem:[#allocation3 + $0x108] sm:$0xf] 0
  %2858 = vst [vmem:[#allocation3 + $0x10c] sm:$0xf] 0
  %2859 = vst [vmem:[#allocation3 + $0x110] sm:$0xf] 0
  %2860 = vst [vmem:[#allocation3 + $0x114] sm:$0xf] 0
  %2861 = vst [vmem:[#allocation3 + $0x118] sm:$0xf] 0
  %2862 = vst [vmem:[#allocation3 + $0x11c] sm:$0xf] 0
  %2863 = vst [vmem:[#allocation3 + $0x120] sm:$0xf] 0
  %2864 = vst [vmem:[#allocation3 + $0x124] sm:$0xf] 0
  %2865 = vst [vmem:[#allocation3 + $0x128] sm:$0xf] 0
  %2866 = vst [vmem:[#allocation3 + $0x12c] sm:$0xf] 0
  %2867 = vst [vmem:[#allocation3 + $0x130] sm:$0xf] 0
  %2868 = vst [vmem:[#allocation3 + $0x134] sm:$0xf] 0
  %2869 = vst [vmem:[#allocation3 + $0x138] sm:$0xf] 0
  %2870 = vst [vmem:[#allocation3 + $0x13c] sm:$0xf] 0
  %2871 = vst [vmem:[#allocation3 + $0x144] sm:$0xc] 0
  %2872 = vst [vmem:[#allocation3 + $0x148] sm:$0xf] 0
  %2873 = vst [vmem:[#allocation3 + $0x14c] sm:$0xf] 0
  %2874 = vst [vmem:[#allocation3 + $0x150] sm:$0xf] 0
  %2875 = vst [vmem:[#allocation3 + $0x154] sm:$0xf] 0
  %2876 = vst [vmem:[#allocation3 + $0x158] sm:$0xf] 0
  %2877 = vst [vmem:[#allocation3 + $0x15c] sm:$0xf] 0
  %2878 = vst [vmem:[#allocation3 + $0x160] sm:$0xf] 0
  %2879 = vst [vmem:[#allocation3 + $0x164] sm:$0xf] 0
  %2880 = vst [vmem:[#allocation3 + $0x168] sm:$0xf] 0
  %2881 = vst [vmem:[#allocation3 + $0x16c] sm:$0xf] 0
  %2882 = vst [vmem:[#allocation3 + $0x170] sm:$0xf] 0
  %2883 = vst [vmem:[#allocation3 + $0x174] sm:$0xf] 0
  %2884 = vst [vmem:[#allocation3 + $0x178] sm:$0xf] 0
  %2885 = vst [vmem:[#allocation3 + $0x17c] sm:$0xf] 0
  %2886 = vst [vmem:[#allocation3 + $0x184] sm:$0xc] 0
  %2887 = vst [vmem:[#allocation3 + $0x188] sm:$0xf] 0
  %2888 = vst [vmem:[#allocation3 + $0x18c] sm:$0xf] 0
  %2889 = vst [vmem:[#allocation3 + $0x190] sm:$0xf] 0
  %2890 = vst [vmem:[#allocation3 + $0x194] sm:$0xf] 0
  %2891 = vst [vmem:[#allocation3 + $0x198] sm:$0xf] 0
  %2892 = vst [vmem:[#allocation3 + $0x19c] sm:$0xf] 0
  %2893 = vst [vmem:[#allocation3 + $0x1a0] sm:$0xf] 0
  %2894 = vst [vmem:[#allocation3 + $0x1a4] sm:$0xf] 0
  %2895 = vst [vmem:[#allocation3 + $0x1a8] sm:$0xf] 0
  %2896 = vst [vmem:[#allocation3 + $0x1ac] sm:$0xf] 0
  %2897 = vst [vmem:[#allocation3 + $0x1b0] sm:$0xf] 0
  %2898 = vst [vmem:[#allocation3 + $0x1b4] sm:$0xf] 0
  %2899 = vst [vmem:[#allocation3 + $0x1b8] sm:$0xf] 0
  %2900 = vst [vmem:[#allocation3 + $0x1bc] sm:$0xf] 0
  %2901 = vst [vmem:[#allocation3 + $0x1c4] sm:$0xc] 0
  %2902 = vst [vmem:[#allocation3 + $0x1c8] sm:$0xf] 0
  %2903 = vst [vmem:[#allocation3 + $0x1cc] sm:$0xf] 0
  %2904 = vst [vmem:[#allocation3 + $0x1d0] sm:$0xf] 0
  %2905 = vst [vmem:[#allocation3 + $0x1d4] sm:$0xf] 0
  %2906 = vst [vmem:[#allocation3 + $0x1d8] sm:$0xf] 0
  %2907 = vst [vmem:[#allocation3 + $0x1dc] sm:$0xf] 0
  %2908 = vst [vmem:[#allocation3 + $0x1e0] sm:$0xf] 0
  %2909 = vst [vmem:[#allocation3 + $0x1e4] sm:$0xf] 0
  %2910 = vst [vmem:[#allocation3 + $0x1e8] sm:$0xf] 0
  %2911 = vst [vmem:[#allocation3 + $0x1ec] sm:$0xf] 0
  %2912 = vst [vmem:[#allocation3 + $0x1f0] sm:$0xf] 0
  %2913 = vst [vmem:[#allocation3 + $0x1f4] sm:$0xf] 0
  %2914 = vst [vmem:[#allocation3 + $0x1f8] sm:$0xf] 0
  %2915 = vst [vmem:[#allocation3 + $0x1fc] sm:$0xf] 0
  %2916 = vst [vmem:[#allocation3 + $0x204] sm:$0xc] 0
  %2917 = vst [vmem:[#allocation3 + $0x208] sm:$0xf] 0
  %2918 = vst [vmem:[#allocation3 + $0x20c] sm:$0xf] 0
  %2919 = vst [vmem:[#allocation3 + $0x210] sm:$0xf] 0
  %2920 = vst [vmem:[#allocation3 + $0x214] sm:$0xf] 0
  %2921 = vst [vmem:[#allocation3 + $0x218] sm:$0xf] 0
  %2922 = vst [vmem:[#allocation3 + $0x21c] sm:$0xf] 0
  %2923 = vst [vmem:[#allocation3 + $0x220] sm:$0xf] 0
  %2924 = vst [vmem:[#allocation3 + $0x224] sm:$0xf] 0
  %2925 = vst [vmem:[#allocation3 + $0x228] sm:$0xf] 0
  %2926 = vst [vmem:[#allocation3 + $0x22c] sm:$0xf] 0
  %2927 = vst [vmem:[#allocation3 + $0x230] sm:$0xf] 0
  %2928 = vst [vmem:[#allocation3 + $0x234] sm:$0xf] 0
  %2929 = vst [vmem:[#allocation3 + $0x238] sm:$0xf] 0
  %2930 = vst [vmem:[#allocation3 + $0x23c] sm:$0xf] 0
  %2931 = vst [vmem:[#allocation3 + $0x244] sm:$0xc] 0
  %2932 = vst [vmem:[#allocation3 + $0x248] sm:$0xf] 0
  %2933 = vst [vmem:[#allocation3 + $0x24c] sm:$0xf] 0
  %2934 = vst [vmem:[#allocation3 + $0x250] sm:$0xf] 0
  %2935 = vst [vmem:[#allocation3 + $0x254] sm:$0xf] 0
  %2936 = vst [vmem:[#allocation3 + $0x258] sm:$0xf] 0
  %2937 = vst [vmem:[#allocation3 + $0x25c] sm:$0xf] 0
  %2938 = vst [vmem:[#allocation3 + $0x260] sm:$0xf] 0
  %2939 = vst [vmem:[#allocation3 + $0x264] sm:$0xf] 0
  %2940 = vst [vmem:[#allocation3 + $0x268] sm:$0xf] 0
  %2941 = vst [vmem:[#allocation3 + $0x26c] sm:$0xf] 0
  %2942 = vst [vmem:[#allocation3 + $0x270] sm:$0xf] 0
  %2943 = vst [vmem:[#allocation3 + $0x274] sm:$0xf] 0
  %2944 = vst [vmem:[#allocation3 + $0x278] sm:$0xf] 0
  %2945 = vst [vmem:[#allocation3 + $0x27c] sm:$0xf] 0
  %2946 = vst [vmem:[#allocation3 + $0x284] sm:$0xc] 0
  %2947 = vst [vmem:[#allocation3 + $0x288] sm:$0xf] 0
  %2948 = vst [vmem:[#allocation3 + $0x28c] sm:$0xf] 0
  %2949 = vst [vmem:[#allocation3 + $0x290] sm:$0xf] 0
  %2950 = vst [vmem:[#allocation3 + $0x294] sm:$0xf] 0
  %2951 = vst [vmem:[#allocation3 + $0x298] sm:$0xf] 0
  %2952 = vst [vmem:[#allocation3 + $0x29c] sm:$0xf] 0
  %2953 = vst [vmem:[#allocation3 + $0x2a0] sm:$0xf] 0
  %2954 = vst [vmem:[#allocation3 + $0x2a4] sm:$0xf] 0
  %2955 = vst [vmem:[#allocation3 + $0x2a8] sm:$0xf] 0
  %2956 = vst [vmem:[#allocation3 + $0x2ac] sm:$0xf] 0
  %2957 = vst [vmem:[#allocation3 + $0x2b0] sm:$0xf] 0
  %2958 = vst [vmem:[#allocation3 + $0x2b4] sm:$0xf] 0
  %2959 = vst [vmem:[#allocation3 + $0x2b8] sm:$0xf] 0
  %2960 = vst [vmem:[#allocation3 + $0x2bc] sm:$0xf] 0
  %2961 = vst [vmem:[#allocation3 + $0x2c4] sm:$0xc] 0
  %2962 = vst [vmem:[#allocation3 + $0x2c8] sm:$0xf] 0
  %2963 = vst [vmem:[#allocation3 + $0x2cc] sm:$0xf] 0
  %2964 = vst [vmem:[#allocation3 + $0x2d0] sm:$0xf] 0
  %2965 = vst [vmem:[#allocation3 + $0x2d4] sm:$0xf] 0
  %2966 = vst [vmem:[#allocation3 + $0x2d8] sm:$0xf] 0
  %2967 = vst [vmem:[#allocation3 + $0x2dc] sm:$0xf] 0
  %2968 = vst [vmem:[#allocation3 + $0x2e0] sm:$0xf] 0
  %2969 = vst [vmem:[#allocation3 + $0x2e4] sm:$0xf] 0
  %2970 = vst [vmem:[#allocation3 + $0x2e8] sm:$0xf] 0
  %2971 = vst [vmem:[#allocation3 + $0x2ec] sm:$0xf] 0
  %2972 = vst [vmem:[#allocation3 + $0x2f0] sm:$0xf] 0
  %2973 = vst [vmem:[#allocation3 + $0x2f4] sm:$0xf] 0
  %2974 = vst [vmem:[#allocation3 + $0x2f8] sm:$0xf] 0
  %2975 = vst [vmem:[#allocation3 + $0x2fc] sm:$0xf] 0
  %2976 = vst [vmem:[#allocation3 + $0x304] sm:$0xc] 0
  %2977 = vst [vmem:[#allocation3 + $0x308] sm:$0xf] 0
  %2978 = vst [vmem:[#allocation3 + $0x30c] sm:$0xf] 0
  %2979 = vst [vmem:[#allocation3 + $0x310] sm:$0xf] 0
  %2980 = vst [vmem:[#allocation3 + $0x314] sm:$0xf] 0
  %2981 = vst [vmem:[#allocation3 + $0x318] sm:$0xf] 0
  %2982 = vst [vmem:[#allocation3 + $0x31c] sm:$0xf] 0
  %2983 = vst [vmem:[#allocation3 + $0x320] sm:$0xf] 0
  %2984 = vst [vmem:[#allocation3 + $0x324] sm:$0xf] 0
  %2985 = vst [vmem:[#allocation3 + $0x328] sm:$0xf] 0
  %2986 = vst [vmem:[#allocation3 + $0x32c] sm:$0xf] 0
  %2987 = vst [vmem:[#allocation3 + $0x330] sm:$0xf] 0
  %2988 = vst [vmem:[#allocation3 + $0x334] sm:$0xf] 0
  %2989 = vst [vmem:[#allocation3 + $0x338] sm:$0xf] 0
  %2990 = vst [vmem:[#allocation3 + $0x33c] sm:$0xf] 0
  %2991 = vst [vmem:[#allocation3 + $0x344] sm:$0xc] 0
  %2992 = vst [vmem:[#allocation3 + $0x348] sm:$0xf] 0
  %2993 = vst [vmem:[#allocation3 + $0x34c] sm:$0xf] 0
  %2994 = vst [vmem:[#allocation3 + $0x350] sm:$0xf] 0
  %2995 = vst [vmem:[#allocation3 + $0x354] sm:$0xf] 0
  %2996 = vst [vmem:[#allocation3 + $0x358] sm:$0xf] 0
  %2997 = vst [vmem:[#allocation3 + $0x35c] sm:$0xf] 0
  %2998 = vst [vmem:[#allocation3 + $0x360] sm:$0xf] 0
  %2999 = vst [vmem:[#allocation3 + $0x364] sm:$0xf] 0
  %3000 = vst [vmem:[#allocation3 + $0x368] sm:$0xf] 0
  %3001 = vst [vmem:[#allocation3 + $0x36c] sm:$0xf] 0
  %3002 = vst [vmem:[#allocation3 + $0x370] sm:$0xf] 0
  %3003 = vst [vmem:[#allocation3 + $0x374] sm:$0xf] 0
  %3004 = vst [vmem:[#allocation3 + $0x378] sm:$0xf] 0
  %3005 = vst [vmem:[#allocation3 + $0x37c] sm:$0xf] 0
  %3006 = vst [vmem:[#allocation3 + $0x384] sm:$0xc] 0
  %3007 = vst [vmem:[#allocation3 + $0x388] sm:$0xf] 0
  %3008 = vst [vmem:[#allocation3 + $0x38c] sm:$0xf] 0
  %3009 = vst [vmem:[#allocation3 + $0x390] sm:$0xf] 0
  %3010 = vst [vmem:[#allocation3 + $0x394] sm:$0xf] 0
  %3011 = vst [vmem:[#allocation3 + $0x398] sm:$0xf] 0
  %3012 = vst [vmem:[#allocation3 + $0x39c] sm:$0xf] 0
  %3013 = vst [vmem:[#allocation3 + $0x3a0] sm:$0xf] 0
  %3014 = vst [vmem:[#allocation3 + $0x3a4] sm:$0xf] 0
  %3015 = vst [vmem:[#allocation3 + $0x3a8] sm:$0xf] 0
  %3016 = vst [vmem:[#allocation3 + $0x3ac] sm:$0xf] 0
  %3017 = vst [vmem:[#allocation3 + $0x3b0] sm:$0xf] 0
  %3018 = vst [vmem:[#allocation3 + $0x3b4] sm:$0xf] 0
  %3019 = vst [vmem:[#allocation3 + $0x3b8] sm:$0xf] 0
  %3020 = vst [vmem:[#allocation3 + $0x3bc] sm:$0xf] 0
  %3021 = vst [vmem:[#allocation3 + $0x3c4] sm:$0xc] 0
  %3022 = vst [vmem:[#allocation3 + $0x3c8] sm:$0xf] 0
  %3023 = vst [vmem:[#allocation3 + $0x3cc] sm:$0xf] 0
  %3024 = vst [vmem:[#allocation3 + $0x3d0] sm:$0xf] 0
  %3025 = vst [vmem:[#allocation3 + $0x3d4] sm:$0xf] 0
  %3026 = vst [vmem:[#allocation3 + $0x3d8] sm:$0xf] 0
  %3027 = vst [vmem:[#allocation3 + $0x3dc] sm:$0xf] 0
  %3028 = vst [vmem:[#allocation3 + $0x3e0] sm:$0xf] 0
  %3029 = vst [vmem:[#allocation3 + $0x3e4] sm:$0xf] 0
  %3030 = vst [vmem:[#allocation3 + $0x3e8] sm:$0xf] 0
  %3031 = vst [vmem:[#allocation3 + $0x3ec] sm:$0xf] 0
  %3032 = vst [vmem:[#allocation3 + $0x3f0] sm:$0xf] 0
  %3033 = vst [vmem:[#allocation3 + $0x3f4] sm:$0xf] 0
  %3034 = vst [vmem:[#allocation3 + $0x3f8] sm:$0xf] 0
  %3035 = vst [vmem:[#allocation3 + $0x3fc] sm:$0xf] 0
  %v3036 = vlaneseq
  %v3037 = vand.u32 %v3036, 127
  %v3038 = vrot.slane %v55, 1
  %v3039 = vrot.slane %v55, 2
  %v3040 = vrot.slane %v55, 3
  %v3041 = vrot.slane %v55, 4
  %v3042 = vrot.slane %v55, 5
  %v3043 = vrot.slane %v55, 6
  %v3044 = vrot.slane %v55, 7
  %v3045 = vrot.slane %v56, 1
  %v3046 = vrot.slane %v56, 2
  %v3047 = vrot.slane %v56, 3
  %v3048 = vrot.slane %v56, 4
  %v3049 = vrot.slane %v56, 5
  %v3050 = vrot.slane %v56, 6
  %v3051 = vrot.slane %v56, 7
  %3052 = vset.pattern.permute.xlu0 0
  %3053 = vperm.xlu0 %3052, %v55
  %v3054 = vpop.permute.xlu0 %3053
  %v3055 = vperm.slane %v3054, 0
  %3056 = vset.pattern.permute.xlu0 0
  %3057 = vperm.xlu0 %3056, %v3038
  %v3058 = vpop.permute.xlu0 %3057
  %v3059 = vperm.slane %v3058, 0
  %3060 = vset.pattern.permute.xlu0 0
  %3061 = vperm.xlu0 %3060, %v3039
  %v3062 = vpop.permute.xlu0 %3061
  %v3063 = vperm.slane %v3062, 0
  %3064 = vset.pattern.permute.xlu0 0
  %3065 = vperm.xlu0 %3064, %v3040
  %v3066 = vpop.permute.xlu0 %3065
  %v3067 = vperm.slane %v3066, 0
  %3068 = vset.pattern.permute.xlu0 0
  %3069 = vperm.xlu0 %3068, %v3041
  %v3070 = vpop.permute.xlu0 %3069
  %v3071 = vperm.slane %v3070, 0
  %3072 = vset.pattern.permute.xlu0 0
  %3073 = vperm.xlu0 %3072, %v3042
  %v3074 = vpop.permute.xlu0 %3073
  %v3075 = vperm.slane %v3074, 0
  %3076 = vset.pattern.permute.xlu0 0
  %3077 = vperm.xlu0 %3076, %v3043
  %v3078 = vpop.permute.xlu0 %3077
  %v3079 = vperm.slane %v3078, 0
  %3080 = vset.pattern.permute.xlu0 0
  %3081 = vperm.xlu0 %3080, %v3044
  %v3082 = vpop.permute.xlu0 %3081
  %v3083 = vperm.slane %v3082, 0
  %3084 = vset.pattern.permute.xlu0 0
  %3085 = vperm.xlu0 %3084, %v56
  %v3086 = vpop.permute.xlu0 %3085
  %v3087 = vperm.slane %v3086, 0
  %3088 = vset.pattern.permute.xlu0 0
  %3089 = vperm.xlu0 %3088, %v3045
  %v3090 = vpop.permute.xlu0 %3089
  %v3091 = vperm.slane %v3090, 0
  %3092 = vset.pattern.permute.xlu0 0
  %3093 = vperm.xlu0 %3092, %v3046
  %v3094 = vpop.permute.xlu0 %3093
  %v3095 = vperm.slane %v3094, 0
  %3096 = vset.pattern.permute.xlu0 0
  %3097 = vperm.xlu0 %3096, %v3047
  %v3098 = vpop.permute.xlu0 %3097
  %v3099 = vperm.slane %v3098, 0
  %3100 = vset.pattern.permute.xlu0 0
  %3101 = vperm.xlu0 %3100, %v3048
  %v3102 = vpop.permute.xlu0 %3101
  %v3103 = vperm.slane %v3102, 0
  %3104 = vset.pattern.permute.xlu0 0
  %3105 = vperm.xlu0 %3104, %v3049
  %v3106 = vpop.permute.xlu0 %3105
  %v3107 = vperm.slane %v3106, 0
  %3108 = vset.pattern.permute.xlu0 0
  %3109 = vperm.xlu0 %3108, %v3050
  %v3110 = vpop.permute.xlu0 %3109
  %v3111 = vperm.slane %v3110, 0
  %3112 = vset.pattern.permute.xlu0 0
  %3113 = vperm.xlu0 %3112, %v3051
  %v3114 = vpop.permute.xlu0 %3113
  %v3115 = vperm.slane %v3114, 0
  %vm3116 = vcmp.lt.s32.totalorder %v3037, %v3055
  %vm3117 = vcmp.lt.s32.totalorder %v3037, %v3059
  %vm3118 = vcmp.lt.s32.totalorder %v3037, %v3063
  %vm3119 = vcmp.lt.s32.totalorder %v3037, %v3067
  %vm3120 = vcmp.lt.s32.totalorder %v3037, %v3071
  %vm3121 = vcmp.lt.s32.totalorder %v3037, %v3075
  %vm3122 = vcmp.lt.s32.totalorder %v3037, %v3079
  %vm3123 = vcmp.lt.s32.totalorder %v3037, %v3083
  %vm3124 = vcmp.lt.s32.totalorder %v3037, %v3087
  %vm3125 = vcmp.lt.s32.totalorder %v3037, %v3091
  %vm3126 = vcmp.lt.s32.totalorder %v3037, %v3095
  %vm3127 = vcmp.lt.s32.totalorder %v3037, %v3099
  %vm3128 = vcmp.lt.s32.totalorder %v3037, %v3103
  %vm3129 = vcmp.lt.s32.totalorder %v3037, %v3107
  %vm3130 = vcmp.lt.s32.totalorder %v3037, %v3111
  %vm3131 = vcmp.lt.s32.totalorder %v3037, %v3115
  loop: start=0, step=1, limit=5
  $region69: #{seq2seq_forward.1} parent=0 // loop_pre_header
    _
  $region70: #{seq2seq_forward.1} parent=0 // loop_header
    %s3133 = sphi 0, %s3137
    %p3134 = scmp.ge.s32.totalorder %s3133, 5
    %v3138 = vphi %v630, %v3743
    %v3139 = vphi %v631, %v3744
    %v3140 = vphi 1, %v6061
    %v3141 = vphi 1, %v6075
    %v3142 = vphi 0, %v6144
    %v3143 = vphi 0, %v6145
  $region71: #{seq2seq_forward.1} parent=0 // loop_header_branch
    %3136 = sbr.rel (%p3134) target = $region75
  $region72: #{seq2seq_forward.1} parent=0 // loop_body
    %vm3144 = vcmp.eq.s32.totalorder %v3037, %v3140
    %vm3145 = vcmp.eq.s32.totalorder %v3037, %v3141
    %v3146 = vsel %vm3144, 1, 0
    %v3147 = vsel %vm3145, 1, 0
    %v3148 = vcvt.s32.f32 %v3146
    %v3149 = vcvt.s32.f32 %v3147
    %v3150 = vpack.c.bf16 %v3149, %v3148
    %v3151 = vld [vmem:[%s2] sm:$0xf]
    %v3152 = vld [vmem:[%s2 + $0x4] sm:$0xf]
    %v3153 = vld [vmem:[%s2 + $0x8] sm:$0xf]
    %v3154 = vld [vmem:[%s2 + $0xc] sm:$0xf]
    %v3155 = vld [vmem:[%s2 + $0x10] sm:$0xf]
    %v3156 = vld [vmem:[%s2 + $0x14] sm:$0xf]
    %v3157 = vld [vmem:[%s2 + $0x18] sm:$0xf]
    %v3158 = vld [vmem:[%s2 + $0x1c] sm:$0xf]
    %v3159 = vld [vmem:[%s2 + $0x20] sm:$0xf]
    %v3160 = vld [vmem:[%s2 + $0x24] sm:$0xf]
    %v3161 = vld [vmem:[%s2 + $0x28] sm:$0xf]
    %v3162 = vld [vmem:[%s2 + $0x2c] sm:$0xf]
    %v3163 = vld [vmem:[%s2 + $0x30] sm:$0xf]
    %v3164 = vld [vmem:[%s2 + $0x34] sm:$0xf]
    %v3165 = vld [vmem:[%s2 + $0x38] sm:$0xf]
    %v3166 = vld [vmem:[%s2 + $0x3c] sm:$0xf]
    %v3183 = vunpack.c.l.b16 %v3151
    %v3184 = vunpack.c.l.b16 %v3152
    %v3185 = vunpack.c.l.b16 %v3153
    %v3186 = vunpack.c.l.b16 %v3154
    %v3187 = vunpack.c.l.b16 %v3155
    %v3188 = vunpack.c.l.b16 %v3156
    %v3189 = vunpack.c.l.b16 %v3157
    %v3190 = vunpack.c.l.b16 %v3158
    %v3191 = vunpack.c.l.b16 %v3159
    %v3192 = vunpack.c.l.b16 %v3160
    %v3193 = vunpack.c.l.b16 %v3161
    %v3194 = vunpack.c.l.b16 %v3162
    %v3195 = vunpack.c.l.b16 %v3163
    %v3196 = vunpack.c.l.b16 %v3164
    %v3197 = vunpack.c.l.b16 %v3165
    %v3198 = vunpack.c.l.b16 %v3166
    %v3199 = vpack.c.b16 %v3184, %v3183
    %v3200 = vpack.c.b16 %v3186, %v3185
    %v3201 = vpack.c.b16 %v3188, %v3187
    %v3202 = vpack.c.b16 %v3190, %v3189
    %v3203 = vpack.c.b16 %v3192, %v3191
    %v3204 = vpack.c.b16 %v3194, %v3193
    %v3205 = vpack.c.b16 %v3196, %v3195
    %v3206 = vpack.c.b16 %v3198, %v3197
    %3215 = vmatpush.bf16.msra.mxu0 %v3206
    %3216 = vmatpush.bf16.msra.mxu0 %v3205
    %3217 = vmatpush.bf16.msra.mxu0 %v3204
    %3218 = vmatpush.bf16.msra.mxu0 %v3203
    %3219 = vmatpush.bf16.msra.mxu0 %v3202
    %3220 = vmatpush.bf16.msra.mxu0 %v3201
    %3221 = vmatpush.bf16.msra.mxu0 %v3200
    %3222 = vmatpush.bf16.msra.mxu0 %v3199
    %3223 = vmatmul.bf16.gmra.mxu0 %v3150
    %v3224 = vpop.f32.mrf.mxu0
    %v3225 = vadd.f32 0.0, %v3224
    %v3226 = vpop.f32.mrf.mxu0
    %v3227 = vadd.f32 0.0, %v3226
    %3228 = vdwg.mxu0
    %v3229 = vpack.c.bf16 %v3227, %v3225
    %v3230 = vld [vmem:[%s7] sm:$0xff]
    %v3231 = vld [vmem:[%s7 + $0x8] sm:$0xf]
    %v3232 = vld [vmem:[%s7 + $0xc] sm:$0xff]
    %v3233 = vld [vmem:[%s7 + $0x14] sm:$0xf]
    %v3234 = vld [vmem:[%s7 + $0x18] sm:$0xff]
    %v3235 = vld [vmem:[%s7 + $0x20] sm:$0xf]
    %v3236 = vld [vmem:[%s7 + $0x24] sm:$0xff]
    %v3237 = vld [vmem:[%s7 + $0x2c] sm:$0xf]
    %v3238 = vld [vmem:[%s7 + $0x30] sm:$0xff]
    %v3239 = vld [vmem:[%s7 + $0x38] sm:$0xf]
    %v3240 = vld [vmem:[%s7 + $0x3c] sm:$0xff]
    %v3241 = vld [vmem:[%s7 + $0x44] sm:$0xf]
    %v3242 = vld [vmem:[%s7 + $0x48] sm:$0xff]
    %v3243 = vld [vmem:[%s7 + $0x50] sm:$0xf]
    %v3244 = vld [vmem:[%s7 + $0x54] sm:$0xff]
    %v3245 = vld [vmem:[%s7 + $0x5c] sm:$0xf]
    %v3246 = vld [vmem:[%s7 + $0x60] sm:$0xff]
    %v3247 = vld [vmem:[%s7 + $0x68] sm:$0xf]
    %v3248 = vld [vmem:[%s7 + $0x6c] sm:$0xff]
    %v3249 = vld [vmem:[%s7 + $0x74] sm:$0xf]
    %v3250 = vld [vmem:[%s7 + $0x78] sm:$0xff]
    %v3251 = vld [vmem:[%s7 + $0x80] sm:$0xf]
    %v3252 = vld [vmem:[%s7 + $0x84] sm:$0xff]
    %v3253 = vld [vmem:[%s7 + $0x8c] sm:$0xf]
    %v3254 = vld [vmem:[%s7 + $0x90] sm:$0xff]
    %v3255 = vld [vmem:[%s7 + $0x98] sm:$0xf]
    %v3256 = vld [vmem:[%s7 + $0x9c] sm:$0xff]
    %v3257 = vld [vmem:[%s7 + $0xa4] sm:$0xf]
    %v3258 = vld [vmem:[%s7 + $0xa8] sm:$0xff]
    %v3259 = vld [vmem:[%s7 + $0xb0] sm:$0xf]
    %v3260 = vld [vmem:[%s7 + $0xb4] sm:$0xff]
    %v3261 = vld [vmem:[%s7 + $0xbc] sm:$0xf]
    %v3262 = vld [vmem:[%s9] sm:$0x7]
    %v3264 = vperm.slane %v3262, 0
    %v3265 = vperm.slane %v3262, 1
    %v3266 = vperm.slane %v3262, 2
    %v3302 = vunpack.c.l.b16 %v3230
    %v3303 = vunpack.c.h.b16 %v3230
    %v3304 = vunpack.c.l.b16 %v3231
    %v3305 = vunpack.c.l.b16 %v3232
    %v3306 = vunpack.c.h.b16 %v3232
    %v3307 = vunpack.c.l.b16 %v3233
    %v3308 = vunpack.c.l.b16 %v3234
    %v3309 = vunpack.c.h.b16 %v3234
    %v3310 = vunpack.c.l.b16 %v3235
    %v3311 = vunpack.c.l.b16 %v3236
    %v3312 = vunpack.c.h.b16 %v3236
    %v3313 = vunpack.c.l.b16 %v3237
    %v3314 = vunpack.c.l.b16 %v3238
    %v3315 = vunpack.c.h.b16 %v3238
    %v3316 = vunpack.c.l.b16 %v3239
    %v3317 = vunpack.c.l.b16 %v3240
    %v3318 = vunpack.c.h.b16 %v3240
    %v3319 = vunpack.c.l.b16 %v3241
    %v3320 = vunpack.c.l.b16 %v3242
    %v3321 = vunpack.c.h.b16 %v3242
    %v3322 = vunpack.c.l.b16 %v3243
    %v3323 = vunpack.c.l.b16 %v3244
    %v3324 = vunpack.c.h.b16 %v3244
    %v3325 = vunpack.c.l.b16 %v3245
    %v3326 = vunpack.c.l.b16 %v3246
    %v3327 = vunpack.c.h.b16 %v3246
    %v3328 = vunpack.c.l.b16 %v3247
    %v3329 = vunpack.c.l.b16 %v3248
    %v3330 = vunpack.c.h.b16 %v3248
    %v3331 = vunpack.c.l.b16 %v3249
    %v3332 = vunpack.c.l.b16 %v3250
    %v3333 = vunpack.c.h.b16 %v3250
    %v3334 = vunpack.c.l.b16 %v3251
    %v3335 = vunpack.c.l.b16 %v3252
    %v3336 = vunpack.c.h.b16 %v3252
    %v3337 = vunpack.c.l.b16 %v3253
    %v3338 = vunpack.c.l.b16 %v3254
    %v3339 = vunpack.c.h.b16 %v3254
    %v3340 = vunpack.c.l.b16 %v3255
    %v3341 = vunpack.c.l.b16 %v3256
    %v3342 = vunpack.c.h.b16 %v3256
    %v3343 = vunpack.c.l.b16 %v3257
    %v3344 = vunpack.c.l.b16 %v3258
    %v3345 = vunpack.c.h.b16 %v3258
    %v3346 = vunpack.c.l.b16 %v3259
    %v3347 = vunpack.c.l.b16 %v3260
    %v3348 = vunpack.c.h.b16 %v3260
    %v3349 = vunpack.c.l.b16 %v3261
    %v3350 = vpack.c.b16 %v3305, %v3302
    %v3351 = vpack.c.b16 %v3306, %v3303
    %v3352 = vpack.c.b16 %v3307, %v3304
    %v3353 = vpack.c.b16 %v3311, %v3308
    %v3354 = vpack.c.b16 %v3312, %v3309
    %v3355 = vpack.c.b16 %v3313, %v3310
    %v3356 = vpack.c.b16 %v3317, %v3314
    %v3357 = vpack.c.b16 %v3318, %v3315
    %v3358 = vpack.c.b16 %v3319, %v3316
    %v3359 = vpack.c.b16 %v3323, %v3320
    %v3360 = vpack.c.b16 %v3324, %v3321
    %v3361 = vpack.c.b16 %v3325, %v3322
    %v3362 = vpack.c.b16 %v3329, %v3326
    %v3363 = vpack.c.b16 %v3330, %v3327
    %v3364 = vpack.c.b16 %v3331, %v3328
    %v3365 = vpack.c.b16 %v3335, %v3332
    %v3366 = vpack.c.b16 %v3336, %v3333
    %v3367 = vpack.c.b16 %v3337, %v3334
    %v3368 = vpack.c.b16 %v3341, %v3338
    %v3369 = vpack.c.b16 %v3342, %v3339
    %v3370 = vpack.c.b16 %v3343, %v3340
    %v3371 = vpack.c.b16 %v3347, %v3344
    %v3372 = vpack.c.b16 %v3348, %v3345
    %v3373 = vpack.c.b16 %v3349, %v3346
    %3398 = vmatpush.bf16.msra.mxu0 %v3371
    %3399 = vmatpush.bf16.msra.mxu0 %v3368
    %3400 = vmatpush.bf16.msra.mxu0 %v3365
    %3401 = vmatpush.bf16.msra.mxu0 %v3362
    %3402 = vmatpush.bf16.msra.mxu0 %v3359
    %3403 = vmatpush.bf16.msra.mxu0 %v3356
    %3404 = vmatpush.bf16.msra.mxu0 %v3353
    %3405 = vmatpush.bf16.msra.mxu0 %v3350
    %3406 = vmatmul.bf16.gmra.mxu0 %v3229
    %v3407 = vpop.f32.mrf.mxu0
    %v3408 = vadd.f32 %v3264, %v3407
    %v3409 = vpop.f32.mrf.mxu0
    %v3410 = vadd.f32 %v3264, %v3409
    %3411 = vdwg.mxu0
    %3412 = vmatpush.bf16.msra.mxu0 %v3372
    %3413 = vmatpush.bf16.msra.mxu0 %v3369
    %3414 = vmatpush.bf16.msra.mxu0 %v3366
    %3415 = vmatpush.bf16.msra.mxu0 %v3363
    %3416 = vmatpush.bf16.msra.mxu0 %v3360
    %3417 = vmatpush.bf16.msra.mxu0 %v3357
    %3418 = vmatpush.bf16.msra.mxu0 %v3354
    %3419 = vmatpush.bf16.msra.mxu0 %v3351
    %3420 = vmatmul.bf16.gmra.mxu0 %v3229
    %v3421 = vpop.f32.mrf.mxu0
    %v3422 = vadd.f32 %v3265, %v3421
    %v3423 = vpop.f32.mrf.mxu0
    %v3424 = vadd.f32 %v3265, %v3423
    %3425 = vdwg.mxu0
    %3426 = vmatpush.bf16.msra.mxu0 %v3373
    %3427 = vmatpush.bf16.msra.mxu0 %v3370
    %3428 = vmatpush.bf16.msra.mxu0 %v3367
    %3429 = vmatpush.bf16.msra.mxu0 %v3364
    %3430 = vmatpush.bf16.msra.mxu0 %v3361
    %3431 = vmatpush.bf16.msra.mxu0 %v3358
    %3432 = vmatpush.bf16.msra.mxu0 %v3355
    %3433 = vmatpush.bf16.msra.mxu0 %v3352
    %3434 = vmatmul.bf16.gmra.mxu0 %v3229
    %v3435 = vpop.f32.mrf.mxu0
    %v3436 = vadd.f32 %v3266, %v3435
    %v3437 = vpop.f32.mrf.mxu0
    %v3438 = vadd.f32 %v3266, %v3437
    %3439 = vdwg.mxu0
    %v3440 = vpack.c.bf16 %v3139, %v3138
    %v3441 = vld [vmem:[%s8] sm:$0xff]
    %v3442 = vld [vmem:[%s8 + $0x8] sm:$0xf]
    %v3443 = vld [vmem:[%s8 + $0xc] sm:$0xff]
    %v3444 = vld [vmem:[%s8 + $0x14] sm:$0xf]
    %v3445 = vld [vmem:[%s8 + $0x18] sm:$0xff]
    %v3446 = vld [vmem:[%s8 + $0x20] sm:$0xf]
    %v3447 = vld [vmem:[%s8 + $0x24] sm:$0xff]
    %v3448 = vld [vmem:[%s8 + $0x2c] sm:$0xf]
    %v3449 = vld [vmem:[%s8 + $0x30] sm:$0xff]
    %v3450 = vld [vmem:[%s8 + $0x38] sm:$0xf]
    %v3451 = vld [vmem:[%s8 + $0x3c] sm:$0xff]
    %v3452 = vld [vmem:[%s8 + $0x44] sm:$0xf]
    %v3453 = vld [vmem:[%s8 + $0x48] sm:$0xff]
    %v3454 = vld [vmem:[%s8 + $0x50] sm:$0xf]
    %v3455 = vld [vmem:[%s8 + $0x54] sm:$0xff]
    %v3456 = vld [vmem:[%s8 + $0x5c] sm:$0xf]
    %v3457 = vld [vmem:[%s8 + $0x60] sm:$0xff]
    %v3458 = vld [vmem:[%s8 + $0x68] sm:$0xf]
    %v3459 = vld [vmem:[%s8 + $0x6c] sm:$0xff]
    %v3460 = vld [vmem:[%s8 + $0x74] sm:$0xf]
    %v3461 = vld [vmem:[%s8 + $0x78] sm:$0xff]
    %v3462 = vld [vmem:[%s8 + $0x80] sm:$0xf]
    %v3463 = vld [vmem:[%s8 + $0x84] sm:$0xff]
    %v3464 = vld [vmem:[%s8 + $0x8c] sm:$0xf]
    %v3465 = vld [vmem:[%s8 + $0x90] sm:$0xff]
    %v3466 = vld [vmem:[%s8 + $0x98] sm:$0xf]
    %v3467 = vld [vmem:[%s8 + $0x9c] sm:$0xff]
    %v3468 = vld [vmem:[%s8 + $0xa4] sm:$0xf]
    %v3469 = vld [vmem:[%s8 + $0xa8] sm:$0xff]
    %v3470 = vld [vmem:[%s8 + $0xb0] sm:$0xf]
    %v3471 = vld [vmem:[%s8 + $0xb4] sm:$0xff]
    %v3472 = vld [vmem:[%s8 + $0xbc] sm:$0xf]
    %v3473 = vld [vmem:[%s10] sm:$0x7]
    %v3475 = vperm.slane %v3473, 0
    %v3476 = vperm.slane %v3473, 1
    %v3477 = vperm.slane %v3473, 2
    %v3513 = vunpack.c.l.b16 %v3441
    %v3514 = vunpack.c.h.b16 %v3441
    %v3515 = vunpack.c.l.b16 %v3442
    %v3516 = vunpack.c.l.b16 %v3443
    %v3517 = vunpack.c.h.b16 %v3443
    %v3518 = vunpack.c.l.b16 %v3444
    %v3519 = vunpack.c.l.b16 %v3445
    %v3520 = vunpack.c.h.b16 %v3445
    %v3521 = vunpack.c.l.b16 %v3446
    %v3522 = vunpack.c.l.b16 %v3447
    %v3523 = vunpack.c.h.b16 %v3447
    %v3524 = vunpack.c.l.b16 %v3448
    %v3525 = vunpack.c.l.b16 %v3449
    %v3526 = vunpack.c.h.b16 %v3449
    %v3527 = vunpack.c.l.b16 %v3450
    %v3528 = vunpack.c.l.b16 %v3451
    %v3529 = vunpack.c.h.b16 %v3451
    %v3530 = vunpack.c.l.b16 %v3452
    %v3531 = vunpack.c.l.b16 %v3453
    %v3532 = vunpack.c.h.b16 %v3453
    %v3533 = vunpack.c.l.b16 %v3454
    %v3534 = vunpack.c.l.b16 %v3455
    %v3535 = vunpack.c.h.b16 %v3455
    %v3536 = vunpack.c.l.b16 %v3456
    %v3537 = vunpack.c.l.b16 %v3457
    %v3538 = vunpack.c.h.b16 %v3457
    %v3539 = vunpack.c.l.b16 %v3458
    %v3540 = vunpack.c.l.b16 %v3459
    %v3541 = vunpack.c.h.b16 %v3459
    %v3542 = vunpack.c.l.b16 %v3460
    %v3543 = vunpack.c.l.b16 %v3461
    %v3544 = vunpack.c.h.b16 %v3461
    %v3545 = vunpack.c.l.b16 %v3462
    %v3546 = vunpack.c.l.b16 %v3463
    %v3547 = vunpack.c.h.b16 %v3463
    %v3548 = vunpack.c.l.b16 %v3464
    %v3549 = vunpack.c.l.b16 %v3465
    %v3550 = vunpack.c.h.b16 %v3465
    %v3551 = vunpack.c.l.b16 %v3466
    %v3552 = vunpack.c.l.b16 %v3467
    %v3553 = vunpack.c.h.b16 %v3467
    %v3554 = vunpack.c.l.b16 %v3468
    %v3555 = vunpack.c.l.b16 %v3469
    %v3556 = vunpack.c.h.b16 %v3469
    %v3557 = vunpack.c.l.b16 %v3470
    %v3558 = vunpack.c.l.b16 %v3471
    %v3559 = vunpack.c.h.b16 %v3471
    %v3560 = vunpack.c.l.b16 %v3472
    %v3561 = vpack.c.b16 %v3516, %v3513
    %v3562 = vpack.c.b16 %v3517, %v3514
    %v3563 = vpack.c.b16 %v3518, %v3515
    %v3564 = vpack.c.b16 %v3522, %v3519
    %v3565 = vpack.c.b16 %v3523, %v3520
    %v3566 = vpack.c.b16 %v3524, %v3521
    %v3567 = vpack.c.b16 %v3528, %v3525
    %v3568 = vpack.c.b16 %v3529, %v3526
    %v3569 = vpack.c.b16 %v3530, %v3527
    %v3570 = vpack.c.b16 %v3534, %v3531
    %v3571 = vpack.c.b16 %v3535, %v3532
    %v3572 = vpack.c.b16 %v3536, %v3533
    %v3573 = vpack.c.b16 %v3540, %v3537
    %v3574 = vpack.c.b16 %v3541, %v3538
    %v3575 = vpack.c.b16 %v3542, %v3539
    %v3576 = vpack.c.b16 %v3546, %v3543
    %v3577 = vpack.c.b16 %v3547, %v3544
    %v3578 = vpack.c.b16 %v3548, %v3545
    %v3579 = vpack.c.b16 %v3552, %v3549
    %v3580 = vpack.c.b16 %v3553, %v3550
    %v3581 = vpack.c.b16 %v3554, %v3551
    %v3582 = vpack.c.b16 %v3558, %v3555
    %v3583 = vpack.c.b16 %v3559, %v3556
    %v3584 = vpack.c.b16 %v3560, %v3557
    %3609 = vmatpush.bf16.msra.mxu0 %v3582
    %3610 = vmatpush.bf16.msra.mxu0 %v3579
    %3611 = vmatpush.bf16.msra.mxu0 %v3576
    %3612 = vmatpush.bf16.msra.mxu0 %v3573
    %3613 = vmatpush.bf16.msra.mxu0 %v3570
    %3614 = vmatpush.bf16.msra.mxu0 %v3567
    %3615 = vmatpush.bf16.msra.mxu0 %v3564
    %3616 = vmatpush.bf16.msra.mxu0 %v3561
    %3617 = vmatmul.bf16.gmra.mxu0 %v3440
    %v3618 = vpop.f32.mrf.mxu0
    %v3619 = vadd.f32 %v3475, %v3618
    %v3620 = vpop.f32.mrf.mxu0
    %v3621 = vadd.f32 %v3475, %v3620
    %3622 = vdwg.mxu0
    %3623 = vmatpush.bf16.msra.mxu0 %v3583
    %3624 = vmatpush.bf16.msra.mxu0 %v3580
    %3625 = vmatpush.bf16.msra.mxu0 %v3577
    %3626 = vmatpush.bf16.msra.mxu0 %v3574
    %3627 = vmatpush.bf16.msra.mxu0 %v3571
    %3628 = vmatpush.bf16.msra.mxu0 %v3568
    %3629 = vmatpush.bf16.msra.mxu0 %v3565
    %3630 = vmatpush.bf16.msra.mxu0 %v3562
    %3631 = vmatmul.bf16.gmra.mxu0 %v3440
    %v3632 = vpop.f32.mrf.mxu0
    %v3633 = vadd.f32 %v3476, %v3632
    %v3634 = vpop.f32.mrf.mxu0
    %v3635 = vadd.f32 %v3476, %v3634
    %3636 = vdwg.mxu0
    %3637 = vmatpush.bf16.msra.mxu0 %v3584
    %3638 = vmatpush.bf16.msra.mxu0 %v3581
    %3639 = vmatpush.bf16.msra.mxu0 %v3578
    %3640 = vmatpush.bf16.msra.mxu0 %v3575
    %3641 = vmatpush.bf16.msra.mxu0 %v3572
    %3642 = vmatpush.bf16.msra.mxu0 %v3569
    %3643 = vmatpush.bf16.msra.mxu0 %v3566
    %3644 = vmatpush.bf16.msra.mxu0 %v3563
    %3645 = vmatmul.bf16.gmra.mxu0 %v3440
    %v3646 = vpop.f32.mrf.mxu0
    %v3647 = vadd.f32 %v3477, %v3646
    %v3648 = vpop.f32.mrf.mxu0
    %v3649 = vadd.f32 %v3477, %v3648
    %3650 = vdwg.mxu0
    %v3651 = vadd.f32 %v3408, %v3619
    %v3652 = vadd.f32 %v3410, %v3621
    %v3653 = vxor.u32 %v3651, 2147483648
    %v3654 = vxor.u32 %v3652, 2147483648
    %v3655 = vmul.f32 %v3653, 1.442695
    %v3656 = vpow.pop %v3655
    %v3657 = vmul.f32 %v3654, 1.442695
    %v3658 = vpow.pop %v3657
    %v3659 = vadd.f32 %v3656, 1.0
    %v3660 = vadd.f32 %v3658, 1.0
    %v3661 = vrcp.pop %v3659
    %v3662 = vmul.f32 %v3659, %v3661
    %v3663 = vsub.f32 1.0, %v3662
    %v3664 = vmul.f32 %v3661, %v3663
    %v3665 = vadd.f32 %v3661, %v3664
    %vm3666 = vweird.f32 %v3659
    %vm3667 = vweird.f32 %v3661
    %vm3668 = vmor %vm3666, %vm3667
    %v3669 = vsel %vm3668, %v3661, %v3665
    %v3670 = vand.u32 2147483647, %v3659
    %vm3671 = vcmp.eq.f32.partialorder %v3670, 8.507059e+37
    %v3672 = vand.u32 %v3659, 2147483648
    %v3673 = vor.u32 1.1754944e-38, %v3672
    %v3674 = vsel %vm3671, %v3673, %v3669
    %v3675 = vmul.f32 1.0, %v3674
    %v3676 = vrcp.pop %v3660
    %v3677 = vmul.f32 %v3660, %v3676
    %v3678 = vsub.f32 1.0, %v3677
    %v3679 = vmul.f32 %v3676, %v3678
    %v3680 = vadd.f32 %v3676, %v3679
    %vm3681 = vweird.f32 %v3660
    %vm3682 = vweird.f32 %v3676
    %vm3683 = vmor %vm3681, %vm3682
    %v3684 = vsel %vm3683, %v3676, %v3680
    %v3685 = vand.u32 2147483647, %v3660
    %vm3686 = vcmp.eq.f32.partialorder %v3685, 8.507059e+37
    %v3687 = vand.u32 %v3660, 2147483648
    %v3688 = vor.u32 1.1754944e-38, %v3687
    %v3689 = vsel %vm3686, %v3688, %v3684
    %v3690 = vmul.f32 1.0, %v3689
    %v3691 = vadd.f32 %v3422, %v3633
    %v3692 = vadd.f32 %v3424, %v3635
    %v3693 = vxor.u32 %v3691, 2147483648
    %v3694 = vxor.u32 %v3692, 2147483648
    %v3695 = vmul.f32 %v3693, 1.442695
    %v3696 = vpow.pop %v3695
    %v3697 = vmul.f32 %v3694, 1.442695
    %v3698 = vpow.pop %v3697
    %v3699 = vadd.f32 %v3696, 1.0
    %v3700 = vadd.f32 %v3698, 1.0
    %v3701 = vrcp.pop %v3699
    %v3702 = vmul.f32 %v3699, %v3701
    %v3703 = vsub.f32 1.0, %v3702
    %v3704 = vmul.f32 %v3701, %v3703
    %v3705 = vadd.f32 %v3701, %v3704
    %vm3706 = vweird.f32 %v3699
    %vm3707 = vweird.f32 %v3701
    %vm3708 = vmor %vm3706, %vm3707
    %v3709 = vsel %vm3708, %v3701, %v3705
    %v3710 = vand.u32 2147483647, %v3699
    %vm3711 = vcmp.eq.f32.partialorder %v3710, 8.507059e+37
    %v3712 = vand.u32 %v3699, 2147483648
    %v3713 = vor.u32 1.1754944e-38, %v3712
    %v3714 = vsel %vm3711, %v3713, %v3709
    %v3715 = vmul.f32 1.0, %v3714
    %v3716 = vrcp.pop %v3700
    %v3717 = vmul.f32 %v3700, %v3716
    %v3718 = vsub.f32 1.0, %v3717
    %v3719 = vmul.f32 %v3716, %v3718
    %v3720 = vadd.f32 %v3716, %v3719
    %vm3721 = vweird.f32 %v3700
    %vm3722 = vweird.f32 %v3716
    %vm3723 = vmor %vm3721, %vm3722
    %v3724 = vsel %vm3723, %v3716, %v3720
    %v3725 = vand.u32 2147483647, %v3700
    %vm3726 = vcmp.eq.f32.partialorder %v3725, 8.507059e+37
    %v3727 = vand.u32 %v3700, 2147483648
    %v3728 = vor.u32 1.1754944e-38, %v3727
    %v3729 = vsel %vm3726, %v3728, %v3724
    %v3730 = vmul.f32 1.0, %v3729
    %v3731 = vmul.f32 %v3675, %v3647
    %v3732 = vmul.f32 %v3690, %v3649
    %v3733 = vadd.f32 %v3436, %v3731
    %v3734 = vadd.f32 %v3438, %v3732
    %v3735 = vtanh.pop %v3733
    %v3736 = vtanh.pop %v3734
    %v3737 = vsub.f32 1.0, %v3715
    %v3738 = vsub.f32 1.0, %v3730
    %v3739 = vmul.f32 %v3737, %v3735
    %v3740 = vmul.f32 %v3738, %v3736
    %v3741 = vmul.f32 %v3715, %v3138
    %v3742 = vmul.f32 %v3730, %v3139
    %v3743 = vadd.f32 %v3739, %v3741
    %v3744 = vadd.f32 %v3740, %v3742
    %v3745 = vld [vmem:[#allocation3] sm:$0xf]
    %v3746 = vld [vmem:[#allocation3 + $0x4] sm:$0xf]
    %v3747 = vld [vmem:[#allocation3 + $0x8] sm:$0xf]
    %v3748 = vld [vmem:[#allocation3 + $0xc] sm:$0xf]
    %v3749 = vld [vmem:[#allocation3 + $0x10] sm:$0xf]
    %v3750 = vld [vmem:[#allocation3 + $0x14] sm:$0xf]
    %v3751 = vld [vmem:[#allocation3 + $0x18] sm:$0xf]
    %v3752 = vld [vmem:[#allocation3 + $0x1c] sm:$0xf]
    %v3753 = vld [vmem:[#allocation3 + $0x20] sm:$0xf]
    %v3754 = vld [vmem:[#allocation3 + $0x24] sm:$0xf]
    %v3755 = vld [vmem:[#allocation3 + $0x28] sm:$0xf]
    %v3756 = vld [vmem:[#allocation3 + $0x2c] sm:$0xf]
    %v3757 = vld [vmem:[#allocation3 + $0x30] sm:$0xf]
    %v3758 = vld [vmem:[#allocation3 + $0x34] sm:$0xf]
    %v3759 = vld [vmem:[#allocation3 + $0x38] sm:$0xf]
    %v3760 = vld [vmem:[#allocation3 + $0x3c] sm:$0xf]
    %v3761 = vld [vmem:[#allocation3 + $0x40] sm:$0xf]
    %v3762 = vld [vmem:[#allocation3 + $0x44] sm:$0xf]
    %v3763 = vld [vmem:[#allocation3 + $0x48] sm:$0xf]
    %v3764 = vld [vmem:[#allocation3 + $0x4c] sm:$0xf]
    %v3765 = vld [vmem:[#allocation3 + $0x50] sm:$0xf]
    %v3766 = vld [vmem:[#allocation3 + $0x54] sm:$0xf]
    %v3767 = vld [vmem:[#allocation3 + $0x58] sm:$0xf]
    %v3768 = vld [vmem:[#allocation3 + $0x5c] sm:$0xf]
    %v3769 = vld [vmem:[#allocation3 + $0x60] sm:$0xf]
    %v3770 = vld [vmem:[#allocation3 + $0x64] sm:$0xf]
    %v3771 = vld [vmem:[#allocation3 + $0x68] sm:$0xf]
    %v3772 = vld [vmem:[#allocation3 + $0x6c] sm:$0xf]
    %v3773 = vld [vmem:[#allocation3 + $0x70] sm:$0xf]
    %v3774 = vld [vmem:[#allocation3 + $0x74] sm:$0xf]
    %v3775 = vld [vmem:[#allocation3 + $0x78] sm:$0xf]
    %v3776 = vld [vmem:[#allocation3 + $0x7c] sm:$0xf]
    %v3777 = vld [vmem:[#allocation3 + $0x80] sm:$0xf]
    %v3778 = vld [vmem:[#allocation3 + $0x84] sm:$0xf]
    %v3779 = vld [vmem:[#allocation3 + $0x88] sm:$0xf]
    %v3780 = vld [vmem:[#allocation3 + $0x8c] sm:$0xf]
    %v3781 = vld [vmem:[#allocation3 + $0x90] sm:$0xf]
    %v3782 = vld [vmem:[#allocation3 + $0x94] sm:$0xf]
    %v3783 = vld [vmem:[#allocation3 + $0x98] sm:$0xf]
    %v3784 = vld [vmem:[#allocation3 + $0x9c] sm:$0xf]
    %v3785 = vld [vmem:[#allocation3 + $0xa0] sm:$0xf]
    %v3786 = vld [vmem:[#allocation3 + $0xa4] sm:$0xf]
    %v3787 = vld [vmem:[#allocation3 + $0xa8] sm:$0xf]
    %v3788 = vld [vmem:[#allocation3 + $0xac] sm:$0xf]
    %v3789 = vld [vmem:[#allocation3 + $0xb0] sm:$0xf]
    %v3790 = vld [vmem:[#allocation3 + $0xb4] sm:$0xf]
    %v3791 = vld [vmem:[#allocation3 + $0xb8] sm:$0xf]
    %v3792 = vld [vmem:[#allocation3 + $0xbc] sm:$0xf]
    %v3793 = vld [vmem:[#allocation3 + $0xc0] sm:$0xf]
    %v3794 = vld [vmem:[#allocation3 + $0xc4] sm:$0xf]
    %v3795 = vld [vmem:[#allocation3 + $0xc8] sm:$0xf]
    %v3796 = vld [vmem:[#allocation3 + $0xcc] sm:$0xf]
    %v3797 = vld [vmem:[#allocation3 + $0xd0] sm:$0xf]
    %v3798 = vld [vmem:[#allocation3 + $0xd4] sm:$0xf]
    %v3799 = vld [vmem:[#allocation3 + $0xd8] sm:$0xf]
    %v3800 = vld [vmem:[#allocation3 + $0xdc] sm:$0xf]
    %v3801 = vld [vmem:[#allocation3 + $0xe0] sm:$0xf]
    %v3802 = vld [vmem:[#allocation3 + $0xe4] sm:$0xf]
    %v3803 = vld [vmem:[#allocation3 + $0xe8] sm:$0xf]
    %v3804 = vld [vmem:[#allocation3 + $0xec] sm:$0xf]
    %v3805 = vld [vmem:[#allocation3 + $0xf0] sm:$0xf]
    %v3806 = vld [vmem:[#allocation3 + $0xf4] sm:$0xf]
    %v3807 = vld [vmem:[#allocation3 + $0xf8] sm:$0xf]
    %v3808 = vld [vmem:[#allocation3 + $0xfc] sm:$0xf]
    %v3809 = vld [vmem:[#allocation3 + $0x100] sm:$0xf]
    %v3810 = vld [vmem:[#allocation3 + $0x104] sm:$0xf]
    %v3811 = vld [vmem:[#allocation3 + $0x108] sm:$0xf]
    %v3812 = vld [vmem:[#allocation3 + $0x10c] sm:$0xf]
    %v3813 = vld [vmem:[#allocation3 + $0x110] sm:$0xf]
    %v3814 = vld [vmem:[#allocation3 + $0x114] sm:$0xf]
    %v3815 = vld [vmem:[#allocation3 + $0x118] sm:$0xf]
    %v3816 = vld [vmem:[#allocation3 + $0x11c] sm:$0xf]
    %v3817 = vld [vmem:[#allocation3 + $0x120] sm:$0xf]
    %v3818 = vld [vmem:[#allocation3 + $0x124] sm:$0xf]
    %v3819 = vld [vmem:[#allocation3 + $0x128] sm:$0xf]
    %v3820 = vld [vmem:[#allocation3 + $0x12c] sm:$0xf]
    %v3821 = vld [vmem:[#allocation3 + $0x130] sm:$0xf]
    %v3822 = vld [vmem:[#allocation3 + $0x134] sm:$0xf]
    %v3823 = vld [vmem:[#allocation3 + $0x138] sm:$0xf]
    %v3824 = vld [vmem:[#allocation3 + $0x13c] sm:$0xf]
    %v3825 = vld [vmem:[#allocation3 + $0x140] sm:$0xf]
    %v3826 = vld [vmem:[#allocation3 + $0x144] sm:$0xf]
    %v3827 = vld [vmem:[#allocation3 + $0x148] sm:$0xf]
    %v3828 = vld [vmem:[#allocation3 + $0x14c] sm:$0xf]
    %v3829 = vld [vmem:[#allocation3 + $0x150] sm:$0xf]
    %v3830 = vld [vmem:[#allocation3 + $0x154] sm:$0xf]
    %v3831 = vld [vmem:[#allocation3 + $0x158] sm:$0xf]
    %v3832 = vld [vmem:[#allocation3 + $0x15c] sm:$0xf]
    %v3833 = vld [vmem:[#allocation3 + $0x160] sm:$0xf]
    %v3834 = vld [vmem:[#allocation3 + $0x164] sm:$0xf]
    %v3835 = vld [vmem:[#allocation3 + $0x168] sm:$0xf]
    %v3836 = vld [vmem:[#allocation3 + $0x16c] sm:$0xf]
    %v3837 = vld [vmem:[#allocation3 + $0x170] sm:$0xf]
    %v3838 = vld [vmem:[#allocation3 + $0x174] sm:$0xf]
    %v3839 = vld [vmem:[#allocation3 + $0x178] sm:$0xf]
    %v3840 = vld [vmem:[#allocation3 + $0x17c] sm:$0xf]
    %v3841 = vld [vmem:[#allocation3 + $0x180] sm:$0xf]
    %v3842 = vld [vmem:[#allocation3 + $0x184] sm:$0xf]
    %v3843 = vld [vmem:[#allocation3 + $0x188] sm:$0xf]
    %v3844 = vld [vmem:[#allocation3 + $0x18c] sm:$0xf]
    %v3845 = vld [vmem:[#allocation3 + $0x190] sm:$0xf]
    %v3846 = vld [vmem:[#allocation3 + $0x194] sm:$0xf]
    %v3847 = vld [vmem:[#allocation3 + $0x198] sm:$0xf]
    %v3848 = vld [vmem:[#allocation3 + $0x19c] sm:$0xf]
    %v3849 = vld [vmem:[#allocation3 + $0x1a0] sm:$0xf]
    %v3850 = vld [vmem:[#allocation3 + $0x1a4] sm:$0xf]
    %v3851 = vld [vmem:[#allocation3 + $0x1a8] sm:$0xf]
    %v3852 = vld [vmem:[#allocation3 + $0x1ac] sm:$0xf]
    %v3853 = vld [vmem:[#allocation3 + $0x1b0] sm:$0xf]
    %v3854 = vld [vmem:[#allocation3 + $0x1b4] sm:$0xf]
    %v3855 = vld [vmem:[#allocation3 + $0x1b8] sm:$0xf]
    %v3856 = vld [vmem:[#allocation3 + $0x1bc] sm:$0xf]
    %v3857 = vld [vmem:[#allocation3 + $0x1c0] sm:$0xf]
    %v3858 = vld [vmem:[#allocation3 + $0x1c4] sm:$0xf]
    %v3859 = vld [vmem:[#allocation3 + $0x1c8] sm:$0xf]
    %v3860 = vld [vmem:[#allocation3 + $0x1cc] sm:$0xf]
    %v3861 = vld [vmem:[#allocation3 + $0x1d0] sm:$0xf]
    %v3862 = vld [vmem:[#allocation3 + $0x1d4] sm:$0xf]
    %v3863 = vld [vmem:[#allocation3 + $0x1d8] sm:$0xf]
    %v3864 = vld [vmem:[#allocation3 + $0x1dc] sm:$0xf]
    %v3865 = vld [vmem:[#allocation3 + $0x1e0] sm:$0xf]
    %v3866 = vld [vmem:[#allocation3 + $0x1e4] sm:$0xf]
    %v3867 = vld [vmem:[#allocation3 + $0x1e8] sm:$0xf]
    %v3868 = vld [vmem:[#allocation3 + $0x1ec] sm:$0xf]
    %v3869 = vld [vmem:[#allocation3 + $0x1f0] sm:$0xf]
    %v3870 = vld [vmem:[#allocation3 + $0x1f4] sm:$0xf]
    %v3871 = vld [vmem:[#allocation3 + $0x1f8] sm:$0xf]
    %v3872 = vld [vmem:[#allocation3 + $0x1fc] sm:$0xf]
    %v3873 = vld [vmem:[#allocation3 + $0x200] sm:$0xf]
    %v3874 = vld [vmem:[#allocation3 + $0x204] sm:$0xf]
    %v3875 = vld [vmem:[#allocation3 + $0x208] sm:$0xf]
    %v3876 = vld [vmem:[#allocation3 + $0x20c] sm:$0xf]
    %v3877 = vld [vmem:[#allocation3 + $0x210] sm:$0xf]
    %v3878 = vld [vmem:[#allocation3 + $0x214] sm:$0xf]
    %v3879 = vld [vmem:[#allocation3 + $0x218] sm:$0xf]
    %v3880 = vld [vmem:[#allocation3 + $0x21c] sm:$0xf]
    %v3881 = vld [vmem:[#allocation3 + $0x220] sm:$0xf]
    %v3882 = vld [vmem:[#allocation3 + $0x224] sm:$0xf]
    %v3883 = vld [vmem:[#allocation3 + $0x228] sm:$0xf]
    %v3884 = vld [vmem:[#allocation3 + $0x22c] sm:$0xf]
    %v3885 = vld [vmem:[#allocation3 + $0x230] sm:$0xf]
    %v3886 = vld [vmem:[#allocation3 + $0x234] sm:$0xf]
    %v3887 = vld [vmem:[#allocation3 + $0x238] sm:$0xf]
    %v3888 = vld [vmem:[#allocation3 + $0x23c] sm:$0xf]
    %v3889 = vld [vmem:[#allocation3 + $0x240] sm:$0xf]
    %v3890 = vld [vmem:[#allocation3 + $0x244] sm:$0xf]
    %v3891 = vld [vmem:[#allocation3 + $0x248] sm:$0xf]
    %v3892 = vld [vmem:[#allocation3 + $0x24c] sm:$0xf]
    %v3893 = vld [vmem:[#allocation3 + $0x250] sm:$0xf]
    %v3894 = vld [vmem:[#allocation3 + $0x254] sm:$0xf]
    %v3895 = vld [vmem:[#allocation3 + $0x258] sm:$0xf]
    %v3896 = vld [vmem:[#allocation3 + $0x25c] sm:$0xf]
    %v3897 = vld [vmem:[#allocation3 + $0x260] sm:$0xf]
    %v3898 = vld [vmem:[#allocation3 + $0x264] sm:$0xf]
    %v3899 = vld [vmem:[#allocation3 + $0x268] sm:$0xf]
    %v3900 = vld [vmem:[#allocation3 + $0x26c] sm:$0xf]
    %v3901 = vld [vmem:[#allocation3 + $0x270] sm:$0xf]
    %v3902 = vld [vmem:[#allocation3 + $0x274] sm:$0xf]
    %v3903 = vld [vmem:[#allocation3 + $0x278] sm:$0xf]
    %v3904 = vld [vmem:[#allocation3 + $0x27c] sm:$0xf]
    %v3905 = vld [vmem:[#allocation3 + $0x280] sm:$0xf]
    %v3906 = vld [vmem:[#allocation3 + $0x284] sm:$0xf]
    %v3907 = vld [vmem:[#allocation3 + $0x288] sm:$0xf]
    %v3908 = vld [vmem:[#allocation3 + $0x28c] sm:$0xf]
    %v3909 = vld [vmem:[#allocation3 + $0x290] sm:$0xf]
    %v3910 = vld [vmem:[#allocation3 + $0x294] sm:$0xf]
    %v3911 = vld [vmem:[#allocation3 + $0x298] sm:$0xf]
    %v3912 = vld [vmem:[#allocation3 + $0x29c] sm:$0xf]
    %v3913 = vld [vmem:[#allocation3 + $0x2a0] sm:$0xf]
    %v3914 = vld [vmem:[#allocation3 + $0x2a4] sm:$0xf]
    %v3915 = vld [vmem:[#allocation3 + $0x2a8] sm:$0xf]
    %v3916 = vld [vmem:[#allocation3 + $0x2ac] sm:$0xf]
    %v3917 = vld [vmem:[#allocation3 + $0x2b0] sm:$0xf]
    %v3918 = vld [vmem:[#allocation3 + $0x2b4] sm:$0xf]
    %v3919 = vld [vmem:[#allocation3 + $0x2b8] sm:$0xf]
    %v3920 = vld [vmem:[#allocation3 + $0x2bc] sm:$0xf]
    %v3921 = vld [vmem:[#allocation3 + $0x2c0] sm:$0xf]
    %v3922 = vld [vmem:[#allocation3 + $0x2c4] sm:$0xf]
    %v3923 = vld [vmem:[#allocation3 + $0x2c8] sm:$0xf]
    %v3924 = vld [vmem:[#allocation3 + $0x2cc] sm:$0xf]
    %v3925 = vld [vmem:[#allocation3 + $0x2d0] sm:$0xf]
    %v3926 = vld [vmem:[#allocation3 + $0x2d4] sm:$0xf]
    %v3927 = vld [vmem:[#allocation3 + $0x2d8] sm:$0xf]
    %v3928 = vld [vmem:[#allocation3 + $0x2dc] sm:$0xf]
    %v3929 = vld [vmem:[#allocation3 + $0x2e0] sm:$0xf]
    %v3930 = vld [vmem:[#allocation3 + $0x2e4] sm:$0xf]
    %v3931 = vld [vmem:[#allocation3 + $0x2e8] sm:$0xf]
    %v3932 = vld [vmem:[#allocation3 + $0x2ec] sm:$0xf]
    %v3933 = vld [vmem:[#allocation3 + $0x2f0] sm:$0xf]
    %v3934 = vld [vmem:[#allocation3 + $0x2f4] sm:$0xf]
    %v3935 = vld [vmem:[#allocation3 + $0x2f8] sm:$0xf]
    %v3936 = vld [vmem:[#allocation3 + $0x2fc] sm:$0xf]
    %v3937 = vld [vmem:[#allocation3 + $0x300] sm:$0xf]
    %v3938 = vld [vmem:[#allocation3 + $0x304] sm:$0xf]
    %v3939 = vld [vmem:[#allocation3 + $0x308] sm:$0xf]
    %v3940 = vld [vmem:[#allocation3 + $0x30c] sm:$0xf]
    %v3941 = vld [vmem:[#allocation3 + $0x310] sm:$0xf]
    %v3942 = vld [vmem:[#allocation3 + $0x314] sm:$0xf]
    %v3943 = vld [vmem:[#allocation3 + $0x318] sm:$0xf]
    %v3944 = vld [vmem:[#allocation3 + $0x31c] sm:$0xf]
    %v3945 = vld [vmem:[#allocation3 + $0x320] sm:$0xf]
    %v3946 = vld [vmem:[#allocation3 + $0x324] sm:$0xf]
    %v3947 = vld [vmem:[#allocation3 + $0x328] sm:$0xf]
    %v3948 = vld [vmem:[#allocation3 + $0x32c] sm:$0xf]
    %v3949 = vld [vmem:[#allocation3 + $0x330] sm:$0xf]
    %v3950 = vld [vmem:[#allocation3 + $0x334] sm:$0xf]
    %v3951 = vld [vmem:[#allocation3 + $0x338] sm:$0xf]
    %v3952 = vld [vmem:[#allocation3 + $0x33c] sm:$0xf]
    %v3953 = vld [vmem:[#allocation3 + $0x340] sm:$0xf]
    %v3954 = vld [vmem:[#allocation3 + $0x344] sm:$0xf]
    %v3955 = vld [vmem:[#allocation3 + $0x348] sm:$0xf]
    %v3956 = vld [vmem:[#allocation3 + $0x34c] sm:$0xf]
    %v3957 = vld [vmem:[#allocation3 + $0x350] sm:$0xf]
    %v3958 = vld [vmem:[#allocation3 + $0x354] sm:$0xf]
    %v3959 = vld [vmem:[#allocation3 + $0x358] sm:$0xf]
    %v3960 = vld [vmem:[#allocation3 + $0x35c] sm:$0xf]
    %v3961 = vld [vmem:[#allocation3 + $0x360] sm:$0xf]
    %v3962 = vld [vmem:[#allocation3 + $0x364] sm:$0xf]
    %v3963 = vld [vmem:[#allocation3 + $0x368] sm:$0xf]
    %v3964 = vld [vmem:[#allocation3 + $0x36c] sm:$0xf]
    %v3965 = vld [vmem:[#allocation3 + $0x370] sm:$0xf]
    %v3966 = vld [vmem:[#allocation3 + $0x374] sm:$0xf]
    %v3967 = vld [vmem:[#allocation3 + $0x378] sm:$0xf]
    %v3968 = vld [vmem:[#allocation3 + $0x37c] sm:$0xf]
    %v3969 = vld [vmem:[#allocation3 + $0x380] sm:$0xf]
    %v3970 = vld [vmem:[#allocation3 + $0x384] sm:$0xf]
    %v3971 = vld [vmem:[#allocation3 + $0x388] sm:$0xf]
    %v3972 = vld [vmem:[#allocation3 + $0x38c] sm:$0xf]
    %v3973 = vld [vmem:[#allocation3 + $0x390] sm:$0xf]
    %v3974 = vld [vmem:[#allocation3 + $0x394] sm:$0xf]
    %v3975 = vld [vmem:[#allocation3 + $0x398] sm:$0xf]
    %v3976 = vld [vmem:[#allocation3 + $0x39c] sm:$0xf]
    %v3977 = vld [vmem:[#allocation3 + $0x3a0] sm:$0xf]
    %v3978 = vld [vmem:[#allocation3 + $0x3a4] sm:$0xf]
    %v3979 = vld [vmem:[#allocation3 + $0x3a8] sm:$0xf]
    %v3980 = vld [vmem:[#allocation3 + $0x3ac] sm:$0xf]
    %v3981 = vld [vmem:[#allocation3 + $0x3b0] sm:$0xf]
    %v3982 = vld [vmem:[#allocation3 + $0x3b4] sm:$0xf]
    %v3983 = vld [vmem:[#allocation3 + $0x3b8] sm:$0xf]
    %v3984 = vld [vmem:[#allocation3 + $0x3bc] sm:$0xf]
    %v3985 = vld [vmem:[#allocation3 + $0x3c0] sm:$0xf]
    %v3986 = vld [vmem:[#allocation3 + $0x3c4] sm:$0xf]
    %v3987 = vld [vmem:[#allocation3 + $0x3c8] sm:$0xf]
    %v3988 = vld [vmem:[#allocation3 + $0x3cc] sm:$0xf]
    %v3989 = vld [vmem:[#allocation3 + $0x3d0] sm:$0xf]
    %v3990 = vld [vmem:[#allocation3 + $0x3d4] sm:$0xf]
    %v3991 = vld [vmem:[#allocation3 + $0x3d8] sm:$0xf]
    %v3992 = vld [vmem:[#allocation3 + $0x3dc] sm:$0xf]
    %v3993 = vld [vmem:[#allocation3 + $0x3e0] sm:$0xf]
    %v3994 = vld [vmem:[#allocation3 + $0x3e4] sm:$0xf]
    %v3995 = vld [vmem:[#allocation3 + $0x3e8] sm:$0xf]
    %v3996 = vld [vmem:[#allocation3 + $0x3ec] sm:$0xf]
    %v3997 = vld [vmem:[#allocation3 + $0x3f0] sm:$0xf]
    %v3998 = vld [vmem:[#allocation3 + $0x3f4] sm:$0xf]
    %v3999 = vld [vmem:[#allocation3 + $0x3f8] sm:$0xf]
    %v4000 = vld [vmem:[#allocation3 + $0x3fc] sm:$0xf]
    %v4001 = vpack.c.bf16 %v3744, %v3743
    %v4002 = vld [vmem:[%s11] sm:$0xf]
    %v4003 = vld [vmem:[%s11 + $0x4] sm:$0xf]
    %v4004 = vld [vmem:[%s11 + $0x8] sm:$0xf]
    %v4005 = vld [vmem:[%s11 + $0xc] sm:$0xf]
    %v4006 = vld [vmem:[%s11 + $0x10] sm:$0xf]
    %v4007 = vld [vmem:[%s11 + $0x14] sm:$0xf]
    %v4008 = vld [vmem:[%s11 + $0x18] sm:$0xf]
    %v4009 = vld [vmem:[%s11 + $0x1c] sm:$0xf]
    %v4010 = vld [vmem:[%s11 + $0x20] sm:$0xf]
    %v4011 = vld [vmem:[%s11 + $0x24] sm:$0xf]
    %v4012 = vld [vmem:[%s11 + $0x28] sm:$0xf]
    %v4013 = vld [vmem:[%s11 + $0x2c] sm:$0xf]
    %v4014 = vld [vmem:[%s11 + $0x30] sm:$0xf]
    %v4015 = vld [vmem:[%s11 + $0x34] sm:$0xf]
    %v4016 = vld [vmem:[%s11 + $0x38] sm:$0xf]
    %v4017 = vld [vmem:[%s11 + $0x3c] sm:$0xf]
    %v4034 = vunpack.c.l.b16 %v4002
    %v4035 = vunpack.c.l.b16 %v4003
    %v4036 = vunpack.c.l.b16 %v4004
    %v4037 = vunpack.c.l.b16 %v4005
    %v4038 = vunpack.c.l.b16 %v4006
    %v4039 = vunpack.c.l.b16 %v4007
    %v4040 = vunpack.c.l.b16 %v4008
    %v4041 = vunpack.c.l.b16 %v4009
    %v4042 = vunpack.c.l.b16 %v4010
    %v4043 = vunpack.c.l.b16 %v4011
    %v4044 = vunpack.c.l.b16 %v4012
    %v4045 = vunpack.c.l.b16 %v4013
    %v4046 = vunpack.c.l.b16 %v4014
    %v4047 = vunpack.c.l.b16 %v4015
    %v4048 = vunpack.c.l.b16 %v4016
    %v4049 = vunpack.c.l.b16 %v4017
    %v4050 = vpack.c.b16 %v4035, %v4034
    %v4051 = vpack.c.b16 %v4037, %v4036
    %v4052 = vpack.c.b16 %v4039, %v4038
    %v4053 = vpack.c.b16 %v4041, %v4040
    %v4054 = vpack.c.b16 %v4043, %v4042
    %v4055 = vpack.c.b16 %v4045, %v4044
    %v4056 = vpack.c.b16 %v4047, %v4046
    %v4057 = vpack.c.b16 %v4049, %v4048
    %4066 = vmatpush.bf16.msra.mxu0 %v4057
    %4067 = vmatpush.bf16.msra.mxu0 %v4056
    %4068 = vmatpush.bf16.msra.mxu0 %v4055
    %4069 = vmatpush.bf16.msra.mxu0 %v4054
    %4070 = vmatpush.bf16.msra.mxu0 %v4053
    %4071 = vmatpush.bf16.msra.mxu0 %v4052
    %4072 = vmatpush.bf16.msra.mxu0 %v4051
    %4073 = vmatpush.bf16.msra.mxu0 %v4050
    %4074 = vmatmul.bf16.gmra.mxu0 %v4001
    %v4075 = vpop.f32.mrf.mxu0
    %v4076 = vadd.f32 0.0, %v4075
    %v4077 = vpop.f32.mrf.mxu0
    %v4078 = vadd.f32 0.0, %v4077
    %4079 = vdwg.mxu0
    %v4080 = vpack.c.bf16 %v4076, %v4076
    %v4081 = vpack.c.bf16 %v4078, %v4078
    %v4084 = vrot.slane %v4080, 3
    %v4085 = vrot.slane %v4081, 3
    %vm4086 = vcmask 1040384
    %v4089 = vsel %vm4086, %v4080, %v4084
    %vm4091 = vcmask 1041409
    %v4092 = vsel %vm4091, %v4080, %v4084
    %v4094 = vrot.slane %v4092, 1
    %vm4095 = vcmask 1042434
    %v4096 = vsel %vm4095, %v4080, %v4084
    %v4098 = vrot.slane %v4096, 2
    %vm4099 = vcmask 1043459
    %v4100 = vsel %vm4099, %v4080, %v4084
    %v4102 = vrot.slane %v4100, 3
    %v4105 = vsel %vm4086, %v4081, %v4085
    %v4107 = vsel %vm4091, %v4081, %v4085
    %v4109 = vrot.slane %v4107, 1
    %v4110 = vsel %vm4095, %v4081, %v4085
    %v4112 = vrot.slane %v4110, 2
    %v4113 = vsel %vm4099, %v4081, %v4085
    %v4115 = vrot.slane %v4113, 3
    %v4116 = vunpack.i.l.s16 %v4089
    %v4117 = vunpack.i.h.s16 %v4089
    %v4118 = vunpack.i.l.s16 %v4094
    %v4119 = vunpack.i.h.s16 %v4094
    %v4120 = vunpack.i.l.s16 %v4098
    %v4121 = vunpack.i.h.s16 %v4098
    %v4122 = vunpack.i.l.s16 %v4102
    %v4123 = vunpack.i.h.s16 %v4102
    %v4124 = vunpack.i.l.s16 %v4105
    %v4125 = vunpack.i.h.s16 %v4105
    %v4126 = vunpack.i.l.s16 %v4109
    %v4127 = vunpack.i.h.s16 %v4109
    %v4128 = vunpack.i.l.s16 %v4112
    %v4129 = vunpack.i.h.s16 %v4112
    %v4130 = vunpack.i.l.s16 %v4115
    %v4131 = vunpack.i.h.s16 %v4115
    %v4132 = vpack.i.b16 %v4116, %v4116
    %v4133 = vperm.slane %v4132, 0
    %v4151 = vunpack.c.l.b16 %v3745
    %v4152 = vunpack.c.l.b16 %v3746
    %v4153 = vunpack.c.l.b16 %v3747
    %v4154 = vunpack.c.l.b16 %v3748
    %v4155 = vunpack.c.l.b16 %v3749
    %v4156 = vunpack.c.l.b16 %v3750
    %v4157 = vunpack.c.l.b16 %v3751
    %v4158 = vunpack.c.l.b16 %v3752
    %v4159 = vunpack.c.l.b16 %v3753
    %v4160 = vunpack.c.l.b16 %v3754
    %v4161 = vunpack.c.l.b16 %v3755
    %v4162 = vunpack.c.l.b16 %v3756
    %v4163 = vunpack.c.l.b16 %v3757
    %v4164 = vunpack.c.l.b16 %v3758
    %v4165 = vunpack.c.l.b16 %v3759
    %v4166 = vunpack.c.l.b16 %v3760
    %v4167 = vpack.c.b16 %v4152, %v4151
    %v4168 = vpack.c.b16 %v4154, %v4153
    %v4169 = vpack.c.b16 %v4156, %v4155
    %v4170 = vpack.c.b16 %v4158, %v4157
    %v4171 = vpack.c.b16 %v4160, %v4159
    %v4172 = vpack.c.b16 %v4162, %v4161
    %v4173 = vpack.c.b16 %v4164, %v4163
    %v4174 = vpack.c.b16 %v4166, %v4165
    %4183 = vmatpush.bf16.xpose.msra.mxu0 %v4174
    %4184 = vmatpush.bf16.xpose.msra.mxu0 %v4173
    %4185 = vmatpush.bf16.xpose.msra.mxu0 %v4172
    %4186 = vmatpush.bf16.xpose.msra.mxu0 %v4171
    %4187 = vmatpush.bf16.xpose.msra.mxu0 %v4170
    %4188 = vmatpush.bf16.xpose.msra.mxu0 %v4169
    %4189 = vmatpush.bf16.xpose.msra.mxu0 %v4168
    %4190 = vmatpush.bf16.xpose.msra.mxu0 %v4167
    %4191 = vmatmul.bf16.gmra.mxu0 %v4133
    %v4192 = vpop.f32.mrf.mxu0
    %v4193 = vadd.f32 0.0, %v4192
    %v4194 = vpop.f32.mrf.mxu0
    %4195 = vdwg.mxu0
    %v4196 = vpack.i.b16 %v4117, %v4117
    %v4197 = vperm.slane %v4196, 0
    %v4215 = vunpack.c.l.b16 %v3761
    %v4216 = vunpack.c.l.b16 %v3762
    %v4217 = vunpack.c.l.b16 %v3763
    %v4218 = vunpack.c.l.b16 %v3764
    %v4219 = vunpack.c.l.b16 %v3765
    %v4220 = vunpack.c.l.b16 %v3766
    %v4221 = vunpack.c.l.b16 %v3767
    %v4222 = vunpack.c.l.b16 %v3768
    %v4223 = vunpack.c.l.b16 %v3769
    %v4224 = vunpack.c.l.b16 %v3770
    %v4225 = vunpack.c.l.b16 %v3771
    %v4226 = vunpack.c.l.b16 %v3772
    %v4227 = vunpack.c.l.b16 %v3773
    %v4228 = vunpack.c.l.b16 %v3774
    %v4229 = vunpack.c.l.b16 %v3775
    %v4230 = vunpack.c.l.b16 %v3776
    %v4231 = vpack.c.b16 %v4216, %v4215
    %v4232 = vpack.c.b16 %v4218, %v4217
    %v4233 = vpack.c.b16 %v4220, %v4219
    %v4234 = vpack.c.b16 %v4222, %v4221
    %v4235 = vpack.c.b16 %v4224, %v4223
    %v4236 = vpack.c.b16 %v4226, %v4225
    %v4237 = vpack.c.b16 %v4228, %v4227
    %v4238 = vpack.c.b16 %v4230, %v4229
    %4247 = vmatpush.bf16.xpose.msra.mxu0 %v4238
    %4248 = vmatpush.bf16.xpose.msra.mxu0 %v4237
    %4249 = vmatpush.bf16.xpose.msra.mxu0 %v4236
    %4250 = vmatpush.bf16.xpose.msra.mxu0 %v4235
    %4251 = vmatpush.bf16.xpose.msra.mxu0 %v4234
    %4252 = vmatpush.bf16.xpose.msra.mxu0 %v4233
    %4253 = vmatpush.bf16.xpose.msra.mxu0 %v4232
    %4254 = vmatpush.bf16.xpose.msra.mxu0 %v4231
    %4255 = vmatmul.bf16.gmra.mxu0 %v4197
    %v4256 = vpop.f32.mrf.mxu0
    %v4257 = vadd.f32 0.0, %v4256
    %v4258 = vpop.f32.mrf.mxu0
    %4259 = vdwg.mxu0
    %v4260 = vpack.i.b16 %v4118, %v4118
    %v4261 = vperm.slane %v4260, 0
    %v4279 = vunpack.c.l.b16 %v3777
    %v4280 = vunpack.c.l.b16 %v3778
    %v4281 = vunpack.c.l.b16 %v3779
    %v4282 = vunpack.c.l.b16 %v3780
    %v4283 = vunpack.c.l.b16 %v3781
    %v4284 = vunpack.c.l.b16 %v3782
    %v4285 = vunpack.c.l.b16 %v3783
    %v4286 = vunpack.c.l.b16 %v3784
    %v4287 = vunpack.c.l.b16 %v3785
    %v4288 = vunpack.c.l.b16 %v3786
    %v4289 = vunpack.c.l.b16 %v3787
    %v4290 = vunpack.c.l.b16 %v3788
    %v4291 = vunpack.c.l.b16 %v3789
    %v4292 = vunpack.c.l.b16 %v3790
    %v4293 = vunpack.c.l.b16 %v3791
    %v4294 = vunpack.c.l.b16 %v3792
    %v4295 = vpack.c.b16 %v4280, %v4279
    %v4296 = vpack.c.b16 %v4282, %v4281
    %v4297 = vpack.c.b16 %v4284, %v4283
    %v4298 = vpack.c.b16 %v4286, %v4285
    %v4299 = vpack.c.b16 %v4288, %v4287
    %v4300 = vpack.c.b16 %v4290, %v4289
    %v4301 = vpack.c.b16 %v4292, %v4291
    %v4302 = vpack.c.b16 %v4294, %v4293
    %4311 = vmatpush.bf16.xpose.msra.mxu0 %v4302
    %4312 = vmatpush.bf16.xpose.msra.mxu0 %v4301
    %4313 = vmatpush.bf16.xpose.msra.mxu0 %v4300
    %4314 = vmatpush.bf16.xpose.msra.mxu0 %v4299
    %4315 = vmatpush.bf16.xpose.msra.mxu0 %v4298
    %4316 = vmatpush.bf16.xpose.msra.mxu0 %v4297
    %4317 = vmatpush.bf16.xpose.msra.mxu0 %v4296
    %4318 = vmatpush.bf16.xpose.msra.mxu0 %v4295
    %4319 = vmatmul.bf16.gmra.mxu0 %v4261
    %v4320 = vpop.f32.mrf.mxu0
    %v4321 = vadd.f32 0.0, %v4320
    %v4322 = vpop.f32.mrf.mxu0
    %4323 = vdwg.mxu0
    %v4324 = vpack.i.b16 %v4119, %v4119
    %v4325 = vperm.slane %v4324, 0
    %v4343 = vunpack.c.l.b16 %v3793
    %v4344 = vunpack.c.l.b16 %v3794
    %v4345 = vunpack.c.l.b16 %v3795
    %v4346 = vunpack.c.l.b16 %v3796
    %v4347 = vunpack.c.l.b16 %v3797
    %v4348 = vunpack.c.l.b16 %v3798
    %v4349 = vunpack.c.l.b16 %v3799
    %v4350 = vunpack.c.l.b16 %v3800
    %v4351 = vunpack.c.l.b16 %v3801
    %v4352 = vunpack.c.l.b16 %v3802
    %v4353 = vunpack.c.l.b16 %v3803
    %v4354 = vunpack.c.l.b16 %v3804
    %v4355 = vunpack.c.l.b16 %v3805
    %v4356 = vunpack.c.l.b16 %v3806
    %v4357 = vunpack.c.l.b16 %v3807
    %v4358 = vunpack.c.l.b16 %v3808
    %v4359 = vpack.c.b16 %v4344, %v4343
    %v4360 = vpack.c.b16 %v4346, %v4345
    %v4361 = vpack.c.b16 %v4348, %v4347
    %v4362 = vpack.c.b16 %v4350, %v4349
    %v4363 = vpack.c.b16 %v4352, %v4351
    %v4364 = vpack.c.b16 %v4354, %v4353
    %v4365 = vpack.c.b16 %v4356, %v4355
    %v4366 = vpack.c.b16 %v4358, %v4357
    %4375 = vmatpush.bf16.xpose.msra.mxu0 %v4366
    %4376 = vmatpush.bf16.xpose.msra.mxu0 %v4365
    %4377 = vmatpush.bf16.xpose.msra.mxu0 %v4364
    %4378 = vmatpush.bf16.xpose.msra.mxu0 %v4363
    %4379 = vmatpush.bf16.xpose.msra.mxu0 %v4362
    %4380 = vmatpush.bf16.xpose.msra.mxu0 %v4361
    %4381 = vmatpush.bf16.xpose.msra.mxu0 %v4360
    %4382 = vmatpush.bf16.xpose.msra.mxu0 %v4359
    %4383 = vmatmul.bf16.gmra.mxu0 %v4325
    %v4384 = vpop.f32.mrf.mxu0
    %v4385 = vadd.f32 0.0, %v4384
    %v4386 = vpop.f32.mrf.mxu0
    %4387 = vdwg.mxu0
    %v4388 = vpack.i.b16 %v4120, %v4120
    %v4389 = vperm.slane %v4388, 0
    %v4407 = vunpack.c.l.b16 %v3809
    %v4408 = vunpack.c.l.b16 %v3810
    %v4409 = vunpack.c.l.b16 %v3811
    %v4410 = vunpack.c.l.b16 %v3812
    %v4411 = vunpack.c.l.b16 %v3813
    %v4412 = vunpack.c.l.b16 %v3814
    %v4413 = vunpack.c.l.b16 %v3815
    %v4414 = vunpack.c.l.b16 %v3816
    %v4415 = vunpack.c.l.b16 %v3817
    %v4416 = vunpack.c.l.b16 %v3818
    %v4417 = vunpack.c.l.b16 %v3819
    %v4418 = vunpack.c.l.b16 %v3820
    %v4419 = vunpack.c.l.b16 %v3821
    %v4420 = vunpack.c.l.b16 %v3822
    %v4421 = vunpack.c.l.b16 %v3823
    %v4422 = vunpack.c.l.b16 %v3824
    %v4423 = vpack.c.b16 %v4408, %v4407
    %v4424 = vpack.c.b16 %v4410, %v4409
    %v4425 = vpack.c.b16 %v4412, %v4411
    %v4426 = vpack.c.b16 %v4414, %v4413
    %v4427 = vpack.c.b16 %v4416, %v4415
    %v4428 = vpack.c.b16 %v4418, %v4417
    %v4429 = vpack.c.b16 %v4420, %v4419
    %v4430 = vpack.c.b16 %v4422, %v4421
    %4439 = vmatpush.bf16.xpose.msra.mxu0 %v4430
    %4440 = vmatpush.bf16.xpose.msra.mxu0 %v4429
    %4441 = vmatpush.bf16.xpose.msra.mxu0 %v4428
    %4442 = vmatpush.bf16.xpose.msra.mxu0 %v4427
    %4443 = vmatpush.bf16.xpose.msra.mxu0 %v4426
    %4444 = vmatpush.bf16.xpose.msra.mxu0 %v4425
    %4445 = vmatpush.bf16.xpose.msra.mxu0 %v4424
    %4446 = vmatpush.bf16.xpose.msra.mxu0 %v4423
    %4447 = vmatmul.bf16.gmra.mxu0 %v4389
    %v4448 = vpop.f32.mrf.mxu0
    %v4449 = vadd.f32 0.0, %v4448
    %v4450 = vpop.f32.mrf.mxu0
    %4451 = vdwg.mxu0
    %v4452 = vpack.i.b16 %v4121, %v4121
    %v4453 = vperm.slane %v4452, 0
    %v4471 = vunpack.c.l.b16 %v3825
    %v4472 = vunpack.c.l.b16 %v3826
    %v4473 = vunpack.c.l.b16 %v3827
    %v4474 = vunpack.c.l.b16 %v3828
    %v4475 = vunpack.c.l.b16 %v3829
    %v4476 = vunpack.c.l.b16 %v3830
    %v4477 = vunpack.c.l.b16 %v3831
    %v4478 = vunpack.c.l.b16 %v3832
    %v4479 = vunpack.c.l.b16 %v3833
    %v4480 = vunpack.c.l.b16 %v3834
    %v4481 = vunpack.c.l.b16 %v3835
    %v4482 = vunpack.c.l.b16 %v3836
    %v4483 = vunpack.c.l.b16 %v3837
    %v4484 = vunpack.c.l.b16 %v3838
    %v4485 = vunpack.c.l.b16 %v3839
    %v4486 = vunpack.c.l.b16 %v3840
    %v4487 = vpack.c.b16 %v4472, %v4471
    %v4488 = vpack.c.b16 %v4474, %v4473
    %v4489 = vpack.c.b16 %v4476, %v4475
    %v4490 = vpack.c.b16 %v4478, %v4477
    %v4491 = vpack.c.b16 %v4480, %v4479
    %v4492 = vpack.c.b16 %v4482, %v4481
    %v4493 = vpack.c.b16 %v4484, %v4483
    %v4494 = vpack.c.b16 %v4486, %v4485
    %4503 = vmatpush.bf16.xpose.msra.mxu0 %v4494
    %4504 = vmatpush.bf16.xpose.msra.mxu0 %v4493
    %4505 = vmatpush.bf16.xpose.msra.mxu0 %v4492
    %4506 = vmatpush.bf16.xpose.msra.mxu0 %v4491
    %4507 = vmatpush.bf16.xpose.msra.mxu0 %v4490
    %4508 = vmatpush.bf16.xpose.msra.mxu0 %v4489
    %4509 = vmatpush.bf16.xpose.msra.mxu0 %v4488
    %4510 = vmatpush.bf16.xpose.msra.mxu0 %v4487
    %4511 = vmatmul.bf16.gmra.mxu0 %v4453
    %v4512 = vpop.f32.mrf.mxu0
    %v4513 = vadd.f32 0.0, %v4512
    %v4514 = vpop.f32.mrf.mxu0
    %4515 = vdwg.mxu0
    %v4516 = vpack.i.b16 %v4122, %v4122
    %v4517 = vperm.slane %v4516, 0
    %v4535 = vunpack.c.l.b16 %v3841
    %v4536 = vunpack.c.l.b16 %v3842
    %v4537 = vunpack.c.l.b16 %v3843
    %v4538 = vunpack.c.l.b16 %v3844
    %v4539 = vunpack.c.l.b16 %v3845
    %v4540 = vunpack.c.l.b16 %v3846
    %v4541 = vunpack.c.l.b16 %v3847
    %v4542 = vunpack.c.l.b16 %v3848
    %v4543 = vunpack.c.l.b16 %v3849
    %v4544 = vunpack.c.l.b16 %v3850
    %v4545 = vunpack.c.l.b16 %v3851
    %v4546 = vunpack.c.l.b16 %v3852
    %v4547 = vunpack.c.l.b16 %v3853
    %v4548 = vunpack.c.l.b16 %v3854
    %v4549 = vunpack.c.l.b16 %v3855
    %v4550 = vunpack.c.l.b16 %v3856
    %v4551 = vpack.c.b16 %v4536, %v4535
    %v4552 = vpack.c.b16 %v4538, %v4537
    %v4553 = vpack.c.b16 %v4540, %v4539
    %v4554 = vpack.c.b16 %v4542, %v4541
    %v4555 = vpack.c.b16 %v4544, %v4543
    %v4556 = vpack.c.b16 %v4546, %v4545
    %v4557 = vpack.c.b16 %v4548, %v4547
    %v4558 = vpack.c.b16 %v4550, %v4549
    %4567 = vmatpush.bf16.xpose.msra.mxu0 %v4558
    %4568 = vmatpush.bf16.xpose.msra.mxu0 %v4557
    %4569 = vmatpush.bf16.xpose.msra.mxu0 %v4556
    %4570 = vmatpush.bf16.xpose.msra.mxu0 %v4555
    %4571 = vmatpush.bf16.xpose.msra.mxu0 %v4554
    %4572 = vmatpush.bf16.xpose.msra.mxu0 %v4553
    %4573 = vmatpush.bf16.xpose.msra.mxu0 %v4552
    %4574 = vmatpush.bf16.xpose.msra.mxu0 %v4551
    %4575 = vmatmul.bf16.gmra.mxu0 %v4517
    %v4576 = vpop.f32.mrf.mxu0
    %v4577 = vadd.f32 0.0, %v4576
    %v4578 = vpop.f32.mrf.mxu0
    %4579 = vdwg.mxu0
    %v4580 = vpack.i.b16 %v4123, %v4123
    %v4581 = vperm.slane %v4580, 0
    %v4599 = vunpack.c.l.b16 %v3857
    %v4600 = vunpack.c.l.b16 %v3858
    %v4601 = vunpack.c.l.b16 %v3859
    %v4602 = vunpack.c.l.b16 %v3860
    %v4603 = vunpack.c.l.b16 %v3861
    %v4604 = vunpack.c.l.b16 %v3862
    %v4605 = vunpack.c.l.b16 %v3863
    %v4606 = vunpack.c.l.b16 %v3864
    %v4607 = vunpack.c.l.b16 %v3865
    %v4608 = vunpack.c.l.b16 %v3866
    %v4609 = vunpack.c.l.b16 %v3867
    %v4610 = vunpack.c.l.b16 %v3868
    %v4611 = vunpack.c.l.b16 %v3869
    %v4612 = vunpack.c.l.b16 %v3870
    %v4613 = vunpack.c.l.b16 %v3871
    %v4614 = vunpack.c.l.b16 %v3872
    %v4615 = vpack.c.b16 %v4600, %v4599
    %v4616 = vpack.c.b16 %v4602, %v4601
    %v4617 = vpack.c.b16 %v4604, %v4603
    %v4618 = vpack.c.b16 %v4606, %v4605
    %v4619 = vpack.c.b16 %v4608, %v4607
    %v4620 = vpack.c.b16 %v4610, %v4609
    %v4621 = vpack.c.b16 %v4612, %v4611
    %v4622 = vpack.c.b16 %v4614, %v4613
    %4631 = vmatpush.bf16.xpose.msra.mxu0 %v4622
    %4632 = vmatpush.bf16.xpose.msra.mxu0 %v4621
    %4633 = vmatpush.bf16.xpose.msra.mxu0 %v4620
    %4634 = vmatpush.bf16.xpose.msra.mxu0 %v4619
    %4635 = vmatpush.bf16.xpose.msra.mxu0 %v4618
    %4636 = vmatpush.bf16.xpose.msra.mxu0 %v4617
    %4637 = vmatpush.bf16.xpose.msra.mxu0 %v4616
    %4638 = vmatpush.bf16.xpose.msra.mxu0 %v4615
    %4639 = vmatmul.bf16.gmra.mxu0 %v4581
    %v4640 = vpop.f32.mrf.mxu0
    %v4641 = vadd.f32 0.0, %v4640
    %v4642 = vpop.f32.mrf.mxu0
    %4643 = vdwg.mxu0
    %v4644 = vpack.i.b16 %v4124, %v4124
    %v4645 = vperm.slane %v4644, 0
    %v4663 = vunpack.c.l.b16 %v3873
    %v4664 = vunpack.c.l.b16 %v3874
    %v4665 = vunpack.c.l.b16 %v3875
    %v4666 = vunpack.c.l.b16 %v3876
    %v4667 = vunpack.c.l.b16 %v3877
    %v4668 = vunpack.c.l.b16 %v3878
    %v4669 = vunpack.c.l.b16 %v3879
    %v4670 = vunpack.c.l.b16 %v3880
    %v4671 = vunpack.c.l.b16 %v3881
    %v4672 = vunpack.c.l.b16 %v3882
    %v4673 = vunpack.c.l.b16 %v3883
    %v4674 = vunpack.c.l.b16 %v3884
    %v4675 = vunpack.c.l.b16 %v3885
    %v4676 = vunpack.c.l.b16 %v3886
    %v4677 = vunpack.c.l.b16 %v3887
    %v4678 = vunpack.c.l.b16 %v3888
    %v4679 = vpack.c.b16 %v4664, %v4663
    %v4680 = vpack.c.b16 %v4666, %v4665
    %v4681 = vpack.c.b16 %v4668, %v4667
    %v4682 = vpack.c.b16 %v4670, %v4669
    %v4683 = vpack.c.b16 %v4672, %v4671
    %v4684 = vpack.c.b16 %v4674, %v4673
    %v4685 = vpack.c.b16 %v4676, %v4675
    %v4686 = vpack.c.b16 %v4678, %v4677
    %4695 = vmatpush.bf16.xpose.msra.mxu0 %v4686
    %4696 = vmatpush.bf16.xpose.msra.mxu0 %v4685
    %4697 = vmatpush.bf16.xpose.msra.mxu0 %v4684
    %4698 = vmatpush.bf16.xpose.msra.mxu0 %v4683
    %4699 = vmatpush.bf16.xpose.msra.mxu0 %v4682
    %4700 = vmatpush.bf16.xpose.msra.mxu0 %v4681
    %4701 = vmatpush.bf16.xpose.msra.mxu0 %v4680
    %4702 = vmatpush.bf16.xpose.msra.mxu0 %v4679
    %4703 = vmatmul.bf16.gmra.mxu0 %v4645
    %v4704 = vpop.f32.mrf.mxu0
    %v4705 = vadd.f32 0.0, %v4704
    %v4706 = vpop.f32.mrf.mxu0
    %4707 = vdwg.mxu0
    %v4708 = vpack.i.b16 %v4125, %v4125
    %v4709 = vperm.slane %v4708, 0
    %v4727 = vunpack.c.l.b16 %v3889
    %v4728 = vunpack.c.l.b16 %v3890
    %v4729 = vunpack.c.l.b16 %v3891
    %v4730 = vunpack.c.l.b16 %v3892
    %v4731 = vunpack.c.l.b16 %v3893
    %v4732 = vunpack.c.l.b16 %v3894
    %v4733 = vunpack.c.l.b16 %v3895
    %v4734 = vunpack.c.l.b16 %v3896
    %v4735 = vunpack.c.l.b16 %v3897
    %v4736 = vunpack.c.l.b16 %v3898
    %v4737 = vunpack.c.l.b16 %v3899
    %v4738 = vunpack.c.l.b16 %v3900
    %v4739 = vunpack.c.l.b16 %v3901
    %v4740 = vunpack.c.l.b16 %v3902
    %v4741 = vunpack.c.l.b16 %v3903
    %v4742 = vunpack.c.l.b16 %v3904
    %v4743 = vpack.c.b16 %v4728, %v4727
    %v4744 = vpack.c.b16 %v4730, %v4729
    %v4745 = vpack.c.b16 %v4732, %v4731
    %v4746 = vpack.c.b16 %v4734, %v4733
    %v4747 = vpack.c.b16 %v4736, %v4735
    %v4748 = vpack.c.b16 %v4738, %v4737
    %v4749 = vpack.c.b16 %v4740, %v4739
    %v4750 = vpack.c.b16 %v4742, %v4741
    %4759 = vmatpush.bf16.xpose.msra.mxu0 %v4750
    %4760 = vmatpush.bf16.xpose.msra.mxu0 %v4749
    %4761 = vmatpush.bf16.xpose.msra.mxu0 %v4748
    %4762 = vmatpush.bf16.xpose.msra.mxu0 %v4747
    %4763 = vmatpush.bf16.xpose.msra.mxu0 %v4746
    %4764 = vmatpush.bf16.xpose.msra.mxu0 %v4745
    %4765 = vmatpush.bf16.xpose.msra.mxu0 %v4744
    %4766 = vmatpush.bf16.xpose.msra.mxu0 %v4743
    %4767 = vmatmul.bf16.gmra.mxu0 %v4709
    %v4768 = vpop.f32.mrf.mxu0
    %v4769 = vadd.f32 0.0, %v4768
    %v4770 = vpop.f32.mrf.mxu0
    %4771 = vdwg.mxu0
    %v4772 = vpack.i.b16 %v4126, %v4126
    %v4773 = vperm.slane %v4772, 0
    %v4791 = vunpack.c.l.b16 %v3905
    %v4792 = vunpack.c.l.b16 %v3906
    %v4793 = vunpack.c.l.b16 %v3907
    %v4794 = vunpack.c.l.b16 %v3908
    %v4795 = vunpack.c.l.b16 %v3909
    %v4796 = vunpack.c.l.b16 %v3910
    %v4797 = vunpack.c.l.b16 %v3911
    %v4798 = vunpack.c.l.b16 %v3912
    %v4799 = vunpack.c.l.b16 %v3913
    %v4800 = vunpack.c.l.b16 %v3914
    %v4801 = vunpack.c.l.b16 %v3915
    %v4802 = vunpack.c.l.b16 %v3916
    %v4803 = vunpack.c.l.b16 %v3917
    %v4804 = vunpack.c.l.b16 %v3918
    %v4805 = vunpack.c.l.b16 %v3919
    %v4806 = vunpack.c.l.b16 %v3920
    %v4807 = vpack.c.b16 %v4792, %v4791
    %v4808 = vpack.c.b16 %v4794, %v4793
    %v4809 = vpack.c.b16 %v4796, %v4795
    %v4810 = vpack.c.b16 %v4798, %v4797
    %v4811 = vpack.c.b16 %v4800, %v4799
    %v4812 = vpack.c.b16 %v4802, %v4801
    %v4813 = vpack.c.b16 %v4804, %v4803
    %v4814 = vpack.c.b16 %v4806, %v4805
    %4823 = vmatpush.bf16.xpose.msra.mxu0 %v4814
    %4824 = vmatpush.bf16.xpose.msra.mxu0 %v4813
    %4825 = vmatpush.bf16.xpose.msra.mxu0 %v4812
    %4826 = vmatpush.bf16.xpose.msra.mxu0 %v4811
    %4827 = vmatpush.bf16.xpose.msra.mxu0 %v4810
    %4828 = vmatpush.bf16.xpose.msra.mxu0 %v4809
    %4829 = vmatpush.bf16.xpose.msra.mxu0 %v4808
    %4830 = vmatpush.bf16.xpose.msra.mxu0 %v4807
    %4831 = vmatmul.bf16.gmra.mxu0 %v4773
    %v4832 = vpop.f32.mrf.mxu0
    %v4833 = vadd.f32 0.0, %v4832
    %v4834 = vpop.f32.mrf.mxu0
    %4835 = vdwg.mxu0
    %v4836 = vpack.i.b16 %v4127, %v4127
    %v4837 = vperm.slane %v4836, 0
    %v4855 = vunpack.c.l.b16 %v3921
    %v4856 = vunpack.c.l.b16 %v3922
    %v4857 = vunpack.c.l.b16 %v3923
    %v4858 = vunpack.c.l.b16 %v3924
    %v4859 = vunpack.c.l.b16 %v3925
    %v4860 = vunpack.c.l.b16 %v3926
    %v4861 = vunpack.c.l.b16 %v3927
    %v4862 = vunpack.c.l.b16 %v3928
    %v4863 = vunpack.c.l.b16 %v3929
    %v4864 = vunpack.c.l.b16 %v3930
    %v4865 = vunpack.c.l.b16 %v3931
    %v4866 = vunpack.c.l.b16 %v3932
    %v4867 = vunpack.c.l.b16 %v3933
    %v4868 = vunpack.c.l.b16 %v3934
    %v4869 = vunpack.c.l.b16 %v3935
    %v4870 = vunpack.c.l.b16 %v3936
    %v4871 = vpack.c.b16 %v4856, %v4855
    %v4872 = vpack.c.b16 %v4858, %v4857
    %v4873 = vpack.c.b16 %v4860, %v4859
    %v4874 = vpack.c.b16 %v4862, %v4861
    %v4875 = vpack.c.b16 %v4864, %v4863
    %v4876 = vpack.c.b16 %v4866, %v4865
    %v4877 = vpack.c.b16 %v4868, %v4867
    %v4878 = vpack.c.b16 %v4870, %v4869
    %4887 = vmatpush.bf16.xpose.msra.mxu0 %v4878
    %4888 = vmatpush.bf16.xpose.msra.mxu0 %v4877
    %4889 = vmatpush.bf16.xpose.msra.mxu0 %v4876
    %4890 = vmatpush.bf16.xpose.msra.mxu0 %v4875
    %4891 = vmatpush.bf16.xpose.msra.mxu0 %v4874
    %4892 = vmatpush.bf16.xpose.msra.mxu0 %v4873
    %4893 = vmatpush.bf16.xpose.msra.mxu0 %v4872
    %4894 = vmatpush.bf16.xpose.msra.mxu0 %v4871
    %4895 = vmatmul.bf16.gmra.mxu0 %v4837
    %v4896 = vpop.f32.mrf.mxu0
    %v4897 = vadd.f32 0.0, %v4896
    %v4898 = vpop.f32.mrf.mxu0
    %4899 = vdwg.mxu0
    %v4900 = vpack.i.b16 %v4128, %v4128
    %v4901 = vperm.slane %v4900, 0
    %v4919 = vunpack.c.l.b16 %v3937
    %v4920 = vunpack.c.l.b16 %v3938
    %v4921 = vunpack.c.l.b16 %v3939
    %v4922 = vunpack.c.l.b16 %v3940
    %v4923 = vunpack.c.l.b16 %v3941
    %v4924 = vunpack.c.l.b16 %v3942
    %v4925 = vunpack.c.l.b16 %v3943
    %v4926 = vunpack.c.l.b16 %v3944
    %v4927 = vunpack.c.l.b16 %v3945
    %v4928 = vunpack.c.l.b16 %v3946
    %v4929 = vunpack.c.l.b16 %v3947
    %v4930 = vunpack.c.l.b16 %v3948
    %v4931 = vunpack.c.l.b16 %v3949
    %v4932 = vunpack.c.l.b16 %v3950
    %v4933 = vunpack.c.l.b16 %v3951
    %v4934 = vunpack.c.l.b16 %v3952
    %v4935 = vpack.c.b16 %v4920, %v4919
    %v4936 = vpack.c.b16 %v4922, %v4921
    %v4937 = vpack.c.b16 %v4924, %v4923
    %v4938 = vpack.c.b16 %v4926, %v4925
    %v4939 = vpack.c.b16 %v4928, %v4927
    %v4940 = vpack.c.b16 %v4930, %v4929
    %v4941 = vpack.c.b16 %v4932, %v4931
    %v4942 = vpack.c.b16 %v4934, %v4933
    %4951 = vmatpush.bf16.xpose.msra.mxu0 %v4942
    %4952 = vmatpush.bf16.xpose.msra.mxu0 %v4941
    %4953 = vmatpush.bf16.xpose.msra.mxu0 %v4940
    %4954 = vmatpush.bf16.xpose.msra.mxu0 %v4939
    %4955 = vmatpush.bf16.xpose.msra.mxu0 %v4938
    %4956 = vmatpush.bf16.xpose.msra.mxu0 %v4937
    %4957 = vmatpush.bf16.xpose.msra.mxu0 %v4936
    %4958 = vmatpush.bf16.xpose.msra.mxu0 %v4935
    %4959 = vmatmul.bf16.gmra.mxu0 %v4901
    %v4960 = vpop.f32.mrf.mxu0
    %v4961 = vadd.f32 0.0, %v4960
    %v4962 = vpop.f32.mrf.mxu0
    %4963 = vdwg.mxu0
    %v4964 = vpack.i.b16 %v4129, %v4129
    %v4965 = vperm.slane %v4964, 0
    %v4983 = vunpack.c.l.b16 %v3953
    %v4984 = vunpack.c.l.b16 %v3954
    %v4985 = vunpack.c.l.b16 %v3955
    %v4986 = vunpack.c.l.b16 %v3956
    %v4987 = vunpack.c.l.b16 %v3957
    %v4988 = vunpack.c.l.b16 %v3958
    %v4989 = vunpack.c.l.b16 %v3959
    %v4990 = vunpack.c.l.b16 %v3960
    %v4991 = vunpack.c.l.b16 %v3961
    %v4992 = vunpack.c.l.b16 %v3962
    %v4993 = vunpack.c.l.b16 %v3963
    %v4994 = vunpack.c.l.b16 %v3964
    %v4995 = vunpack.c.l.b16 %v3965
    %v4996 = vunpack.c.l.b16 %v3966
    %v4997 = vunpack.c.l.b16 %v3967
    %v4998 = vunpack.c.l.b16 %v3968
    %v4999 = vpack.c.b16 %v4984, %v4983
    %v5000 = vpack.c.b16 %v4986, %v4985
    %v5001 = vpack.c.b16 %v4988, %v4987
    %v5002 = vpack.c.b16 %v4990, %v4989
    %v5003 = vpack.c.b16 %v4992, %v4991
    %v5004 = vpack.c.b16 %v4994, %v4993
    %v5005 = vpack.c.b16 %v4996, %v4995
    %v5006 = vpack.c.b16 %v4998, %v4997
    %5015 = vmatpush.bf16.xpose.msra.mxu0 %v5006
    %5016 = vmatpush.bf16.xpose.msra.mxu0 %v5005
    %5017 = vmatpush.bf16.xpose.msra.mxu0 %v5004
    %5018 = vmatpush.bf16.xpose.msra.mxu0 %v5003
    %5019 = vmatpush.bf16.xpose.msra.mxu0 %v5002
    %5020 = vmatpush.bf16.xpose.msra.mxu0 %v5001
    %5021 = vmatpush.bf16.xpose.msra.mxu0 %v5000
    %5022 = vmatpush.bf16.xpose.msra.mxu0 %v4999
    %5023 = vmatmul.bf16.gmra.mxu0 %v4965
    %v5024 = vpop.f32.mrf.mxu0
    %v5025 = vadd.f32 0.0, %v5024
    %v5026 = vpop.f32.mrf.mxu0
    %5027 = vdwg.mxu0
    %v5028 = vpack.i.b16 %v4130, %v4130
    %v5029 = vperm.slane %v5028, 0
    %v5047 = vunpack.c.l.b16 %v3969
    %v5048 = vunpack.c.l.b16 %v3970
    %v5049 = vunpack.c.l.b16 %v3971
    %v5050 = vunpack.c.l.b16 %v3972
    %v5051 = vunpack.c.l.b16 %v3973
    %v5052 = vunpack.c.l.b16 %v3974
    %v5053 = vunpack.c.l.b16 %v3975
    %v5054 = vunpack.c.l.b16 %v3976
    %v5055 = vunpack.c.l.b16 %v3977
    %v5056 = vunpack.c.l.b16 %v3978
    %v5057 = vunpack.c.l.b16 %v3979
    %v5058 = vunpack.c.l.b16 %v3980
    %v5059 = vunpack.c.l.b16 %v3981
    %v5060 = vunpack.c.l.b16 %v3982
    %v5061 = vunpack.c.l.b16 %v3983
    %v5062 = vunpack.c.l.b16 %v3984
    %v5063 = vpack.c.b16 %v5048, %v5047
    %v5064 = vpack.c.b16 %v5050, %v5049
    %v5065 = vpack.c.b16 %v5052, %v5051
    %v5066 = vpack.c.b16 %v5054, %v5053
    %v5067 = vpack.c.b16 %v5056, %v5055
    %v5068 = vpack.c.b16 %v5058, %v5057
    %v5069 = vpack.c.b16 %v5060, %v5059
    %v5070 = vpack.c.b16 %v5062, %v5061
    %5079 = vmatpush.bf16.xpose.msra.mxu0 %v5070
    %5080 = vmatpush.bf16.xpose.msra.mxu0 %v5069
    %5081 = vmatpush.bf16.xpose.msra.mxu0 %v5068
    %5082 = vmatpush.bf16.xpose.msra.mxu0 %v5067
    %5083 = vmatpush.bf16.xpose.msra.mxu0 %v5066
    %5084 = vmatpush.bf16.xpose.msra.mxu0 %v5065
    %5085 = vmatpush.bf16.xpose.msra.mxu0 %v5064
    %5086 = vmatpush.bf16.xpose.msra.mxu0 %v5063
    %5087 = vmatmul.bf16.gmra.mxu0 %v5029
    %v5088 = vpop.f32.mrf.mxu0
    %v5089 = vadd.f32 0.0, %v5088
    %v5090 = vpop.f32.mrf.mxu0
    %5091 = vdwg.mxu0
    %v5092 = vpack.i.b16 %v4131, %v4131
    %v5093 = vperm.slane %v5092, 0
    %v5111 = vunpack.c.l.b16 %v3985
    %v5112 = vunpack.c.l.b16 %v3986
    %v5113 = vunpack.c.l.b16 %v3987
    %v5114 = vunpack.c.l.b16 %v3988
    %v5115 = vunpack.c.l.b16 %v3989
    %v5116 = vunpack.c.l.b16 %v3990
    %v5117 = vunpack.c.l.b16 %v3991
    %v5118 = vunpack.c.l.b16 %v3992
    %v5119 = vunpack.c.l.b16 %v3993
    %v5120 = vunpack.c.l.b16 %v3994
    %v5121 = vunpack.c.l.b16 %v3995
    %v5122 = vunpack.c.l.b16 %v3996
    %v5123 = vunpack.c.l.b16 %v3997
    %v5124 = vunpack.c.l.b16 %v3998
    %v5125 = vunpack.c.l.b16 %v3999
    %v5126 = vunpack.c.l.b16 %v4000
    %v5127 = vpack.c.b16 %v5112, %v5111
    %v5128 = vpack.c.b16 %v5114, %v5113
    %v5129 = vpack.c.b16 %v5116, %v5115
    %v5130 = vpack.c.b16 %v5118, %v5117
    %v5131 = vpack.c.b16 %v5120, %v5119
    %v5132 = vpack.c.b16 %v5122, %v5121
    %v5133 = vpack.c.b16 %v5124, %v5123
    %v5134 = vpack.c.b16 %v5126, %v5125
    %5143 = vmatpush.bf16.xpose.msra.mxu0 %v5134
    %5144 = vmatpush.bf16.xpose.msra.mxu0 %v5133
    %5145 = vmatpush.bf16.xpose.msra.mxu0 %v5132
    %5146 = vmatpush.bf16.xpose.msra.mxu0 %v5131
    %5147 = vmatpush.bf16.xpose.msra.mxu0 %v5130
    %5148 = vmatpush.bf16.xpose.msra.mxu0 %v5129
    %5149 = vmatpush.bf16.xpose.msra.mxu0 %v5128
    %5150 = vmatpush.bf16.xpose.msra.mxu0 %v5127
    %5151 = vmatmul.bf16.gmra.mxu0 %v5093
    %v5152 = vpop.f32.mrf.mxu0
    %v5153 = vadd.f32 0.0, %v5152
    %v5154 = vpop.f32.mrf.mxu0
    %5155 = vdwg.mxu0
    %v5156 = vsel %vm3116, %v4193, -1e+09
    %v5157 = vsel %vm3117, %v4257, -1e+09
    %v5158 = vsel %vm3118, %v4321, -1e+09
    %v5159 = vsel %vm3119, %v4385, -1e+09
    %v5160 = vsel %vm3120, %v4449, -1e+09
    %v5161 = vsel %vm3121, %v4513, -1e+09
    %v5162 = vsel %vm3122, %v4577, -1e+09
    %v5163 = vsel %vm3123, %v4641, -1e+09
    %v5164 = vsel %vm3124, %v4705, -1e+09
    %v5165 = vsel %vm3125, %v4769, -1e+09
    %v5166 = vsel %vm3126, %v4833, -1e+09
    %v5167 = vsel %vm3127, %v4897, -1e+09
    %v5168 = vsel %vm3128, %v4961, -1e+09
    %v5169 = vsel %vm3129, %v5025, -1e+09
    %v5170 = vsel %vm3130, %v5089, -1e+09
    %v5171 = vsel %vm3131, %v5153, -1e+09
    %v5172 = vsel %vm4086, %v5156, -inf
    %5173 = vmax.xlane.f32.xlu0 %v5172
    %v5174 = vpop.xlane.xlu0 %5173
    %v5175 = vsel %vm4086, %v5157, -inf
    %5176 = vmax.xlane.f32.xlu0 %v5175
    %v5177 = vpop.xlane.xlu0 %5176
    %v5178 = vsel %vm4086, %v5158, -inf
    %5179 = vmax.xlane.f32.xlu0 %v5178
    %v5180 = vpop.xlane.xlu0 %5179
    %v5181 = vsel %vm4086, %v5159, -inf
    %5182 = vmax.xlane.f32.xlu0 %v5181
    %v5183 = vpop.xlane.xlu0 %5182
    %v5184 = vsel %vm4086, %v5160, -inf
    %5185 = vmax.xlane.f32.xlu0 %v5184
    %v5186 = vpop.xlane.xlu0 %5185
    %v5187 = vsel %vm4086, %v5161, -inf
    %5188 = vmax.xlane.f32.xlu0 %v5187
    %v5189 = vpop.xlane.xlu0 %5188
    %v5190 = vsel %vm4086, %v5162, -inf
    %5191 = vmax.xlane.f32.xlu0 %v5190
    %v5192 = vpop.xlane.xlu0 %5191
    %v5193 = vsel %vm4086, %v5163, -inf
    %5194 = vmax.xlane.f32.xlu0 %v5193
    %v5195 = vpop.xlane.xlu0 %5194
    %v5196 = vsel %vm4086, %v5164, -inf
    %5197 = vmax.xlane.f32.xlu0 %v5196
    %v5198 = vpop.xlane.xlu0 %5197
    %v5199 = vsel %vm4086, %v5165, -inf
    %5200 = vmax.xlane.f32.xlu0 %v5199
    %v5201 = vpop.xlane.xlu0 %5200
    %v5202 = vsel %vm4086, %v5166, -inf
    %5203 = vmax.xlane.f32.xlu0 %v5202
    %v5204 = vpop.xlane.xlu0 %5203
    %v5205 = vsel %vm4086, %v5167, -inf
    %5206 = vmax.xlane.f32.xlu0 %v5205
    %v5207 = vpop.xlane.xlu0 %5206
    %v5208 = vsel %vm4086, %v5168, -inf
    %5209 = vmax.xlane.f32.xlu0 %v5208
    %v5210 = vpop.xlane.xlu0 %5209
    %v5211 = vsel %vm4086, %v5169, -inf
    %5212 = vmax.xlane.f32.xlu0 %v5211
    %v5213 = vpop.xlane.xlu0 %5212
    %v5214 = vsel %vm4086, %v5170, -inf
    %5215 = vmax.xlane.f32.xlu0 %v5214
    %v5216 = vpop.xlane.xlu0 %5215
    %v5217 = vsel %vm4086, %v5171, -inf
    %5218 = vmax.xlane.f32.xlu0 %v5217
    %v5219 = vpop.xlane.xlu0 %5218
    %v5220 = vsub.f32 %v5156, %v5174
    %v5221 = vsub.f32 %v5157, %v5177
    %v5222 = vsub.f32 %v5158, %v5180
    %v5223 = vsub.f32 %v5159, %v5183
    %v5224 = vsub.f32 %v5160, %v5186
    %v5225 = vsub.f32 %v5161, %v5189
    %v5226 = vsub.f32 %v5162, %v5192
    %v5227 = vsub.f32 %v5163, %v5195
    %v5228 = vsub.f32 %v5164, %v5198
    %v5229 = vsub.f32 %v5165, %v5201
    %v5230 = vsub.f32 %v5166, %v5204
    %v5231 = vsub.f32 %v5167, %v5207
    %v5232 = vsub.f32 %v5168, %v5210
    %v5233 = vsub.f32 %v5169, %v5213
    %v5234 = vsub.f32 %v5170, %v5216
    %v5235 = vsub.f32 %v5171, %v5219
    %v5236 = vmul.f32 %v5220, 1.442695
    %v5237 = vpow.pop %v5236
    %v5238 = vmul.f32 %v5221, 1.442695
    %v5239 = vpow.pop %v5238
    %v5240 = vmul.f32 %v5222, 1.442695
    %v5241 = vpow.pop %v5240
    %v5242 = vmul.f32 %v5223, 1.442695
    %v5243 = vpow.pop %v5242
    %v5244 = vmul.f32 %v5224, 1.442695
    %v5245 = vpow.pop %v5244
    %v5246 = vmul.f32 %v5225, 1.442695
    %v5247 = vpow.pop %v5246
    %v5248 = vmul.f32 %v5226, 1.442695
    %v5249 = vpow.pop %v5248
    %v5250 = vmul.f32 %v5227, 1.442695
    %v5251 = vpow.pop %v5250
    %v5252 = vmul.f32 %v5228, 1.442695
    %v5253 = vpow.pop %v5252
    %v5254 = vmul.f32 %v5229, 1.442695
    %v5255 = vpow.pop %v5254
    %v5256 = vmul.f32 %v5230, 1.442695
    %v5257 = vpow.pop %v5256
    %v5258 = vmul.f32 %v5231, 1.442695
    %v5259 = vpow.pop %v5258
    %v5260 = vmul.f32 %v5232, 1.442695
    %v5261 = vpow.pop %v5260
    %v5262 = vmul.f32 %v5233, 1.442695
    %v5263 = vpow.pop %v5262
    %v5264 = vmul.f32 %v5234, 1.442695
    %v5265 = vpow.pop %v5264
    %v5266 = vmul.f32 %v5235, 1.442695
    %v5267 = vpow.pop %v5266
    %v5268 = vsel %vm4086, %v5237, 0.0
    %5269 = vadd.xlane.f32.xlu0 %v5268
    %v5270 = vpop.xlane.xlu0 %5269
    %v5271 = vsel %vm4086, %v5239, 0.0
    %5272 = vadd.xlane.f32.xlu0 %v5271
    %v5273 = vpop.xlane.xlu0 %5272
    %v5274 = vsel %vm4086, %v5241, 0.0
    %5275 = vadd.xlane.f32.xlu0 %v5274
    %v5276 = vpop.xlane.xlu0 %5275
    %v5277 = vsel %vm4086, %v5243, 0.0
    %5278 = vadd.xlane.f32.xlu0 %v5277
    %v5279 = vpop.xlane.xlu0 %5278
    %v5280 = vsel %vm4086, %v5245, 0.0
    %5281 = vadd.xlane.f32.xlu0 %v5280
    %v5282 = vpop.xlane.xlu0 %5281
    %v5283 = vsel %vm4086, %v5247, 0.0
    %5284 = vadd.xlane.f32.xlu0 %v5283
    %v5285 = vpop.xlane.xlu0 %5284
    %v5286 = vsel %vm4086, %v5249, 0.0
    %5287 = vadd.xlane.f32.xlu0 %v5286
    %v5288 = vpop.xlane.xlu0 %5287
    %v5289 = vsel %vm4086, %v5251, 0.0
    %5290 = vadd.xlane.f32.xlu0 %v5289
    %v5291 = vpop.xlane.xlu0 %5290
    %v5292 = vsel %vm4086, %v5253, 0.0
    %5293 = vadd.xlane.f32.xlu0 %v5292
    %v5294 = vpop.xlane.xlu0 %5293
    %v5295 = vsel %vm4086, %v5255, 0.0
    %5296 = vadd.xlane.f32.xlu0 %v5295
    %v5297 = vpop.xlane.xlu0 %5296
    %v5298 = vsel %vm4086, %v5257, 0.0
    %5299 = vadd.xlane.f32.xlu0 %v5298
    %v5300 = vpop.xlane.xlu0 %5299
    %v5301 = vsel %vm4086, %v5259, 0.0
    %5302 = vadd.xlane.f32.xlu0 %v5301
    %v5303 = vpop.xlane.xlu0 %5302
    %v5304 = vsel %vm4086, %v5261, 0.0
    %5305 = vadd.xlane.f32.xlu0 %v5304
    %v5306 = vpop.xlane.xlu0 %5305
    %v5307 = vsel %vm4086, %v5263, 0.0
    %5308 = vadd.xlane.f32.xlu0 %v5307
    %v5309 = vpop.xlane.xlu0 %5308
    %v5310 = vsel %vm4086, %v5265, 0.0
    %5311 = vadd.xlane.f32.xlu0 %v5310
    %v5312 = vpop.xlane.xlu0 %5311
    %v5313 = vsel %vm4086, %v5267, 0.0
    %5314 = vadd.xlane.f32.xlu0 %v5313
    %v5315 = vpop.xlane.xlu0 %5314
    %v5316 = vrcp.pop %v5270
    %v5317 = vmul.f32 %v5270, %v5316
    %v5318 = vsub.f32 1.0, %v5317
    %v5319 = vmul.f32 %v5316, %v5318
    %v5320 = vadd.f32 %v5316, %v5319
    %vm5321 = vweird.f32 %v5270
    %vm5322 = vweird.f32 %v5316
    %vm5323 = vmor %vm5321, %vm5322
    %v5324 = vsel %vm5323, %v5316, %v5320
    %v5325 = vand.u32 2147483647, %v5270
    %vm5326 = vcmp.eq.f32.partialorder %v5325, 8.507059e+37
    %v5327 = vand.u32 %v5270, 2147483648
    %v5328 = vor.u32 1.1754944e-38, %v5327
    %v5329 = vsel %vm5326, %v5328, %v5324
    %v5330 = vmul.f32 %v5237, %v5329
    %v5331 = vrcp.pop %v5273
    %v5332 = vmul.f32 %v5273, %v5331
    %v5333 = vsub.f32 1.0, %v5332
    %v5334 = vmul.f32 %v5331, %v5333
    %v5335 = vadd.f32 %v5331, %v5334
    %vm5336 = vweird.f32 %v5273
    %vm5337 = vweird.f32 %v5331
    %vm5338 = vmor %vm5336, %vm5337
    %v5339 = vsel %vm5338, %v5331, %v5335
    %v5340 = vand.u32 2147483647, %v5273
    %vm5341 = vcmp.eq.f32.partialorder %v5340, 8.507059e+37
    %v5342 = vand.u32 %v5273, 2147483648
    %v5343 = vor.u32 1.1754944e-38, %v5342
    %v5344 = vsel %vm5341, %v5343, %v5339
    %v5345 = vmul.f32 %v5239, %v5344
    %v5346 = vrcp.pop %v5276
    %v5347 = vmul.f32 %v5276, %v5346
    %v5348 = vsub.f32 1.0, %v5347
    %v5349 = vmul.f32 %v5346, %v5348
    %v5350 = vadd.f32 %v5346, %v5349
    %vm5351 = vweird.f32 %v5276
    %vm5352 = vweird.f32 %v5346
    %vm5353 = vmor %vm5351, %vm5352
    %v5354 = vsel %vm5353, %v5346, %v5350
    %v5355 = vand.u32 2147483647, %v5276
    %vm5356 = vcmp.eq.f32.partialorder %v5355, 8.507059e+37
    %v5357 = vand.u32 %v5276, 2147483648
    %v5358 = vor.u32 1.1754944e-38, %v5357
    %v5359 = vsel %vm5356, %v5358, %v5354
    %v5360 = vmul.f32 %v5241, %v5359
    %v5361 = vrcp.pop %v5279
    %v5362 = vmul.f32 %v5279, %v5361
    %v5363 = vsub.f32 1.0, %v5362
    %v5364 = vmul.f32 %v5361, %v5363
    %v5365 = vadd.f32 %v5361, %v5364
    %vm5366 = vweird.f32 %v5279
    %vm5367 = vweird.f32 %v5361
    %vm5368 = vmor %vm5366, %vm5367
    %v5369 = vsel %vm5368, %v5361, %v5365
    %v5370 = vand.u32 2147483647, %v5279
    %vm5371 = vcmp.eq.f32.partialorder %v5370, 8.507059e+37
    %v5372 = vand.u32 %v5279, 2147483648
    %v5373 = vor.u32 1.1754944e-38, %v5372
    %v5374 = vsel %vm5371, %v5373, %v5369
    %v5375 = vmul.f32 %v5243, %v5374
    %v5376 = vrcp.pop %v5282
    %v5377 = vmul.f32 %v5282, %v5376
    %v5378 = vsub.f32 1.0, %v5377
    %v5379 = vmul.f32 %v5376, %v5378
    %v5380 = vadd.f32 %v5376, %v5379
    %vm5381 = vweird.f32 %v5282
    %vm5382 = vweird.f32 %v5376
    %vm5383 = vmor %vm5381, %vm5382
    %v5384 = vsel %vm5383, %v5376, %v5380
    %v5385 = vand.u32 2147483647, %v5282
    %vm5386 = vcmp.eq.f32.partialorder %v5385, 8.507059e+37
    %v5387 = vand.u32 %v5282, 2147483648
    %v5388 = vor.u32 1.1754944e-38, %v5387
    %v5389 = vsel %vm5386, %v5388, %v5384
    %v5390 = vmul.f32 %v5245, %v5389
    %v5391 = vrcp.pop %v5285
    %v5392 = vmul.f32 %v5285, %v5391
    %v5393 = vsub.f32 1.0, %v5392
    %v5394 = vmul.f32 %v5391, %v5393
    %v5395 = vadd.f32 %v5391, %v5394
    %vm5396 = vweird.f32 %v5285
    %vm5397 = vweird.f32 %v5391
    %vm5398 = vmor %vm5396, %vm5397
    %v5399 = vsel %vm5398, %v5391, %v5395
    %v5400 = vand.u32 2147483647, %v5285
    %vm5401 = vcmp.eq.f32.partialorder %v5400, 8.507059e+37
    %v5402 = vand.u32 %v5285, 2147483648
    %v5403 = vor.u32 1.1754944e-38, %v5402
    %v5404 = vsel %vm5401, %v5403, %v5399
    %v5405 = vmul.f32 %v5247, %v5404
    %v5406 = vrcp.pop %v5288
    %v5407 = vmul.f32 %v5288, %v5406
    %v5408 = vsub.f32 1.0, %v5407
    %v5409 = vmul.f32 %v5406, %v5408
    %v5410 = vadd.f32 %v5406, %v5409
    %vm5411 = vweird.f32 %v5288
    %vm5412 = vweird.f32 %v5406
    %vm5413 = vmor %vm5411, %vm5412
    %v5414 = vsel %vm5413, %v5406, %v5410
    %v5415 = vand.u32 2147483647, %v5288
    %vm5416 = vcmp.eq.f32.partialorder %v5415, 8.507059e+37
    %v5417 = vand.u32 %v5288, 2147483648
    %v5418 = vor.u32 1.1754944e-38, %v5417
    %v5419 = vsel %vm5416, %v5418, %v5414
    %v5420 = vmul.f32 %v5249, %v5419
    %v5421 = vrcp.pop %v5291
    %v5422 = vmul.f32 %v5291, %v5421
    %v5423 = vsub.f32 1.0, %v5422
    %v5424 = vmul.f32 %v5421, %v5423
    %v5425 = vadd.f32 %v5421, %v5424
    %vm5426 = vweird.f32 %v5291
    %vm5427 = vweird.f32 %v5421
    %vm5428 = vmor %vm5426, %vm5427
    %v5429 = vsel %vm5428, %v5421, %v5425
    %v5430 = vand.u32 2147483647, %v5291
    %vm5431 = vcmp.eq.f32.partialorder %v5430, 8.507059e+37
    %v5432 = vand.u32 %v5291, 2147483648
    %v5433 = vor.u32 1.1754944e-38, %v5432
    %v5434 = vsel %vm5431, %v5433, %v5429
    %v5435 = vmul.f32 %v5251, %v5434
    %v5436 = vrcp.pop %v5294
    %v5437 = vmul.f32 %v5294, %v5436
    %v5438 = vsub.f32 1.0, %v5437
    %v5439 = vmul.f32 %v5436, %v5438
    %v5440 = vadd.f32 %v5436, %v5439
    %vm5441 = vweird.f32 %v5294
    %vm5442 = vweird.f32 %v5436
    %vm5443 = vmor %vm5441, %vm5442
    %v5444 = vsel %vm5443, %v5436, %v5440
    %v5445 = vand.u32 2147483647, %v5294
    %vm5446 = vcmp.eq.f32.partialorder %v5445, 8.507059e+37
    %v5447 = vand.u32 %v5294, 2147483648
    %v5448 = vor.u32 1.1754944e-38, %v5447
    %v5449 = vsel %vm5446, %v5448, %v5444
    %v5450 = vmul.f32 %v5253, %v5449
    %v5451 = vrcp.pop %v5297
    %v5452 = vmul.f32 %v5297, %v5451
    %v5453 = vsub.f32 1.0, %v5452
    %v5454 = vmul.f32 %v5451, %v5453
    %v5455 = vadd.f32 %v5451, %v5454
    %vm5456 = vweird.f32 %v5297
    %vm5457 = vweird.f32 %v5451
    %vm5458 = vmor %vm5456, %vm5457
    %v5459 = vsel %vm5458, %v5451, %v5455
    %v5460 = vand.u32 2147483647, %v5297
    %vm5461 = vcmp.eq.f32.partialorder %v5460, 8.507059e+37
    %v5462 = vand.u32 %v5297, 2147483648
    %v5463 = vor.u32 1.1754944e-38, %v5462
    %v5464 = vsel %vm5461, %v5463, %v5459
    %v5465 = vmul.f32 %v5255, %v5464
    %v5466 = vrcp.pop %v5300
    %v5467 = vmul.f32 %v5300, %v5466
    %v5468 = vsub.f32 1.0, %v5467
    %v5469 = vmul.f32 %v5466, %v5468
    %v5470 = vadd.f32 %v5466, %v5469
    %vm5471 = vweird.f32 %v5300
    %vm5472 = vweird.f32 %v5466
    %vm5473 = vmor %vm5471, %vm5472
    %v5474 = vsel %vm5473, %v5466, %v5470
    %v5475 = vand.u32 2147483647, %v5300
    %vm5476 = vcmp.eq.f32.partialorder %v5475, 8.507059e+37
    %v5477 = vand.u32 %v5300, 2147483648
    %v5478 = vor.u32 1.1754944e-38, %v5477
    %v5479 = vsel %vm5476, %v5478, %v5474
    %v5480 = vmul.f32 %v5257, %v5479
    %v5481 = vrcp.pop %v5303
    %v5482 = vmul.f32 %v5303, %v5481
    %v5483 = vsub.f32 1.0, %v5482
    %v5484 = vmul.f32 %v5481, %v5483
    %v5485 = vadd.f32 %v5481, %v5484
    %vm5486 = vweird.f32 %v5303
    %vm5487 = vweird.f32 %v5481
    %vm5488 = vmor %vm5486, %vm5487
    %v5489 = vsel %vm5488, %v5481, %v5485
    %v5490 = vand.u32 2147483647, %v5303
    %vm5491 = vcmp.eq.f32.partialorder %v5490, 8.507059e+37
    %v5492 = vand.u32 %v5303, 2147483648
    %v5493 = vor.u32 1.1754944e-38, %v5492
    %v5494 = vsel %vm5491, %v5493, %v5489
    %v5495 = vmul.f32 %v5259, %v5494
    %v5496 = vrcp.pop %v5306
    %v5497 = vmul.f32 %v5306, %v5496
    %v5498 = vsub.f32 1.0, %v5497
    %v5499 = vmul.f32 %v5496, %v5498
    %v5500 = vadd.f32 %v5496, %v5499
    %vm5501 = vweird.f32 %v5306
    %vm5502 = vweird.f32 %v5496
    %vm5503 = vmor %vm5501, %vm5502
    %v5504 = vsel %vm5503, %v5496, %v5500
    %v5505 = vand.u32 2147483647, %v5306
    %vm5506 = vcmp.eq.f32.partialorder %v5505, 8.507059e+37
    %v5507 = vand.u32 %v5306, 2147483648
    %v5508 = vor.u32 1.1754944e-38, %v5507
    %v5509 = vsel %vm5506, %v5508, %v5504
    %v5510 = vmul.f32 %v5261, %v5509
    %v5511 = vrcp.pop %v5309
    %v5512 = vmul.f32 %v5309, %v5511
    %v5513 = vsub.f32 1.0, %v5512
    %v5514 = vmul.f32 %v5511, %v5513
    %v5515 = vadd.f32 %v5511, %v5514
    %vm5516 = vweird.f32 %v5309
    %vm5517 = vweird.f32 %v5511
    %vm5518 = vmor %vm5516, %vm5517
    %v5519 = vsel %vm5518, %v5511, %v5515
    %v5520 = vand.u32 2147483647, %v5309
    %vm5521 = vcmp.eq.f32.partialorder %v5520, 8.507059e+37
    %v5522 = vand.u32 %v5309, 2147483648
    %v5523 = vor.u32 1.1754944e-38, %v5522
    %v5524 = vsel %vm5521, %v5523, %v5519
    %v5525 = vmul.f32 %v5263, %v5524
    %v5526 = vrcp.pop %v5312
    %v5527 = vmul.f32 %v5312, %v5526
    %v5528 = vsub.f32 1.0, %v5527
    %v5529 = vmul.f32 %v5526, %v5528
    %v5530 = vadd.f32 %v5526, %v5529
    %vm5531 = vweird.f32 %v5312
    %vm5532 = vweird.f32 %v5526
    %vm5533 = vmor %vm5531, %vm5532
    %v5534 = vsel %vm5533, %v5526, %v5530
    %v5535 = vand.u32 2147483647, %v5312
    %vm5536 = vcmp.eq.f32.partialorder %v5535, 8.507059e+37
    %v5537 = vand.u32 %v5312, 2147483648
    %v5538 = vor.u32 1.1754944e-38, %v5537
    %v5539 = vsel %vm5536, %v5538, %v5534
    %v5540 = vmul.f32 %v5265, %v5539
    %v5541 = vrcp.pop %v5315
    %v5542 = vmul.f32 %v5315, %v5541
    %v5543 = vsub.f32 1.0, %v5542
    %v5544 = vmul.f32 %v5541, %v5543
    %v5545 = vadd.f32 %v5541, %v5544
    %vm5546 = vweird.f32 %v5315
    %vm5547 = vweird.f32 %v5541
    %vm5548 = vmor %vm5546, %vm5547
    %v5549 = vsel %vm5548, %v5541, %v5545
    %v5550 = vand.u32 2147483647, %v5315
    %vm5551 = vcmp.eq.f32.partialorder %v5550, 8.507059e+37
    %v5552 = vand.u32 %v5315, 2147483648
    %v5553 = vor.u32 1.1754944e-38, %v5552
    %v5554 = vsel %vm5551, %v5553, %v5549
    %v5555 = vmul.f32 %v5267, %v5554
    %v5556 = vpack.c.bf16 %v5330, %v5330
    %v5557 = vpack.c.bf16 %v5345, %v5345
    %v5558 = vpack.c.bf16 %v5360, %v5360
    %v5559 = vpack.c.bf16 %v5375, %v5375
    %v5560 = vpack.c.bf16 %v5390, %v5390
    %v5561 = vpack.c.bf16 %v5405, %v5405
    %v5562 = vpack.c.bf16 %v5420, %v5420
    %v5563 = vpack.c.bf16 %v5435, %v5435
    %v5564 = vpack.c.bf16 %v5450, %v5450
    %v5565 = vpack.c.bf16 %v5465, %v5465
    %v5566 = vpack.c.bf16 %v5480, %v5480
    %v5567 = vpack.c.bf16 %v5495, %v5495
    %v5568 = vpack.c.bf16 %v5510, %v5510
    %v5569 = vpack.c.bf16 %v5525, %v5525
    %v5570 = vpack.c.bf16 %v5540, %v5540
    %v5571 = vpack.c.bf16 %v5555, %v5555
    %5572 = vmatpush.bf16.msra.mxu0 %v4174
    %5573 = vmatpush.bf16.msra.mxu0 %v4173
    %5574 = vmatpush.bf16.msra.mxu0 %v4172
    %5575 = vmatpush.bf16.msra.mxu0 %v4171
    %5576 = vmatpush.bf16.msra.mxu0 %v4170
    %5577 = vmatpush.bf16.msra.mxu0 %v4169
    %5578 = vmatpush.bf16.msra.mxu0 %v4168
    %5579 = vmatpush.bf16.msra.mxu0 %v4167
    %5580 = vmatmul.bf16.gmra.mxu0 %v5556
    %v5581 = vpop.f32.mrf.mxu0
    %v5582 = vadd.f32 0.0, %v5581
    %v5583 = vpop.f32.mrf.mxu0
    %5584 = vdwg.mxu0
    %5585 = vmatpush.bf16.msra.mxu0 %v4238
    %5586 = vmatpush.bf16.msra.mxu0 %v4237
    %5587 = vmatpush.bf16.msra.mxu0 %v4236
    %5588 = vmatpush.bf16.msra.mxu0 %v4235
    %5589 = vmatpush.bf16.msra.mxu0 %v4234
    %5590 = vmatpush.bf16.msra.mxu0 %v4233
    %5591 = vmatpush.bf16.msra.mxu0 %v4232
    %5592 = vmatpush.bf16.msra.mxu0 %v4231
    %5593 = vmatmul.bf16.gmra.mxu0 %v5557
    %v5594 = vpop.f32.mrf.mxu0
    %v5595 = vadd.f32 0.0, %v5594
    %v5596 = vpop.f32.mrf.mxu0
    %5597 = vdwg.mxu0
    %5598 = vmatpush.bf16.msra.mxu0 %v4302
    %5599 = vmatpush.bf16.msra.mxu0 %v4301
    %5600 = vmatpush.bf16.msra.mxu0 %v4300
    %5601 = vmatpush.bf16.msra.mxu0 %v4299
    %5602 = vmatpush.bf16.msra.mxu0 %v4298
    %5603 = vmatpush.bf16.msra.mxu0 %v4297
    %5604 = vmatpush.bf16.msra.mxu0 %v4296
    %5605 = vmatpush.bf16.msra.mxu0 %v4295
    %5606 = vmatmul.bf16.gmra.mxu0 %v5558
    %v5607 = vpop.f32.mrf.mxu0
    %v5608 = vadd.f32 0.0, %v5607
    %v5609 = vpop.f32.mrf.mxu0
    %5610 = vdwg.mxu0
    %5611 = vmatpush.bf16.msra.mxu0 %v4366
    %5612 = vmatpush.bf16.msra.mxu0 %v4365
    %5613 = vmatpush.bf16.msra.mxu0 %v4364
    %5614 = vmatpush.bf16.msra.mxu0 %v4363
    %5615 = vmatpush.bf16.msra.mxu0 %v4362
    %5616 = vmatpush.bf16.msra.mxu0 %v4361
    %5617 = vmatpush.bf16.msra.mxu0 %v4360
    %5618 = vmatpush.bf16.msra.mxu0 %v4359
    %5619 = vmatmul.bf16.gmra.mxu0 %v5559
    %v5620 = vpop.f32.mrf.mxu0
    %v5621 = vadd.f32 0.0, %v5620
    %v5622 = vpop.f32.mrf.mxu0
    %5623 = vdwg.mxu0
    %5624 = vmatpush.bf16.msra.mxu0 %v4430
    %5625 = vmatpush.bf16.msra.mxu0 %v4429
    %5626 = vmatpush.bf16.msra.mxu0 %v4428
    %5627 = vmatpush.bf16.msra.mxu0 %v4427
    %5628 = vmatpush.bf16.msra.mxu0 %v4426
    %5629 = vmatpush.bf16.msra.mxu0 %v4425
    %5630 = vmatpush.bf16.msra.mxu0 %v4424
    %5631 = vmatpush.bf16.msra.mxu0 %v4423
    %5632 = vmatmul.bf16.gmra.mxu0 %v5560
    %v5633 = vpop.f32.mrf.mxu0
    %v5634 = vadd.f32 0.0, %v5633
    %v5635 = vpop.f32.mrf.mxu0
    %5636 = vdwg.mxu0
    %5637 = vmatpush.bf16.msra.mxu0 %v4494
    %5638 = vmatpush.bf16.msra.mxu0 %v4493
    %5639 = vmatpush.bf16.msra.mxu0 %v4492
    %5640 = vmatpush.bf16.msra.mxu0 %v4491
    %5641 = vmatpush.bf16.msra.mxu0 %v4490
    %5642 = vmatpush.bf16.msra.mxu0 %v4489
    %5643 = vmatpush.bf16.msra.mxu0 %v4488
    %5644 = vmatpush.bf16.msra.mxu0 %v4487
    %5645 = vmatmul.bf16.gmra.mxu0 %v5561
    %v5646 = vpop.f32.mrf.mxu0
    %v5647 = vadd.f32 0.0, %v5646
    %v5648 = vpop.f32.mrf.mxu0
    %5649 = vdwg.mxu0
    %5650 = vmatpush.bf16.msra.mxu0 %v4558
    %5651 = vmatpush.bf16.msra.mxu0 %v4557
    %5652 = vmatpush.bf16.msra.mxu0 %v4556
    %5653 = vmatpush.bf16.msra.mxu0 %v4555
    %5654 = vmatpush.bf16.msra.mxu0 %v4554
    %5655 = vmatpush.bf16.msra.mxu0 %v4553
    %5656 = vmatpush.bf16.msra.mxu0 %v4552
    %5657 = vmatpush.bf16.msra.mxu0 %v4551
    %5658 = vmatmul.bf16.gmra.mxu0 %v5562
    %v5659 = vpop.f32.mrf.mxu0
    %v5660 = vadd.f32 0.0, %v5659
    %v5661 = vpop.f32.mrf.mxu0
    %5662 = vdwg.mxu0
    %5663 = vmatpush.bf16.msra.mxu0 %v4622
    %5664 = vmatpush.bf16.msra.mxu0 %v4621
    %5665 = vmatpush.bf16.msra.mxu0 %v4620
    %5666 = vmatpush.bf16.msra.mxu0 %v4619
    %5667 = vmatpush.bf16.msra.mxu0 %v4618
    %5668 = vmatpush.bf16.msra.mxu0 %v4617
    %5669 = vmatpush.bf16.msra.mxu0 %v4616
    %5670 = vmatpush.bf16.msra.mxu0 %v4615
    %5671 = vmatmul.bf16.gmra.mxu0 %v5563
    %v5672 = vpop.f32.mrf.mxu0
    %v5673 = vadd.f32 0.0, %v5672
    %v5674 = vpop.f32.mrf.mxu0
    %5675 = vdwg.mxu0
    %5676 = vmatpush.bf16.msra.mxu0 %v4686
    %5677 = vmatpush.bf16.msra.mxu0 %v4685
    %5678 = vmatpush.bf16.msra.mxu0 %v4684
    %5679 = vmatpush.bf16.msra.mxu0 %v4683
    %5680 = vmatpush.bf16.msra.mxu0 %v4682
    %5681 = vmatpush.bf16.msra.mxu0 %v4681
    %5682 = vmatpush.bf16.msra.mxu0 %v4680
    %5683 = vmatpush.bf16.msra.mxu0 %v4679
    %5684 = vmatmul.bf16.gmra.mxu0 %v5564
    %v5685 = vpop.f32.mrf.mxu0
    %v5686 = vadd.f32 0.0, %v5685
    %v5687 = vpop.f32.mrf.mxu0
    %5688 = vdwg.mxu0
    %5689 = vmatpush.bf16.msra.mxu0 %v4750
    %5690 = vmatpush.bf16.msra.mxu0 %v4749
    %5691 = vmatpush.bf16.msra.mxu0 %v4748
    %5692 = vmatpush.bf16.msra.mxu0 %v4747
    %5693 = vmatpush.bf16.msra.mxu0 %v4746
    %5694 = vmatpush.bf16.msra.mxu0 %v4745
    %5695 = vmatpush.bf16.msra.mxu0 %v4744
    %5696 = vmatpush.bf16.msra.mxu0 %v4743
    %5697 = vmatmul.bf16.gmra.mxu0 %v5565
    %v5698 = vpop.f32.mrf.mxu0
    %v5699 = vadd.f32 0.0, %v5698
    %v5700 = vpop.f32.mrf.mxu0
    %5701 = vdwg.mxu0
    %5702 = vmatpush.bf16.msra.mxu0 %v4814
    %5703 = vmatpush.bf16.msra.mxu0 %v4813
    %5704 = vmatpush.bf16.msra.mxu0 %v4812
    %5705 = vmatpush.bf16.msra.mxu0 %v4811
    %5706 = vmatpush.bf16.msra.mxu0 %v4810
    %5707 = vmatpush.bf16.msra.mxu0 %v4809
    %5708 = vmatpush.bf16.msra.mxu0 %v4808
    %5709 = vmatpush.bf16.msra.mxu0 %v4807
    %5710 = vmatmul.bf16.gmra.mxu0 %v5566
    %v5711 = vpop.f32.mrf.mxu0
    %v5712 = vadd.f32 0.0, %v5711
    %v5713 = vpop.f32.mrf.mxu0
    %5714 = vdwg.mxu0
    %5715 = vmatpush.bf16.msra.mxu0 %v4878
    %5716 = vmatpush.bf16.msra.mxu0 %v4877
    %5717 = vmatpush.bf16.msra.mxu0 %v4876
    %5718 = vmatpush.bf16.msra.mxu0 %v4875
    %5719 = vmatpush.bf16.msra.mxu0 %v4874
    %5720 = vmatpush.bf16.msra.mxu0 %v4873
    %5721 = vmatpush.bf16.msra.mxu0 %v4872
    %5722 = vmatpush.bf16.msra.mxu0 %v4871
    %5723 = vmatmul.bf16.gmra.mxu0 %v5567
    %v5724 = vpop.f32.mrf.mxu0
    %v5725 = vadd.f32 0.0, %v5724
    %v5726 = vpop.f32.mrf.mxu0
    %5727 = vdwg.mxu0
    %5728 = vmatpush.bf16.msra.mxu0 %v4942
    %5729 = vmatpush.bf16.msra.mxu0 %v4941
    %5730 = vmatpush.bf16.msra.mxu0 %v4940
    %5731 = vmatpush.bf16.msra.mxu0 %v4939
    %5732 = vmatpush.bf16.msra.mxu0 %v4938
    %5733 = vmatpush.bf16.msra.mxu0 %v4937
    %5734 = vmatpush.bf16.msra.mxu0 %v4936
    %5735 = vmatpush.bf16.msra.mxu0 %v4935
    %5736 = vmatmul.bf16.gmra.mxu0 %v5568
    %v5737 = vpop.f32.mrf.mxu0
    %v5738 = vadd.f32 0.0, %v5737
    %v5739 = vpop.f32.mrf.mxu0
    %5740 = vdwg.mxu0
    %5741 = vmatpush.bf16.msra.mxu0 %v5006
    %5742 = vmatpush.bf16.msra.mxu0 %v5005
    %5743 = vmatpush.bf16.msra.mxu0 %v5004
    %5744 = vmatpush.bf16.msra.mxu0 %v5003
    %5745 = vmatpush.bf16.msra.mxu0 %v5002
    %5746 = vmatpush.bf16.msra.mxu0 %v5001
    %5747 = vmatpush.bf16.msra.mxu0 %v5000
    %5748 = vmatpush.bf16.msra.mxu0 %v4999
    %5749 = vmatmul.bf16.gmra.mxu0 %v5569
    %v5750 = vpop.f32.mrf.mxu0
    %v5751 = vadd.f32 0.0, %v5750
    %v5752 = vpop.f32.mrf.mxu0
    %5753 = vdwg.mxu0
    %5754 = vmatpush.bf16.msra.mxu0 %v5070
    %5755 = vmatpush.bf16.msra.mxu0 %v5069
    %5756 = vmatpush.bf16.msra.mxu0 %v5068
    %5757 = vmatpush.bf16.msra.mxu0 %v5067
    %5758 = vmatpush.bf16.msra.mxu0 %v5066
    %5759 = vmatpush.bf16.msra.mxu0 %v5065
    %5760 = vmatpush.bf16.msra.mxu0 %v5064
    %5761 = vmatpush.bf16.msra.mxu0 %v5063
    %5762 = vmatmul.bf16.gmra.mxu0 %v5570
    %v5763 = vpop.f32.mrf.mxu0
    %v5764 = vadd.f32 0.0, %v5763
    %v5765 = vpop.f32.mrf.mxu0
    %5766 = vdwg.mxu0
    %5767 = vmatpush.bf16.msra.mxu0 %v5134
    %5768 = vmatpush.bf16.msra.mxu0 %v5133
    %5769 = vmatpush.bf16.msra.mxu0 %v5132
    %5770 = vmatpush.bf16.msra.mxu0 %v5131
    %5771 = vmatpush.bf16.msra.mxu0 %v5130
    %5772 = vmatpush.bf16.msra.mxu0 %v5129
    %5773 = vmatpush.bf16.msra.mxu0 %v5128
    %5774 = vmatpush.bf16.msra.mxu0 %v5127
    %5775 = vmatmul.bf16.gmra.mxu0 %v5571
    %v5776 = vpop.f32.mrf.mxu0
    %v5777 = vadd.f32 0.0, %v5776
    %v5778 = vpop.f32.mrf.mxu0
    %5779 = vdwg.mxu0
    %v5780 = vadd.f32 %v5582, 0.0
    %v5781 = vadd.f32 %v5595, 0.0
    %v5782 = vadd.f32 %v5608, 0.0
    %v5783 = vadd.f32 %v5621, 0.0
    %v5784 = vadd.f32 %v5634, 0.0
    %v5785 = vadd.f32 %v5647, 0.0
    %v5786 = vadd.f32 %v5660, 0.0
    %v5787 = vadd.f32 %v5673, 0.0
    %v5788 = vadd.f32 %v5686, 0.0
    %v5789 = vadd.f32 %v5699, 0.0
    %v5790 = vadd.f32 %v5712, 0.0
    %v5791 = vadd.f32 %v5725, 0.0
    %v5792 = vadd.f32 %v5738, 0.0
    %v5793 = vadd.f32 %v5751, 0.0
    %v5794 = vadd.f32 %v5764, 0.0
    %v5795 = vadd.f32 %v5777, 0.0
    %v5796 = vld [vmem:[%s12] sm:$0xf]
    %v5797 = vld [vmem:[%s12 + $0x4] sm:$0xf]
    %v5798 = vld [vmem:[%s12 + $0x8] sm:$0xf]
    %v5799 = vld [vmem:[%s12 + $0xc] sm:$0xf]
    %v5800 = vld [vmem:[%s12 + $0x10] sm:$0xf]
    %v5801 = vld [vmem:[%s12 + $0x14] sm:$0xf]
    %v5802 = vld [vmem:[%s12 + $0x18] sm:$0xf]
    %v5803 = vld [vmem:[%s12 + $0x1c] sm:$0xf]
    %v5804 = vld [vmem:[%s12 + $0x20] sm:$0xf]
    %v5805 = vld [vmem:[%s12 + $0x24] sm:$0xf]
    %v5806 = vld [vmem:[%s12 + $0x28] sm:$0xf]
    %v5807 = vld [vmem:[%s12 + $0x2c] sm:$0xf]
    %v5808 = vld [vmem:[%s12 + $0x30] sm:$0xf]
    %v5809 = vld [vmem:[%s12 + $0x34] sm:$0xf]
    %v5810 = vld [vmem:[%s12 + $0x38] sm:$0xf]
    %v5811 = vld [vmem:[%s12 + $0x3c] sm:$0xf]
    %v5812 = vpack.c.bf16 %v5780, %v5780
    %v5813 = vpack.c.bf16 %v5781, %v5781
    %v5814 = vpack.c.bf16 %v5782, %v5782
    %v5815 = vpack.c.bf16 %v5783, %v5783
    %v5816 = vpack.c.bf16 %v5784, %v5784
    %v5817 = vpack.c.bf16 %v5785, %v5785
    %v5818 = vpack.c.bf16 %v5786, %v5786
    %v5819 = vpack.c.bf16 %v5787, %v5787
    %v5820 = vpack.c.bf16 %v5788, %v5788
    %v5821 = vpack.c.bf16 %v5789, %v5789
    %v5822 = vpack.c.bf16 %v5790, %v5790
    %v5823 = vpack.c.bf16 %v5791, %v5791
    %v5824 = vpack.c.bf16 %v5792, %v5792
    %v5825 = vpack.c.bf16 %v5793, %v5793
    %v5826 = vpack.c.bf16 %v5794, %v5794
    %v5827 = vpack.c.bf16 %v5795, %v5795
    %v5828 = vld [vmem:[%s13] sm:$0xf]
    %v5829 = vld [vmem:[%s13 + $0x4] sm:$0xf]
    %v5830 = vld [vmem:[%s13 + $0x8] sm:$0xf]
    %v5831 = vld [vmem:[%s13 + $0xc] sm:$0xf]
    %v5832 = vld [vmem:[%s13 + $0x10] sm:$0xf]
    %v5833 = vld [vmem:[%s13 + $0x14] sm:$0xf]
    %v5834 = vld [vmem:[%s13 + $0x18] sm:$0xf]
    %v5835 = vld [vmem:[%s13 + $0x1c] sm:$0xf]
    %v5836 = vld [vmem:[%s13 + $0x20] sm:$0xf]
    %v5837 = vld [vmem:[%s13 + $0x24] sm:$0xf]
    %v5838 = vld [vmem:[%s13 + $0x28] sm:$0xf]
    %v5839 = vld [vmem:[%s13 + $0x2c] sm:$0xf]
    %v5840 = vld [vmem:[%s13 + $0x30] sm:$0xf]
    %v5841 = vld [vmem:[%s13 + $0x34] sm:$0xf]
    %v5842 = vld [vmem:[%s13 + $0x38] sm:$0xf]
    %v5843 = vld [vmem:[%s13 + $0x3c] sm:$0xf]
    %v5860 = vunpack.c.l.b16 %v5812
    %v5861 = vunpack.c.l.b16 %v5813
    %v5862 = vunpack.c.l.b16 %v5814
    %v5863 = vunpack.c.l.b16 %v5815
    %v5864 = vunpack.c.l.b16 %v5816
    %v5865 = vunpack.c.l.b16 %v5817
    %v5866 = vunpack.c.l.b16 %v5818
    %v5867 = vunpack.c.l.b16 %v5819
    %v5868 = vunpack.c.l.b16 %v5820
    %v5869 = vunpack.c.l.b16 %v5821
    %v5870 = vunpack.c.l.b16 %v5822
    %v5871 = vunpack.c.l.b16 %v5823
    %v5872 = vunpack.c.l.b16 %v5824
    %v5873 = vunpack.c.l.b16 %v5825
    %v5874 = vunpack.c.l.b16 %v5826
    %v5875 = vunpack.c.l.b16 %v5827
    %v5876 = vrot.slane %v5861, 7
    %v5877 = vsel %vm4091, %v5876, %v5860
    %v5878 = vrot.slane %v5862, 6
    %v5879 = vsel %vm4095, %v5878, %v5877
    %v5880 = vrot.slane %v5863, 5
    %v5881 = vsel %vm4099, %v5880, %v5879
    %v5882 = vrot.slane %v5864, 4
    %vm5883 = vcmask 1044484
    %v5884 = vsel %vm5883, %v5882, %v5881
    %v5885 = vrot.slane %v5865, 3
    %vm5886 = vcmask 1045509
    %v5887 = vsel %vm5886, %v5885, %v5884
    %v5888 = vrot.slane %v5866, 2
    %vm5889 = vcmask 1046534
    %v5890 = vsel %vm5889, %v5888, %v5887
    %v5891 = vrot.slane %v5867, 1
    %vm5892 = vcmask 1047559
    %v5893 = vsel %vm5892, %v5891, %v5890
    %v5894 = vrot.slane %v5869, 7
    %v5895 = vsel %vm4091, %v5894, %v5868
    %v5896 = vrot.slane %v5870, 6
    %v5897 = vsel %vm4095, %v5896, %v5895
    %v5898 = vrot.slane %v5871, 5
    %v5899 = vsel %vm4099, %v5898, %v5897
    %v5900 = vrot.slane %v5872, 4
    %v5901 = vsel %vm5883, %v5900, %v5899
    %v5902 = vrot.slane %v5873, 3
    %v5903 = vsel %vm5886, %v5902, %v5901
    %v5904 = vrot.slane %v5874, 2
    %v5905 = vsel %vm5889, %v5904, %v5903
    %v5906 = vrot.slane %v5875, 1
    %v5907 = vsel %vm5892, %v5906, %v5905
    %v5908 = vpack.c.b16 %v5907, %v5893
    %v5926 = vunpack.c.l.b16 %v5828
    %v5927 = vunpack.c.l.b16 %v5829
    %v5928 = vunpack.c.l.b16 %v5830
    %v5929 = vunpack.c.l.b16 %v5831
    %v5930 = vunpack.c.l.b16 %v5832
    %v5931 = vunpack.c.l.b16 %v5833
    %v5932 = vunpack.c.l.b16 %v5834
    %v5933 = vunpack.c.l.b16 %v5835
    %v5934 = vunpack.c.l.b16 %v5836
    %v5935 = vunpack.c.l.b16 %v5837
    %v5936 = vunpack.c.l.b16 %v5838
    %v5937 = vunpack.c.l.b16 %v5839
    %v5938 = vunpack.c.l.b16 %v5840
    %v5939 = vunpack.c.l.b16 %v5841
    %v5940 = vunpack.c.l.b16 %v5842
    %v5941 = vunpack.c.l.b16 %v5843
    %v5942 = vpack.c.b16 %v5927, %v5926
    %v5943 = vpack.c.b16 %v5929, %v5928
    %v5944 = vpack.c.b16 %v5931, %v5930
    %v5945 = vpack.c.b16 %v5933, %v5932
    %v5946 = vpack.c.b16 %v5935, %v5934
    %v5947 = vpack.c.b16 %v5937, %v5936
    %v5948 = vpack.c.b16 %v5939, %v5938
    %v5949 = vpack.c.b16 %v5941, %v5940
    %5958 = vmatpush.bf16.msra.mxu0 %v5949
    %5959 = vmatpush.bf16.msra.mxu0 %v5948
    %5960 = vmatpush.bf16.msra.mxu0 %v5947
    %5961 = vmatpush.bf16.msra.mxu0 %v5946
    %5962 = vmatpush.bf16.msra.mxu0 %v5945
    %5963 = vmatpush.bf16.msra.mxu0 %v5944
    %5964 = vmatpush.bf16.msra.mxu0 %v5943
    %5965 = vmatpush.bf16.msra.mxu0 %v5942
    %5966 = vmatmul.bf16.gmra.mxu0 %v5908
    %v5967 = vpop.f32.mrf.mxu0
    %v5968 = vadd.f32 0.0, %v5967
    %v5969 = vpop.f32.mrf.mxu0
    %v5970 = vadd.f32 0.0, %v5969
    %5971 = vdwg.mxu0
    %v5988 = vunpack.c.l.b16 %v5796
    %v5989 = vunpack.c.l.b16 %v5797
    %v5990 = vunpack.c.l.b16 %v5798
    %v5991 = vunpack.c.l.b16 %v5799
    %v5992 = vunpack.c.l.b16 %v5800
    %v5993 = vunpack.c.l.b16 %v5801
    %v5994 = vunpack.c.l.b16 %v5802
    %v5995 = vunpack.c.l.b16 %v5803
    %v5996 = vunpack.c.l.b16 %v5804
    %v5997 = vunpack.c.l.b16 %v5805
    %v5998 = vunpack.c.l.b16 %v5806
    %v5999 = vunpack.c.l.b16 %v5807
    %v6000 = vunpack.c.l.b16 %v5808
    %v6001 = vunpack.c.l.b16 %v5809
    %v6002 = vunpack.c.l.b16 %v5810
    %v6003 = vunpack.c.l.b16 %v5811
    %v6004 = vpack.c.b16 %v5989, %v5988
    %v6005 = vpack.c.b16 %v5991, %v5990
    %v6006 = vpack.c.b16 %v5993, %v5992
    %v6007 = vpack.c.b16 %v5995, %v5994
    %v6008 = vpack.c.b16 %v5997, %v5996
    %v6009 = vpack.c.b16 %v5999, %v5998
    %v6010 = vpack.c.b16 %v6001, %v6000
    %v6011 = vpack.c.b16 %v6003, %v6002
    %6020 = vmatpush.bf16.msra.mxu0 %v6011
    %6021 = vmatpush.bf16.msra.mxu0 %v6010
    %6022 = vmatpush.bf16.msra.mxu0 %v6009
    %6023 = vmatpush.bf16.msra.mxu0 %v6008
    %6024 = vmatpush.bf16.msra.mxu0 %v6007
    %6025 = vmatpush.bf16.msra.mxu0 %v6006
    %6026 = vmatpush.bf16.msra.mxu0 %v6005
    %6027 = vmatpush.bf16.msra.mxu0 %v6004
    %6028 = vmatmul.bf16.gmra.mxu0 %v4001
    %v6029 = vpop.f32.mrf.mxu0
    %v6030 = vadd.f32 %v5968, %v6029
    %v6031 = vpop.f32.mrf.mxu0
    %v6032 = vadd.f32 %v5970, %v6031
    %6033 = vdwg.mxu0
    %v6034 = vld [vmem:[%s14] sm:$0x1]
    %v6036 = vperm.slane %v6034, 0
    %v6038 = vadd.f32 %v6030, %v6036
    %v6039 = vadd.f32 %v6032, %v6036
    %6040 = vmax.xlane.f32.xlu0 %v6038
    %v6041 = vpop.xlane.xlu0 %6040
    %6042 = vmax.xlane.f32.xlu0 %v6039
    %v6043 = vpop.xlane.xlu0 %6042
    %vm6044 = vcmp.eq.f32.partialorder %v6038, %v6041
    %vm6045 = vcmp.eq.f32.partialorder %v6039, %v6043
    %v6046 = vsel %vm6044, %v3037, 128
    %v6047 = vsel %vm6045, %v3037, 128
    %v6048 = vand.u32 %v6046, 65535
    %v6049 = vshra.s32 %v6046, 16
    %v6050 = vcvt.s32.f32 %v6048
    %v6051 = vcvt.s32.f32 %v6049
    %6052 = vmin.xlane.f32.xlu0 %v6051
    %v6053 = vpop.xlane.xlu0 %6052
    %vm6054 = vcmp.eq.f32.partialorder %v6051, %v6053
    %v6055 = vsel %vm6054, %v6050, inf
    %6056 = vmin.xlane.f32.xlu0 %v6055
    %v6057 = vpop.xlane.xlu0 %6056
    %v6058 = vcvt.f32.s32 %v6057
    %v6059 = vcvt.f32.s32 %v6053
    %v6060 = vshll.u32 %v6059, 16
    %v6061 = vadd.s32 %v6060, %v6058
    %v6062 = vand.u32 %v6047, 65535
    %v6063 = vshra.s32 %v6047, 16
    %v6064 = vcvt.s32.f32 %v6062
    %v6065 = vcvt.s32.f32 %v6063
    %6066 = vmin.xlane.f32.xlu0 %v6065
    %v6067 = vpop.xlane.xlu0 %6066
    %vm6068 = vcmp.eq.f32.partialorder %v6065, %v6067
    %v6069 = vsel %vm6068, %v6064, inf
    %6070 = vmin.xlane.f32.xlu0 %v6069
    %v6071 = vpop.xlane.xlu0 %6070
    %v6072 = vcvt.f32.s32 %v6071
    %v6073 = vcvt.f32.s32 %v6067
    %v6074 = vshll.u32 %v6073, 16
    %v6075 = vadd.s32 %v6074, %v6072
    %v6076 = vadd.f32 %v5330, 0.0
    %v6077 = vadd.f32 %v5345, 0.0
    %v6078 = vadd.f32 %v5360, 0.0
    %v6079 = vadd.f32 %v5375, 0.0
    %v6080 = vadd.f32 %v5390, 0.0
    %v6081 = vadd.f32 %v5405, 0.0
    %v6082 = vadd.f32 %v5420, 0.0
    %v6083 = vadd.f32 %v5435, 0.0
    %v6084 = vadd.f32 %v5450, 0.0
    %v6085 = vadd.f32 %v5465, 0.0
    %v6086 = vadd.f32 %v5480, 0.0
    %v6087 = vadd.f32 %v5495, 0.0
    %v6088 = vadd.f32 %v5510, 0.0
    %v6089 = vadd.f32 %v5525, 0.0
    %v6090 = vadd.f32 %v5540, 0.0
    %v6091 = vadd.f32 %v5555, 0.0
    %v6108 = vrot.slane %v6077, 7
    %v6109 = vsel %vm4091, %v6108, %v6076
    %v6110 = vrot.slane %v6078, 6
    %v6111 = vsel %vm4095, %v6110, %v6109
    %v6112 = vrot.slane %v6079, 5
    %v6113 = vsel %vm4099, %v6112, %v6111
    %v6114 = vrot.slane %v6080, 4
    %v6115 = vsel %vm5883, %v6114, %v6113
    %v6116 = vrot.slane %v6081, 3
    %v6117 = vsel %vm5886, %v6116, %v6115
    %v6118 = vrot.slane %v6082, 2
    %v6119 = vsel %vm5889, %v6118, %v6117
    %v6120 = vrot.slane %v6083, 1
    %v6121 = vsel %vm5892, %v6120, %v6119
    %v6122 = vrot.slane %v6085, 7
    %v6123 = vsel %vm4091, %v6122, %v6084
    %v6124 = vrot.slane %v6086, 6
    %v6125 = vsel %vm4095, %v6124, %v6123
    %v6126 = vrot.slane %v6087, 5
    %v6127 = vsel %vm4099, %v6126, %v6125
    %v6128 = vrot.slane %v6088, 4
    %v6129 = vsel %vm5883, %v6128, %v6127
    %v6130 = vrot.slane %v6089, 3
    %v6131 = vsel %vm5886, %v6130, %v6129
    %v6132 = vrot.slane %v6090, 2
    %v6133 = vsel %vm5889, %v6132, %v6131
    %v6134 = vrot.slane %v6091, 1
    %v6135 = vsel %vm5892, %v6134, %v6133
    %s6138 = smul.u32 %s3133, 16
    %s6139 = scalar_lea.vmem %s18, %s6138
    %6140 = vst [vmem:[%s6139] sm:$0xff] %v6121
    %6141 = vst [vmem:[%s6139 + $0x8] sm:$0xff] %v6135
    %v6142 = vstv %s3133
    %vm6143 = vcmp.eq.s32.totalorder %v3037, %v6142
    %v6144 = vsel %vm6143, %v6061, %v3142
    %v6145 = vsel %vm6143, %v6075, %v3143
  $region73: #{seq2seq_forward.1} parent=0 // loop_footer
    %s3137 = sadd.s32 1, %s3133
  $region74: #{seq2seq_forward.1} parent=0 // loop_footer_branch
    %3132 = sbr.rel target = $region70
  $region75: #{seq2seq_forward.1} parent=0 // loop_exit
    _
  %6146 = vst [vmem:[%s17] sm:$0xff] %v3142
  %6147 = vst [vmem:[%s17 + $0x8] sm:$0xff] %v3143
  // Predicated region
  $region76: #{seq2seq_forward.1} parent=0 // pred_check
    _
  $region77: #{seq2seq_forward.1} parent=0 // pred_check_branch
    %6149 = sbr.rel (0) target = $region79
  $region78: #{seq2seq_forward.1} parent=0 // pred_region
    _
  $region79: #{seq2seq_forward.1} parent=0 // pred_fallthru
    _
  // Predicated region
  $region80: #{seq2seq_forward.1} parent=0 // pred_check
    _
  $region81: #{seq2seq_forward.1} parent=0 // pred_check_branch
    %6151 = sbr.rel (0) target = $region83
  $region82: #{seq2seq_forward.1} parent=0 // pred_region
    _
  $region83: #{seq2seq_forward.1} parent=0 // pred_fallthru
    _
  // Predicated region
  $region84: #{seq2seq_forward.1} parent=0 // pred_check
    _
  $region85: #{seq2seq_forward.1} parent=0 // pred_check_branch
    %6153 = sbr.rel (0) target = $region87
  $region86: #{seq2seq_forward.1} parent=0 // pred_region
    _
  $region87: #{seq2seq_forward.1} parent=0 // pred_fallthru
    _
  // Predicated region
  $region88: #{seq2seq_forward.1} parent=0 // pred_check
    _
  $region89: #{seq2seq_forward.1} parent=0 // pred_check_branch
    %6155 = sbr.rel (0) target = $region91
  $region90: #{seq2seq_forward.1} parent=0 // pred_region
    _
  $region91: #{seq2seq_forward.1} parent=0 // pred_fallthru
    _
  // Predicated region
  $region92: #{seq2seq_forward.1} parent=0 // pred_check
    _
  $region93: #{seq2seq_forward.1} parent=0 // pred_check_branch
    %6157 = sbr.rel (0) target = $region95
  $region94: #{seq2seq_forward.1} parent=0 // pred_region
    _
  $region95: #{seq2seq_forward.1} parent=0 // pred_fallthru
    _
  // Predicated region
  $region96: #{seq2seq_forward.1} parent=0 // pred_check
    _
  $region97: #{seq2seq_forward.1} parent=0 // pred_check_branch
    %6159 = sbr.rel (0) target = $region99
  $region98: #{seq2seq_forward.1} parent=0 // pred_region
    _
  $region99: #{seq2seq_forward.1} parent=0 // pred_fallthru
    _
  // Predicated region
  $region100: #{seq2seq_forward.1} parent=0 // pred_check
    _
  $region101: #{seq2seq_forward.1} parent=0 // pred_check_branch
    %6161 = sbr.rel (0) target = $region103
  $region102: #{seq2seq_forward.1} parent=0 // pred_region
    _
  $region103: #{seq2seq_forward.1} parent=0 // pred_fallthru
    _
  // Predicated region
  $region104: #{seq2seq_forward.1} parent=0 // pred_check
    _
  $region105: #{seq2seq_forward.1} parent=0 // pred_check_branch
    %6163 = sbr.rel (0) target = $region107
  $region106: #{seq2seq_forward.1} parent=0 // pred_region
    _
  $region107: #{seq2seq_forward.1} parent=0 // pred_fallthru
    _

</llo_original>
